<compile_context>
chip_gen: v7x
topology: tpu7x:2x2x1
jax: 0.10.0
libtpu: 0.0.40
codegen_flags: <defaults>
</compile_context>

<pallas_src>
import jax
import jax.numpy as jnp
from jax.experimental import pallas as pl
from jax.experimental.pallas import tpu as pltpu


# ----------------------------- Pallas kernel -------------------------------

def bidir_gru4rec_kernel(emb_ref, wih_ref, bih_ref, whh_ref, bhn_ref,
                         mask_ref, wout_ref, bout_ref, out_ref, xg_ref):
    """Fused BidirGRU4Rec forward.

    emb_ref : (T*B, 2E)  bf16   row t*B+b = [emb(s[b,t]) | emb(s[b,T-1-t])]
    wih_ref : (2E, 6Hp)  bf16   block input projection, gate cols [rf|rb|zf|zb|nf|nb]
    bih_ref : (1, 6Hp)   f32    b_ih (+ folded b_hr / b_hz for the r/z gates)
    whh_ref : (2Hp, 6Hp) bf16   block-diagonal recurrent weights (fwd rows | bwd rows)
    bhn_ref : (1, 2Hp)   f32    b_hn for [fwd | bwd] (cannot be folded: r*(Whn h + bhn))
    mask_ref: (T*B, 2Hp) f32    packed-sequence update mask per step/lane (1.0 = update)
    wout_ref: (2Hp, Ap)  bf16   output projection (zero rows in pad lanes)
    bout_ref: (1, Ap)    f32
    out_ref : (B, Ap)    f32    lane-dense (Ap = 128-padded action_dim)
    xg_ref  : (T*B, 6Hp) f32    VMEM scratch holding the hoisted gate inputs
    """
    B = out_ref.shape[0]
    T = emb_ref.shape[0] // B
    Hp2 = whh_ref.shape[0]            # 2*Hp  (both directions, lane-stacked)
    Hp = Hp2 // 2

    # (1) Hoisted, gate-fused, lane-aligned input projection for ALL timesteps
    #     of BOTH directions in one bf16 MXU matmul; b_ih (+ folded b_hr/b_hz)
    #     added here, off the serial critical path. Result kept in VMEM
    #     scratch so the unrolled loop only vld's one (B, 6Hp) row block/step.
    xg_ref[...] = (jnp.dot(emb_ref[...], wih_ref[...],
                           preferred_element_type=jnp.float32)
                   + bih_ref[...])

    bhn = bhn_ref[...]                # (1, 2Hp) f32, hoisted

    # (2) Recurrence: both directions live in one (B, 2Hp) f32 carry
    #     (lanes [0:Hp) = forward, [Hp:2Hp) = backward); exactly one bf16
    #     MXU dot per step against the block-diagonal W_hh.
    h = jnp.zeros((B, Hp2), jnp.float32)

    # TODO(synk): at production T switch to lax.fori_loop(..., unroll=2..4)
    # and stream xg/mask via a grid=(T,) BlockSpec pipeline (mandatory on
    # v7x's 64 MiB VMEM); here T is tiny so a full unroll is fine.
    for i in range(T):
        xg = xg_ref[pl.ds(i * B, B), :]         # (B, 6Hp) static row slice
        m = mask_ref[pl.ds(i * B, B), :]        # (B, 2Hp) static row slice

        # Single recurrent matmul (bf16 operands, f32 accumulation).
        hp = jnp.dot(h.astype(jnp.bfloat16), whh_ref[...],
                     preferred_element_type=jnp.float32)       # (B, 6Hp)

        # PyTorch GRU cell (b_hr/b_hz already folded into xg):
        #   r = sigmoid(xg_r + h Whr);  z = sigmoid(xg_z + h Whz)
        #   n = tanh(xg_n + r * (h Whn + b_hn));  h' = n + z*(h - n)
        rz = jax.nn.sigmoid(xg[:, :2 * Hp2] + hp[:, :2 * Hp2])  # (B, 4Hp)
        r = rz[:, :Hp2]
        z = rz[:, Hp2:]
        n = jnp.tanh(xg[:, 2 * Hp2:] + r * (hp[:, 2 * Hp2:] + bhn))
        h_new = n + z * (h - n)

        # pack_padded_sequence semantics: forward freezes after its last valid
        # step; backward holds h0 until its first valid (reversed) step.
        # The compare is independent of h_new, so only the select is serial.
        h = jnp.where(m != 0.0, h_new, h)

    # (3) out = [h_fwd | h_bwd] @ W_out + b_out, lane-dense (Ap = 128 pad).
    out_ref[...] = (jnp.dot(h.astype(jnp.bfloat16), wout_ref[...],
                            preferred_element_type=jnp.float32)
                    + bout_ref[...])


# ------------------------------- Wrapper ------------------------------------

def _round_up(x, m):
    return ((x + m - 1) // m) * m


def bidir_gru4rec_forward(s, lengths, params):
    """s: (B, T) int32 item ids; lengths: (B,) int32 valid lengths."""
    B, T = s.shape
    H = params["whh_f"].shape[-1]
    E = params["wih_f"].shape[1]
    A = params["b_out"].shape[-1]
    Hp = _round_up(H, 128)            # lane-aligned gate block
    Ap = _round_up(A, 128)            # lane-dense output

    f32, bf16 = jnp.float32, jnp.bfloat16

    # ---- fused / padded weights (gate column layout: [rf|rb|zf|zb|nf|nb]) ----
    # Zero pads + zero-initialized h keep padded lanes exactly zero
    # (sigmoid(0)=0.5 in pad lanes only rescales a zero hidden state).
    wih_big = jnp.zeros((2 * E, 6 * Hp), f32)
    wih_big = wih_big.at[:E, 0:H].set(params["wih_f"][0])                 # r_f
    wih_big = wih_big.at[:E, 2 * Hp:2 * Hp + H].set(params["wih_f"][1])   # z_f
    wih_big = wih_big.at[:E, 4 * Hp:4 * Hp + H].set(params["wih_f"][2])   # n_f
    wih_big = wih_big.at[E:, Hp:Hp + H].set(params["wih_b"][0])           # r_b
    wih_big = wih_big.at[E:, 3 * Hp:3 * Hp + H].set(params["wih_b"][1])   # z_b
    wih_big = wih_big.at[E:, 5 * Hp:5 * Hp + H].set(params["wih_b"][2])   # n_b

    # b_ih (+ folded b_hr / b_hz); n columns carry b_in only.
    bih_big = jnp.zeros((1, 6 * Hp), f32)
    bih_big = bih_big.at[:, 0:H].set(params["bih_f"][0] + params["bhh_f"][0])
    bih_big = bih_big.at[:, Hp:Hp + H].set(params["bih_b"][0] + params["bhh_b"][0])
    bih_big = bih_big.at[:, 2 * Hp:2 * Hp + H].set(params["bih_f"][1] + params["bhh_f"][1])
    bih_big = bih_big.at[:, 3 * Hp:3 * Hp + H].set(params["bih_b"][1] + params["bhh_b"][1])
    bih_big = bih_big.at[:, 4 * Hp:4 * Hp + H].set(params["bih_f"][2])
    bih_big = bih_big.at[:, 5 * Hp:5 * Hp + H].set(params["bih_b"][2])

    bhn_big = jnp.zeros((1, 2 * Hp), f32)
    bhn_big = bhn_big.at[:, 0:H].set(params["bhh_f"][2])
    bhn_big = bhn_big.at[:, Hp:Hp + H].set(params["bhh_b"][2])

    # Block-diagonal recurrent weights: rows [0:Hp)=h_fwd, [Hp:2Hp)=h_bwd.
    whh_big = jnp.zeros((2 * Hp, 6 * Hp), f32)
    whh_big = whh_big.at[0:H, 0:H].set(params["whh_f"][0])
    whh_big = whh_big.at[0:H, 2 * Hp:2 * Hp + H].set(params["whh_f"][1])
    whh_big = whh_big.at[0:H, 4 * Hp:4 * Hp + H].set(params["whh_f"][2])
    whh_big = whh_big.at[Hp:Hp + H, Hp:Hp + H].set(params["whh_b"][0])
    whh_big = whh_big.at[Hp:Hp + H, 3 * Hp:3 * Hp + H].set(params["whh_b"][1])
    whh_big = whh_big.at[Hp:Hp + H, 5 * Hp:5 * Hp + H].set(params["whh_b"][2])

    wout_big = jnp.zeros((2 * Hp, Ap), f32)
    wout_big = wout_big.at[0:H, 0:A].set(params["wout_f"])
    wout_big = wout_big.at[Hp:Hp + H, 0:A].set(params["wout_b"])
    bout_big = jnp.zeros((1, Ap), f32).at[:, :A].set(params["b_out"])

    # ---- embedded inputs: row t*B+b = [emb(s[b,t]) | emb(s[b,T-1-t])] -------
    idx_f = jnp.transpose(s).reshape(-1)
    idx_b = jnp.transpose(s[:, ::-1]).reshape(-1)
    emb_f = jnp.take(params["embedding"], idx_f, axis=0)
    emb_b = jnp.take(params["embedding"], idx_b, axis=0)
    emb2 = jnp.concatenate([emb_f, emb_b], axis=-1).astype(bf16)   # (T*B, 2E)

    # ---- packed-sequence update masks for all steps (hoisted off the loop) --
    lengths_i = lengths.astype(jnp.int32)
    t_idx = jnp.arange(T, dtype=jnp.int32)
    m_f = t_idx[:, None] < lengths_i[None, :]                      # (T, B) fwd: t < len
    m_b = (T - 1 - t_idx)[:, None] < lengths_i[None, :]            # (T, B) bwd: T-1-t < len
    upd_mask = jnp.concatenate(
        [jnp.broadcast_to(m_f[:, :, None], (T, B, Hp)),
         jnp.broadcast_to(m_b[:, :, None], (T, B, Hp))],
        axis=-1).reshape(T * B, 2 * Hp).astype(f32)

    kernel_args = (emb2, wih_big.astype(bf16), bih_big, whh_big.astype(bf16),
                   bhn_big, upd_mask, wout_big.astype(bf16), bout_big)

    # All operands are tiny and VMEM-resident; grid=() keeps the recurrence in
    # one kernel invocation.
    # TODO(synk): at production sizes, hoist the (T*B,2E)@(2E,6Hp) projection
    # to XLA (or a tiled pallas_call) and stream xg/mask through a grid=(T,)
    # BlockSpec pipeline with h in a persistent VMEM scratch (v7x: 64 MiB
    # VMEM), add a leading 'parallel' batch grid axis for v7x's 2 TensorCores,
    # and consider pltpu.matmul_push_rhs to keep W_hh staged in the MXU.
    out_pad = pl.pallas_call(
        bidir_gru4rec_kernel,
        out_shape=jax.ShapeDtypeStruct((B, Ap), jnp.float32),
        in_specs=[pl.BlockSpec(memory_space=pltpu.MemorySpace.VMEM)
                  for _ in kernel_args],
        out_specs=pl.BlockSpec(memory_space=pltpu.MemorySpace.VMEM),
        scratch_shapes=[pltpu.VMEM((T * B, 6 * Hp), jnp.float32)],
        compiler_params=pltpu.CompilerParams(vmem_limit_bytes=32 * 1024 * 1024),
    )(*kernel_args)

    return out_pad[:, :A]


# ------------------------- Deterministic parameters --------------------------

def init_params(key, *, hidden_size, embedding_dim, item_num, action_dim):
    H, E, A = hidden_size, embedding_dim, action_dim
    ks = jax.random.split(key, 16)
    k_gru = 1.0 / jnp.sqrt(H)
    k_out = 1.0 / jnp.sqrt(2.0 * H)

    def uni(k, shape, scale):
        return jax.random.uniform(k, shape, jnp.float32, -scale, scale)

    params = {
        # nn.Embedding(item_num + 1, E), weight ~ N(0, 0.01)
        "embedding": 0.01 * jax.random.normal(ks[0], (item_num + 1, E), jnp.float32),
        # GRU weights stored per-gate [r, z, n], already transposed for x @ W
        "wih_f": uni(ks[1], (3, E, H), k_gru),
        "whh_f": uni(ks[2], (3, H, H), k_gru),
        "bih_f": uni(ks[3], (3, 1, H), k_gru),
        "bhh_f": uni(ks[4], (3, 1, H), k_gru),
        "wih_b": uni(ks[5], (3, E, H), k_gru),
        "whh_b": uni(ks[6], (3, H, H), k_gru),
        "bih_b": uni(ks[7], (3, 1, H), k_gru),
        "bhh_b": uni(ks[8], (3, 1, H), k_gru),
        # nn.Linear(2H, A): weight (A, 2H) -> transposed and split per direction
        "wout_f": uni(ks[9], (H, A), k_out),
        "wout_b": uni(ks[10], (H, A), k_out),
        "b_out": uni(ks[11], (1, A), k_out),
    }
    return params


# ------------------------ Pure-JAX reference (check) ------------------------

def reference_forward(s, lengths, params):
    emb = jnp.take(params["embedding"], s, axis=0)        # (B, T, E)
    B, T, _ = emb.shape
    H = params["whh_f"].shape[-1]

    def cell(x, h, wih, whh, bih, bhh):
        r = jax.nn.sigmoid(x @ wih[0] + bih[0] + h @ whh[0] + bhh[0])
        z = jax.nn.sigmoid(x @ wih[1] + bih[1] + h @ whh[1] + bhh[1])
        n = jnp.tanh(x @ wih[2] + bih[2] + r * (h @ whh[2] + bhh[2]))
        return (1.0 - z) * n + z * h

    len2 = lengths.reshape(B, 1)
    h_f = jnp.zeros((B, H), jnp.float32)
    for t in range(T):
        hn = cell(emb[:, t], h_f, params["wih_f"], params["whh_f"],
                  params["bih_f"], params["bhh_f"])
        h_f = jnp.where(len2 > t, hn, h_f)
    h_b = jnp.zeros((B, H), jnp.float32)
    for t in range(T - 1, -1, -1):
        hn = cell(emb[:, t], h_b, params["wih_b"], params["whh_b"],
                  params["bih_b"], params["bhh_b"])
        h_b = jnp.where(len2 > t, hn, h_b)
    return h_f @ params["wout_f"] + h_b @ params["wout_b"] + params["b_out"]


# ---------------------------------- Main -------------------------------------

if __name__ == "__main__":
    # Small, module-consistent shapes.
    hidden_size = 32
    embedding_dim = 32
    item_num = 50
    state_size = 8       # T
    action_dim = 16
    batch = 4

    key = jax.random.PRNGKey(0)
    kp, ks, kl = jax.random.split(key, 3)

    params = init_params(kp, hidden_size=hidden_size, embedding_dim=embedding_dim,
                         item_num=item_num, action_dim=action_dim)

    # Sequences padded with padding_idx = item_num; lengths in [1, T].
    # (Padding embedding row is random as in train_pad_embed=True; padded
    #  positions are masked out of the recurrence so the result is unaffected.)
    lengths = jax.random.randint(kl, (batch,), 1, state_size + 1, dtype=jnp.int32)
    s = jax.random.randint(ks, (batch, state_size), 0, item_num, dtype=jnp.int32)
    t_iota = jnp.arange(state_size, dtype=jnp.int32)[None, :]
    s = jnp.where(t_iota < lengths[:, None], s, item_num)   # pad tail with padding_idx

    out = bidir_gru4rec_forward(s, lengths, params)
    out = jax.block_until_ready(out)

    ref = reference_forward(s, lengths, params)
    assert out.shape == (batch, action_dim)
    # Kernel uses bf16 MXU operands (f32 accumulation / gate math), so compare
    # against the pure-f32 reference at bf16-level tolerance.
    assert jnp.allclose(out, ref, rtol=2e-2, atol=2e-2), "mismatch vs pure-JAX reference"

    # TODO(synk): dropout is identity here (module default p=0 / eval mode);
    # a training-mode dropout would need pltpu.prng_* inside the kernel.
    print("KERNEL_OK")
</pallas_src>

<mosaic_0001>
module attributes {stable_mosaic.version = 11 : i64} {
  func.func @bidir_gru4rec_kernel(%arg0: memref<32x64xbf16, #tpu.memory_space<vmem>>, %arg1: memref<64x768xbf16, #tpu.memory_space<vmem>>, %arg2: memref<1x768xf32, #tpu.memory_space<vmem>>, %arg3: memref<256x768xbf16, #tpu.memory_space<vmem>>, %arg4: memref<1x256xf32, #tpu.memory_space<vmem>>, %arg5: memref<32x256xf32, #tpu.memory_space<vmem>>, %arg6: memref<256x128xbf16, #tpu.memory_space<vmem>>, %arg7: memref<1x128xf32, #tpu.memory_space<vmem>>, %arg8: memref<4x128xf32, #tpu.memory_space<vmem>>, %arg9: memref<32x768xf32, #tpu.memory_space<vmem>>) attributes {dimension_semantics = [], scalar_prefetch = 0 : i64, scratch_operands = 1 : i64, tpu.core_type = #tpu.core_type<tc>} {
    %c0 = arith.constant 0 : index
    %c0_0 = arith.constant 0 : index
    %0 = vector.load %arg0[%c0, %c0_0] : memref<32x64xbf16, #tpu.memory_space<vmem>>, vector<32x64xbf16>
    %c0_1 = arith.constant 0 : index
    %c0_2 = arith.constant 0 : index
    %1 = vector.load %arg1[%c0_1, %c0_2] : memref<64x768xbf16, #tpu.memory_space<vmem>>, vector<64x768xbf16>
    %cst = arith.constant dense<0.000000e+00> : vector<32x768xf32>
    %2 = tpu.matmul %0, %1, %cst {dimension_numbers = #tpu.dot_dimension_numbers<[1], [0], [0], [1], [0, 0, 1, 1], [], []>} : vector<32x64xbf16>, vector<64x768xbf16>, vector<32x768xf32> -> vector<32x768xf32>
    %c0_3 = arith.constant 0 : index
    %c0_4 = arith.constant 0 : index
    %3 = vector.load %arg2[%c0_3, %c0_4] : memref<1x768xf32, #tpu.memory_space<vmem>>, vector<1x768xf32>
    %4 = vector.broadcast %3 : vector<1x768xf32> to vector<32x768xf32>
    %5 = arith.addf %2, %4 : vector<32x768xf32>
    %c0_5 = arith.constant 0 : index
    %c0_6 = arith.constant 0 : index
    %6 = vector.load %arg9[%c0_5, %c0_6] : memref<32x768xf32, #tpu.memory_space<vmem>>, vector<32x768xf32>
    tpu.vector_store %arg9[%c0_5, %c0_6], %5 {strides = array<i32>} : memref<32x768xf32, #tpu.memory_space<vmem>>, vector<32x768xf32>,
    %c0_7 = arith.constant 0 : index
    %c0_8 = arith.constant 0 : index
    %7 = vector.load %arg4[%c0_7, %c0_8] : memref<1x256xf32, #tpu.memory_space<vmem>>, vector<1x256xf32>
    %cst_9 = arith.constant 0.000000e+00 : f32
    %8 = vector.broadcast %cst_9 : f32 to vector<4x256xf32>
    %c0_10 = arith.constant 0 : index
    %c0_11 = arith.constant 0 : index
    %9 = vector.load %arg9[%c0_10, %c0_11] : memref<32x768xf32, #tpu.memory_space<vmem>>, vector<4x768xf32>
    %c0_12 = arith.constant 0 : index
    %c0_13 = arith.constant 0 : index
    %10 = vector.load %arg5[%c0_12, %c0_13] : memref<32x256xf32, #tpu.memory_space<vmem>>, vector<4x256xf32>
    %11 = arith.truncf %8 : vector<4x256xf32> to vector<4x256xbf16>
    %c0_14 = arith.constant 0 : index
    %c0_15 = arith.constant 0 : index
    %12 = vector.load %arg3[%c0_14, %c0_15] : memref<256x768xbf16, #tpu.memory_space<vmem>>, vector<256x768xbf16>
    %cst_16 = arith.constant dense<0.000000e+00> : vector<4x768xf32>
    %13 = tpu.matmul %11, %12, %cst_16 {dimension_numbers = #tpu.dot_dimension_numbers<[1], [0], [0], [1], [0, 0, 1, 1], [], []>} : vector<4x256xbf16>, vector<256x768xbf16>, vector<4x768xf32> -> vector<4x768xf32>
    %14 = vector.extract_strided_slice %9 {offsets = [0, 0], sizes = [4, 512], strides = [1, 1]} : vector<4x768xf32> to vector<4x512xf32>
    %15 = vector.extract_strided_slice %13 {offsets = [0, 0], sizes = [4, 512], strides = [1, 1]} : vector<4x768xf32> to vector<4x512xf32>
    %16 = arith.addf %14, %15 : vector<4x512xf32>
    %17 = arith.negf %16 : vector<4x512xf32>
    %18 = math.exp %17 : vector<4x512xf32>
    %cst_17 = arith.constant 1.000000e+00 : f32
    %19 = vector.broadcast %cst_17 : f32 to vector<4x512xf32>
    %20 = arith.addf %19, %18 : vector<4x512xf32>
    %21 = arith.divf %19, %20 : vector<4x512xf32>
    %22 = vector.extract_strided_slice %21 {offsets = [0, 0], sizes = [4, 256], strides = [1, 1]} : vector<4x512xf32> to vector<4x256xf32>
    %23 = vector.extract_strided_slice %21 {offsets = [0, 256], sizes = [4, 256], strides = [1, 1]} : vector<4x512xf32> to vector<4x256xf32>
    %24 = vector.extract_strided_slice %9 {offsets = [0, 512], sizes = [4, 256], strides = [1, 1]} : vector<4x768xf32> to vector<4x256xf32>
    %25 = vector.extract_strided_slice %13 {offsets = [0, 512], sizes = [4, 256], strides = [1, 1]} : vector<4x768xf32> to vector<4x256xf32>
    %26 = vector.broadcast %7 : vector<1x256xf32> to vector<4x256xf32>
    %27 = arith.addf %25, %26 : vector<4x256xf32>
    %28 = arith.mulf %22, %27 : vector<4x256xf32>
    %29 = arith.addf %24, %28 : vector<4x256xf32>
    %30 = math.tanh %29 : vector<4x256xf32>
    %31 = arith.subf %8, %30 : vector<4x256xf32>
    %32 = arith.mulf %23, %31 : vector<4x256xf32>
    %33 = arith.addf %30, %32 : vector<4x256xf32>
    %cst_18 = arith.constant 0.000000e+00 : f32
    %34 = vector.broadcast %cst_18 : f32 to vector<4x256xf32>
    %35 = arith.cmpf one, %10, %34 : vector<4x256xf32>
    %36 = arith.select %35, %33, %8 : vector<4x256xi1>, vector<4x256xf32>
    %c4 = arith.constant 4 : index
    %c0_19 = arith.constant 0 : index
    %37 = vector.load %arg9[%c4, %c0_19] : memref<32x768xf32, #tpu.memory_space<vmem>>, vector<4x768xf32>
    %c4_20 = arith.constant 4 : index
    %c0_21 = arith.constant 0 : index
    %38 = vector.load %arg5[%c4_20, %c0_21] : memref<32x256xf32, #tpu.memory_space<vmem>>, vector<4x256xf32>
    %39 = arith.truncf %36 : vector<4x256xf32> to vector<4x256xbf16>
    %c0_22 = arith.constant 0 : index
    %c0_23 = arith.constant 0 : index
    %40 = vector.load %arg3[%c0_22, %c0_23] : memref<256x768xbf16, #tpu.memory_space<vmem>>, vector<256x768xbf16>
    %cst_24 = arith.constant dense<0.000000e+00> : vector<4x768xf32>
    %41 = tpu.matmul %39, %40, %cst_24 {dimension_numbers = #tpu.dot_dimension_numbers<[1], [0], [0], [1], [0, 0, 1, 1], [], []>} : vector<4x256xbf16>, vector<256x768xbf16>, vector<4x768xf32> -> vector<4x768xf32>
    %42 = vector.extract_strided_slice %37 {offsets = [0, 0], sizes = [4, 512], strides = [1, 1]} : vector<4x768xf32> to vector<4x512xf32>
    %43 = vector.extract_strided_slice %41 {offsets = [0, 0], sizes = [4, 512], strides = [1, 1]} : vector<4x768xf32> to vector<4x512xf32>
    %44 = arith.addf %42, %43 : vector<4x512xf32>
    %45 = arith.negf %44 : vector<4x512xf32>
    %46 = math.exp %45 : vector<4x512xf32>
    %cst_25 = arith.constant 1.000000e+00 : f32
    %47 = vector.broadcast %cst_25 : f32 to vector<4x512xf32>
    %48 = arith.addf %47, %46 : vector<4x512xf32>
    %49 = arith.divf %47, %48 : vector<4x512xf32>
    %50 = vector.extract_strided_slice %49 {offsets = [0, 0], sizes = [4, 256], strides = [1, 1]} : vector<4x512xf32> to vector<4x256xf32>
    %51 = vector.extract_strided_slice %49 {offsets = [0, 256], sizes = [4, 256], strides = [1, 1]} : vector<4x512xf32> to vector<4x256xf32>
    %52 = vector.extract_strided_slice %37 {offsets = [0, 512], sizes = [4, 256], strides = [1, 1]} : vector<4x768xf32> to vector<4x256xf32>
    %53 = vector.extract_strided_slice %41 {offsets = [0, 512], sizes = [4, 256], strides = [1, 1]} : vector<4x768xf32> to vector<4x256xf32>
    %54 = vector.broadcast %7 : vector<1x256xf32> to vector<4x256xf32>
    %55 = arith.addf %53, %54 : vector<4x256xf32>
    %56 = arith.mulf %50, %55 : vector<4x256xf32>
    %57 = arith.addf %52, %56 : vector<4x256xf32>
    %58 = math.tanh %57 : vector<4x256xf32>
    %59 = arith.subf %36, %58 : vector<4x256xf32>
    %60 = arith.mulf %51, %59 : vector<4x256xf32>
    %61 = arith.addf %58, %60 : vector<4x256xf32>
    %cst_26 = arith.constant 0.000000e+00 : f32
    %62 = vector.broadcast %cst_26 : f32 to vector<4x256xf32>
    %63 = arith.cmpf one, %38, %62 : vector<4x256xf32>
    %64 = arith.select %63, %61, %36 : vector<4x256xi1>, vector<4x256xf32>
    %c8 = arith.constant 8 : index
    %c0_27 = arith.constant 0 : index
    %65 = vector.load %arg9[%c8, %c0_27] : memref<32x768xf32, #tpu.memory_space<vmem>>, vector<4x768xf32>
    %c8_28 = arith.constant 8 : index
    %c0_29 = arith.constant 0 : index
    %66 = vector.load %arg5[%c8_28, %c0_29] : memref<32x256xf32, #tpu.memory_space<vmem>>, vector<4x256xf32>
    %67 = arith.truncf %64 : vector<4x256xf32> to vector<4x256xbf16>
    %c0_30 = arith.constant 0 : index
    %c0_31 = arith.constant 0 : index
    %68 = vector.load %arg3[%c0_30, %c0_31] : memref<256x768xbf16, #tpu.memory_space<vmem>>, vector<256x768xbf16>
    %cst_32 = arith.constant dense<0.000000e+00> : vector<4x768xf32>
    %69 = tpu.matmul %67, %68, %cst_32 {dimension_numbers = #tpu.dot_dimension_numbers<[1], [0], [0], [1], [0, 0, 1, 1], [], []>} : vector<4x256xbf16>, vector<256x768xbf16>, vector<4x768xf32> -> vector<4x768xf32>
    %70 = vector.extract_strided_slice %65 {offsets = [0, 0], sizes = [4, 512], strides = [1, 1]} : vector<4x768xf32> to vector<4x512xf32>
    %71 = vector.extract_strided_slice %69 {offsets = [0, 0], sizes = [4, 512], strides = [1, 1]} : vector<4x768xf32> to vector<4x512xf32>
    %72 = arith.addf %70, %71 : vector<4x512xf32>
    %73 = arith.negf %72 : vector<4x512xf32>
    %74 = math.exp %73 : vector<4x512xf32>
    %cst_33 = arith.constant 1.000000e+00 : f32
    %75 = vector.broadcast %cst_33 : f32 to vector<4x512xf32>
    %76 = arith.addf %75, %74 : vector<4x512xf32>
    %77 = arith.divf %75, %76 : vector<4x512xf32>
    %78 = vector.extract_strided_slice %77 {offsets = [0, 0], sizes = [4, 256], strides = [1, 1]} : vector<4x512xf32> to vector<4x256xf32>
    %79 = vector.extract_strided_slice %77 {offsets = [0, 256], sizes = [4, 256], strides = [1, 1]} : vector<4x512xf32> to vector<4x256xf32>
    %80 = vector.extract_strided_slice %65 {offsets = [0, 512], sizes = [4, 256], strides = [1, 1]} : vector<4x768xf32> to vector<4x256xf32>
    %81 = vector.extract_strided_slice %69 {offsets = [0, 512], sizes = [4, 256], strides = [1, 1]} : vector<4x768xf32> to vector<4x256xf32>
    %82 = vector.broadcast %7 : vector<1x256xf32> to vector<4x256xf32>
    %83 = arith.addf %81, %82 : vector<4x256xf32>
    %84 = arith.mulf %78, %83 : vector<4x256xf32>
    %85 = arith.addf %80, %84 : vector<4x256xf32>
    %86 = math.tanh %85 : vector<4x256xf32>
    %87 = arith.subf %64, %86 : vector<4x256xf32>
    %88 = arith.mulf %79, %87 : vector<4x256xf32>
    %89 = arith.addf %86, %88 : vector<4x256xf32>
    %cst_34 = arith.constant 0.000000e+00 : f32
    %90 = vector.broadcast %cst_34 : f32 to vector<4x256xf32>
    %91 = arith.cmpf one, %66, %90 : vector<4x256xf32>
    %92 = arith.select %91, %89, %64 : vector<4x256xi1>, vector<4x256xf32>
    %c12 = arith.constant 12 : index
    %c0_35 = arith.constant 0 : index
    %93 = vector.load %arg9[%c12, %c0_35] : memref<32x768xf32, #tpu.memory_space<vmem>>, vector<4x768xf32>
    %c12_36 = arith.constant 12 : index
    %c0_37 = arith.constant 0 : index
    %94 = vector.load %arg5[%c12_36, %c0_37] : memref<32x256xf32, #tpu.memory_space<vmem>>, vector<4x256xf32>
    %95 = arith.truncf %92 : vector<4x256xf32> to vector<4x256xbf16>
    %c0_38 = arith.constant 0 : index
    %c0_39 = arith.constant 0 : index
    %96 = vector.load %arg3[%c0_38, %c0_39] : memref<256x768xbf16, #tpu.memory_space<vmem>>, vector<256x768xbf16>
    %cst_40 = arith.constant dense<0.000000e+00> : vector<4x768xf32>
    %97 = tpu.matmul %95, %96, %cst_40 {dimension_numbers = #tpu.dot_dimension_numbers<[1], [0], [0], [1], [0, 0, 1, 1], [], []>} : vector<4x256xbf16>, vector<256x768xbf16>, vector<4x768xf32> -> vector<4x768xf32>
    %98 = vector.extract_strided_slice %93 {offsets = [0, 0], sizes = [4, 512], strides = [1, 1]} : vector<4x768xf32> to vector<4x512xf32>
    %99 = vector.extract_strided_slice %97 {offsets = [0, 0], sizes = [4, 512], strides = [1, 1]} : vector<4x768xf32> to vector<4x512xf32>
    %100 = arith.addf %98, %99 : vector<4x512xf32>
    %101 = arith.negf %100 : vector<4x512xf32>
    %102 = math.exp %101 : vector<4x512xf32>
    %cst_41 = arith.constant 1.000000e+00 : f32
    %103 = vector.broadcast %cst_41 : f32 to vector<4x512xf32>
    %104 = arith.addf %103, %102 : vector<4x512xf32>
    %105 = arith.divf %103, %104 : vector<4x512xf32>
    %106 = vector.extract_strided_slice %105 {offsets = [0, 0], sizes = [4, 256], strides = [1, 1]} : vector<4x512xf32> to vector<4x256xf32>
    %107 = vector.extract_strided_slice %105 {offsets = [0, 256], sizes = [4, 256], strides = [1, 1]} : vector<4x512xf32> to vector<4x256xf32>
    %108 = vector.extract_strided_slice %93 {offsets = [0, 512], sizes = [4, 256], strides = [1, 1]} : vector<4x768xf32> to vector<4x256xf32>
    %109 = vector.extract_strided_slice %97 {offsets = [0, 512], sizes = [4, 256], strides = [1, 1]} : vector<4x768xf32> to vector<4x256xf32>
    %110 = vector.broadcast %7 : vector<1x256xf32> to vector<4x256xf32>
    %111 = arith.addf %109, %110 : vector<4x256xf32>
    %112 = arith.mulf %106, %111 : vector<4x256xf32>
    %113 = arith.addf %108, %112 : vector<4x256xf32>
    %114 = math.tanh %113 : vector<4x256xf32>
    %115 = arith.subf %92, %114 : vector<4x256xf32>
    %116 = arith.mulf %107, %115 : vector<4x256xf32>
    %117 = arith.addf %114, %116 : vector<4x256xf32>
    %cst_42 = arith.constant 0.000000e+00 : f32
    %118 = vector.broadcast %cst_42 : f32 to vector<4x256xf32>
    %119 = arith.cmpf one, %94, %118 : vector<4x256xf32>
    %120 = arith.select %119, %117, %92 : vector<4x256xi1>, vector<4x256xf32>
    %c16 = arith.constant 16 : index
    %c0_43 = arith.constant 0 : index
    %121 = vector.load %arg9[%c16, %c0_43] : memref<32x768xf32, #tpu.memory_space<vmem>>, vector<4x768xf32>
    %c16_44 = arith.constant 16 : index
    %c0_45 = arith.constant 0 : index
    %122 = vector.load %arg5[%c16_44, %c0_45] : memref<32x256xf32, #tpu.memory_space<vmem>>, vector<4x256xf32>
    %123 = arith.truncf %120 : vector<4x256xf32> to vector<4x256xbf16>
    %c0_46 = arith.constant 0 : index
    %c0_47 = arith.constant 0 : index
    %124 = vector.load %arg3[%c0_46, %c0_47] : memref<256x768xbf16, #tpu.memory_space<vmem>>, vector<256x768xbf16>
    %cst_48 = arith.constant dense<0.000000e+00> : vector<4x768xf32>
    %125 = tpu.matmul %123, %124, %cst_48 {dimension_numbers = #tpu.dot_dimension_numbers<[1], [0], [0], [1], [0, 0, 1, 1], [], []>} : vector<4x256xbf16>, vector<256x768xbf16>, vector<4x768xf32> -> vector<4x768xf32>
    %126 = vector.extract_strided_slice %121 {offsets = [0, 0], sizes = [4, 512], strides = [1, 1]} : vector<4x768xf32> to vector<4x512xf32>
    %127 = vector.extract_strided_slice %125 {offsets = [0, 0], sizes = [4, 512], strides = [1, 1]} : vector<4x768xf32> to vector<4x512xf32>
    %128 = arith.addf %126, %127 : vector<4x512xf32>
    %129 = arith.negf %128 : vector<4x512xf32>
    %130 = math.exp %129 : vector<4x512xf32>
    %cst_49 = arith.constant 1.000000e+00 : f32
    %131 = vector.broadcast %cst_49 : f32 to vector<4x512xf32>
    %132 = arith.addf %131, %130 : vector<4x512xf32>
    %133 = arith.divf %131, %132 : vector<4x512xf32>
    %134 = vector.extract_strided_slice %133 {offsets = [0, 0], sizes = [4, 256], strides = [1, 1]} : vector<4x512xf32> to vector<4x256xf32>
    %135 = vector.extract_strided_slice %133 {offsets = [0, 256], sizes = [4, 256], strides = [1, 1]} : vector<4x512xf32> to vector<4x256xf32>
    %136 = vector.extract_strided_slice %121 {offsets = [0, 512], sizes = [4, 256], strides = [1, 1]} : vector<4x768xf32> to vector<4x256xf32>
    %137 = vector.extract_strided_slice %125 {offsets = [0, 512], sizes = [4, 256], strides = [1, 1]} : vector<4x768xf32> to vector<4x256xf32>
    %138 = vector.broadcast %7 : vector<1x256xf32> to vector<4x256xf32>
    %139 = arith.addf %137, %138 : vector<4x256xf32>
    %140 = arith.mulf %134, %139 : vector<4x256xf32>
    %141 = arith.addf %136, %140 : vector<4x256xf32>
    %142 = math.tanh %141 : vector<4x256xf32>
    %143 = arith.subf %120, %142 : vector<4x256xf32>
    %144 = arith.mulf %135, %143 : vector<4x256xf32>
    %145 = arith.addf %142, %144 : vector<4x256xf32>
    %cst_50 = arith.constant 0.000000e+00 : f32
    %146 = vector.broadcast %cst_50 : f32 to vector<4x256xf32>
    %147 = arith.cmpf one, %122, %146 : vector<4x256xf32>
    %148 = arith.select %147, %145, %120 : vector<4x256xi1>, vector<4x256xf32>
    %c20 = arith.constant 20 : index
    %c0_51 = arith.constant 0 : index
    %149 = vector.load %arg9[%c20, %c0_51] : memref<32x768xf32, #tpu.memory_space<vmem>>, vector<4x768xf32>
    %c20_52 = arith.constant 20 : index
    %c0_53 = arith.constant 0 : index
    %150 = vector.load %arg5[%c20_52, %c0_53] : memref<32x256xf32, #tpu.memory_space<vmem>>, vector<4x256xf32>
    %151 = arith.truncf %148 : vector<4x256xf32> to vector<4x256xbf16>
    %c0_54 = arith.constant 0 : index
    %c0_55 = arith.constant 0 : index
    %152 = vector.load %arg3[%c0_54, %c0_55] : memref<256x768xbf16, #tpu.memory_space<vmem>>, vector<256x768xbf16>
    %cst_56 = arith.constant dense<0.000000e+00> : vector<4x768xf32>
    %153 = tpu.matmul %151, %152, %cst_56 {dimension_numbers = #tpu.dot_dimension_numbers<[1], [0], [0], [1], [0, 0, 1, 1], [], []>} : vector<4x256xbf16>, vector<256x768xbf16>, vector<4x768xf32> -> vector<4x768xf32>
    %154 = vector.extract_strided_slice %149 {offsets = [0, 0], sizes = [4, 512], strides = [1, 1]} : vector<4x768xf32> to vector<4x512xf32>
    %155 = vector.extract_strided_slice %153 {offsets = [0, 0], sizes = [4, 512], strides = [1, 1]} : vector<4x768xf32> to vector<4x512xf32>
    %156 = arith.addf %154, %155 : vector<4x512xf32>
    %157 = arith.negf %156 : vector<4x512xf32>
    %158 = math.exp %157 : vector<4x512xf32>
    %cst_57 = arith.constant 1.000000e+00 : f32
    %159 = vector.broadcast %cst_57 : f32 to vector<4x512xf32>
    %160 = arith.addf %159, %158 : vector<4x512xf32>
    %161 = arith.divf %159, %160 : vector<4x512xf32>
    %162 = vector.extract_strided_slice %161 {offsets = [0, 0], sizes = [4, 256], strides = [1, 1]} : vector<4x512xf32> to vector<4x256xf32>
    %163 = vector.extract_strided_slice %161 {offsets = [0, 256], sizes = [4, 256], strides = [1, 1]} : vector<4x512xf32> to vector<4x256xf32>
    %164 = vector.extract_strided_slice %149 {offsets = [0, 512], sizes = [4, 256], strides = [1, 1]} : vector<4x768xf32> to vector<4x256xf32>
    %165 = vector.extract_strided_slice %153 {offsets = [0, 512], sizes = [4, 256], strides = [1, 1]} : vector<4x768xf32> to vector<4x256xf32>
    %166 = vector.broadcast %7 : vector<1x256xf32> to vector<4x256xf32>
    %167 = arith.addf %165, %166 : vector<4x256xf32>
    %168 = arith.mulf %162, %167 : vector<4x256xf32>
    %169 = arith.addf %164, %168 : vector<4x256xf32>
    %170 = math.tanh %169 : vector<4x256xf32>
    %171 = arith.subf %148, %170 : vector<4x256xf32>
    %172 = arith.mulf %163, %171 : vector<4x256xf32>
    %173 = arith.addf %170, %172 : vector<4x256xf32>
    %cst_58 = arith.constant 0.000000e+00 : f32
    %174 = vector.broadcast %cst_58 : f32 to vector<4x256xf32>
    %175 = arith.cmpf one, %150, %174 : vector<4x256xf32>
    %176 = arith.select %175, %173, %148 : vector<4x256xi1>, vector<4x256xf32>
    %c24 = arith.constant 24 : index
    %c0_59 = arith.constant 0 : index
    %177 = vector.load %arg9[%c24, %c0_59] : memref<32x768xf32, #tpu.memory_space<vmem>>, vector<4x768xf32>
    %c24_60 = arith.constant 24 : index
    %c0_61 = arith.constant 0 : index
    %178 = vector.load %arg5[%c24_60, %c0_61] : memref<32x256xf32, #tpu.memory_space<vmem>>, vector<4x256xf32>
    %179 = arith.truncf %176 : vector<4x256xf32> to vector<4x256xbf16>
    %c0_62 = arith.constant 0 : index
    %c0_63 = arith.constant 0 : index
    %180 = vector.load %arg3[%c0_62, %c0_63] : memref<256x768xbf16, #tpu.memory_space<vmem>>, vector<256x768xbf16>
    %cst_64 = arith.constant dense<0.000000e+00> : vector<4x768xf32>
    %181 = tpu.matmul %179, %180, %cst_64 {dimension_numbers = #tpu.dot_dimension_numbers<[1], [0], [0], [1], [0, 0, 1, 1], [], []>} : vector<4x256xbf16>, vector<256x768xbf16>, vector<4x768xf32> -> vector<4x768xf32>
    %182 = vector.extract_strided_slice %177 {offsets = [0, 0], sizes = [4, 512], strides = [1, 1]} : vector<4x768xf32> to vector<4x512xf32>
    %183 = vector.extract_strided_slice %181 {offsets = [0, 0], sizes = [4, 512], strides = [1, 1]} : vector<4x768xf32> to vector<4x512xf32>
    %184 = arith.addf %182, %183 : vector<4x512xf32>
    %185 = arith.negf %184 : vector<4x512xf32>
    %186 = math.exp %185 : vector<4x512xf32>
    %cst_65 = arith.constant 1.000000e+00 : f32
    %187 = vector.broadcast %cst_65 : f32 to vector<4x512xf32>
    %188 = arith.addf %187, %186 : vector<4x512xf32>
    %189 = arith.divf %187, %188 : vector<4x512xf32>
    %190 = vector.extract_strided_slice %189 {offsets = [0, 0], sizes = [4, 256], strides = [1, 1]} : vector<4x512xf32> to vector<4x256xf32>
    %191 = vector.extract_strided_slice %189 {offsets = [0, 256], sizes = [4, 256], strides = [1, 1]} : vector<4x512xf32> to vector<4x256xf32>
    %192 = vector.extract_strided_slice %177 {offsets = [0, 512], sizes = [4, 256], strides = [1, 1]} : vector<4x768xf32> to vector<4x256xf32>
    %193 = vector.extract_strided_slice %181 {offsets = [0, 512], sizes = [4, 256], strides = [1, 1]} : vector<4x768xf32> to vector<4x256xf32>
    %194 = vector.broadcast %7 : vector<1x256xf32> to vector<4x256xf32>
    %195 = arith.addf %193, %194 : vector<4x256xf32>
    %196 = arith.mulf %190, %195 : vector<4x256xf32>
    %197 = arith.addf %192, %196 : vector<4x256xf32>
    %198 = math.tanh %197 : vector<4x256xf32>
    %199 = arith.subf %176, %198 : vector<4x256xf32>
    %200 = arith.mulf %191, %199 : vector<4x256xf32>
    %201 = arith.addf %198, %200 : vector<4x256xf32>
    %cst_66 = arith.constant 0.000000e+00 : f32
    %202 = vector.broadcast %cst_66 : f32 to vector<4x256xf32>
    %203 = arith.cmpf one, %178, %202 : vector<4x256xf32>
    %204 = arith.select %203, %201, %176 : vector<4x256xi1>, vector<4x256xf32>
    %c28 = arith.constant 28 : index
    %c0_67 = arith.constant 0 : index
    %205 = vector.load %arg9[%c28, %c0_67] : memref<32x768xf32, #tpu.memory_space<vmem>>, vector<4x768xf32>
    %c28_68 = arith.constant 28 : index
    %c0_69 = arith.constant 0 : index
    %206 = vector.load %arg5[%c28_68, %c0_69] : memref<32x256xf32, #tpu.memory_space<vmem>>, vector<4x256xf32>
    %207 = arith.truncf %204 : vector<4x256xf32> to vector<4x256xbf16>
    %c0_70 = arith.constant 0 : index
    %c0_71 = arith.constant 0 : index
    %208 = vector.load %arg3[%c0_70, %c0_71] : memref<256x768xbf16, #tpu.memory_space<vmem>>, vector<256x768xbf16>
    %cst_72 = arith.constant dense<0.000000e+00> : vector<4x768xf32>
    %209 = tpu.matmul %207, %208, %cst_72 {dimension_numbers = #tpu.dot_dimension_numbers<[1], [0], [0], [1], [0, 0, 1, 1], [], []>} : vector<4x256xbf16>, vector<256x768xbf16>, vector<4x768xf32> -> vector<4x768xf32>
    %210 = vector.extract_strided_slice %205 {offsets = [0, 0], sizes = [4, 512], strides = [1, 1]} : vector<4x768xf32> to vector<4x512xf32>
    %211 = vector.extract_strided_slice %209 {offsets = [0, 0], sizes = [4, 512], strides = [1, 1]} : vector<4x768xf32> to vector<4x512xf32>
    %212 = arith.addf %210, %211 : vector<4x512xf32>
    %213 = arith.negf %212 : vector<4x512xf32>
    %214 = math.exp %213 : vector<4x512xf32>
    %cst_73 = arith.constant 1.000000e+00 : f32
    %215 = vector.broadcast %cst_73 : f32 to vector<4x512xf32>
    %216 = arith.addf %215, %214 : vector<4x512xf32>
    %217 = arith.divf %215, %216 : vector<4x512xf32>
    %218 = vector.extract_strided_slice %217 {offsets = [0, 0], sizes = [4, 256], strides = [1, 1]} : vector<4x512xf32> to vector<4x256xf32>
    %219 = vector.extract_strided_slice %217 {offsets = [0, 256], sizes = [4, 256], strides = [1, 1]} : vector<4x512xf32> to vector<4x256xf32>
    %220 = vector.extract_strided_slice %205 {offsets = [0, 512], sizes = [4, 256], strides = [1, 1]} : vector<4x768xf32> to vector<4x256xf32>
    %221 = vector.extract_strided_slice %209 {offsets = [0, 512], sizes = [4, 256], strides = [1, 1]} : vector<4x768xf32> to vector<4x256xf32>
    %222 = vector.broadcast %7 : vector<1x256xf32> to vector<4x256xf32>
    %223 = arith.addf %221, %222 : vector<4x256xf32>
    %224 = arith.mulf %218, %223 : vector<4x256xf32>
    %225 = arith.addf %220, %224 : vector<4x256xf32>
    %226 = math.tanh %225 : vector<4x256xf32>
    %227 = arith.subf %204, %226 : vector<4x256xf32>
    %228 = arith.mulf %219, %227 : vector<4x256xf32>
    %229 = arith.addf %226, %228 : vector<4x256xf32>
    %cst_74 = arith.constant 0.000000e+00 : f32
    %230 = vector.broadcast %cst_74 : f32 to vector<4x256xf32>
    %231 = arith.cmpf one, %206, %230 : vector<4x256xf32>
    %232 = arith.select %231, %229, %204 : vector<4x256xi1>, vector<4x256xf32>
    %233 = arith.truncf %232 : vector<4x256xf32> to vector<4x256xbf16>
    %c0_75 = arith.constant 0 : index
    %c0_76 = arith.constant 0 : index
    %234 = vector.load %arg6[%c0_75, %c0_76] : memref<256x128xbf16, #tpu.memory_space<vmem>>, vector<256x128xbf16>
    %cst_77 = arith.constant dense<0.000000e+00> : vector<4x128xf32>
    %235 = tpu.matmul %233, %234, %cst_77 {dimension_numbers = #tpu.dot_dimension_numbers<[1], [0], [0], [1], [0, 0, 1, 1], [], []>} : vector<4x256xbf16>, vector<256x128xbf16>, vector<4x128xf32> -> vector<4x128xf32>
    %c0_78 = arith.constant 0 : index
    %c0_79 = arith.constant 0 : index
    %236 = vector.load %arg7[%c0_78, %c0_79] : memref<1x128xf32, #tpu.memory_space<vmem>>, vector<1x128xf32>
    %237 = vector.broadcast %236 : vector<1x128xf32> to vector<4x128xf32>
    %238 = arith.addf %235, %237 : vector<4x128xf32>
    %c0_80 = arith.constant 0 : index
    %c0_81 = arith.constant 0 : index
    %239 = vector.load %arg8[%c0_80, %c0_81] : memref<4x128xf32, #tpu.memory_space<vmem>>, vector<4x128xf32>
    tpu.vector_store %arg8[%c0_80, %c0_81], %238 {strides = array<i32>} : memref<4x128xf32, #tpu.memory_space<vmem>>, vector<4x128xf32>,
    return
  }
}

</mosaic_0001>

<llo_original>
// kernel: tpu_custom_call.1
$region0: #{tpu_custom_call.1}
  #allocation0 [shape = 'u32[]', space=smem, size = 0x4, offset = 0x4, fixed_abs, tag = 'smem constant byte address 0x4 - core index']
  #allocation1 [shape = 'u32[144,128]{1,0:T(1,128)}', space=vmem, size = 0x12000, scoped, tag = 'internal scratch']
  #allocation2 [shape = 'f32[32,768]{1,0:T(8,128)}', space=vmem, size = 0x18000, scoped, tag = 'scratch operand']
  %s0 = inlined_call_operand.hbm [shape: bf16[32,64], index: 0, kind: input, shape index: {}]
  %s1 = inlined_call_operand.hbm [shape: bf16[64,768], index: 1, kind: input, shape index: {}]
  %s2 = inlined_call_operand.vmem [shape: f32[1,768], index: 2, kind: input, shape index: {}]
  %s3 = inlined_call_operand.hbm [shape: bf16[256,768], index: 3, kind: input, shape index: {}]
  %s4 = inlined_call_operand.vmem [shape: f32[1,256], index: 4, kind: input, shape index: {}]
  %s5 = inlined_call_operand.hbm [shape: f32[32,256], index: 5, kind: input, shape index: {}]
  %s6 = inlined_call_operand.hbm [shape: bf16[256,128], index: 6, kind: input, shape index: {}]
  %s7 = inlined_call_operand.vmem [shape: f32[1,128], index: 7, kind: input, shape index: {}]
  %s8 = inlined_call_operand.hbm [shape: f32[4,128], index: 8, kind: output, shape index: {}]
  %s9 = sld [smem:[#allocation0]]
  $region62: #{tpu_custom_call.1} parent=0
    _
  %s11 = ssub.s32 1, %s9
  %s12 = scalar_select 0, %s11, %s9
  $region1: #{tpu_custom_call.1} parent=0
    #allocation3 [shape = 'u8[8192]{0}', space=vmem, size = 0x2000, scoped, tag = 'input window, operand 0, single buffered']
    #allocation4 [shape = 's32[1]{0}', space=sflag, size = 0x4, scoped, tag = 'scoped memory for tpu_custom_call.1']
    #allocation5 [shape = 's32[1]{0}', space=sflag, size = 0x4, scoped, tag = 'scoped memory for tpu_custom_call.1']
    #allocation6 [shape = 'u8[98304]{0}', space=vmem, size = 0x18000, scoped, tag = 'input window, operand 1, single buffered']
    #allocation7 [shape = 's32[1]{0}', space=sflag, size = 0x4, scoped, tag = 'scoped memory for tpu_custom_call.1']
    #allocation8 [shape = 'u8[393216]{0}', space=vmem, size = 0x60000, scoped, tag = 'input window, operand 3, single buffered']
    #allocation9 [shape = 'u8[32768]{0}', space=vmem, size = 0x8000, scoped, tag = 'input window, operand 5, single buffered']
    #allocation10 [shape = 's32[1]{0}', space=sflag, size = 0x4, scoped, tag = 'scoped memory for tpu_custom_call.1']
    #allocation11 [shape = 'u8[65536]{0}', space=vmem, size = 0x10000, scoped, tag = 'input window, operand 6, single buffered']
    #allocation12 [shape = 'u8[2048]{0}', space=vmem, size = 0x800, scoped, tag = 'output window, operand 0, single buffered']
    %13 = vsyncpa [#allocation4], 0
    %14 = vsyncpa [#allocation7], 0
    %15 = vsyncpa [#allocation10], 0
    %16 = vsyncpa [#allocation5], 0
    // Predicated region
    $region2: #{tpu_custom_call.1} parent=1 // pred_check
      _
    $region3: #{tpu_custom_call.1} parent=1 // pred_check_branch
      %18 = sbr.rel (0) target = $region5
    $region4: #{tpu_custom_call.1} parent=1 // pred_region
      %s20 = ssub.s32 256, 256
      %21 = vsyncadd [#allocation4], %s20
      %s22 = sshll.u32 [#allocation3], 4
      %s23 = int_to_ptr.vmem [resolvable:$true] %s22
      %28 = dma.hbm_to_vmem [thread:$0]  %s0, 256, %s23, [#allocation4], 64, 64, 4
    $region5: #{tpu_custom_call.1} parent=1 // pred_fallthru
      _
    // Predicated region
    $region6: #{tpu_custom_call.1} parent=1 // pred_check
      _
    $region7: #{tpu_custom_call.1} parent=1 // pred_check_branch
      %30 = sbr.rel (0) target = $region9
    $region8: #{tpu_custom_call.1} parent=1 // pred_region
      %s32 = ssub.s32 3072, 3072
      %33 = vsyncadd [#allocation7], %s32
      %s34 = sshll.u32 [#allocation6], 4
      %s35 = int_to_ptr.vmem [resolvable:$true] %s34
      %40 = dma.hbm_to_vmem [thread:$0]  %s1, 3072, %s35, [#allocation7], 384, 384, 24
    $region9: #{tpu_custom_call.1} parent=1 // pred_fallthru
      _
    // Predicated region
    $region10: #{tpu_custom_call.1} parent=1 // pred_check
      _
    $region11: #{tpu_custom_call.1} parent=1 // pred_check_branch
      %42 = sbr.rel (0) target = $region13
    $region12: #{tpu_custom_call.1} parent=1 // pred_region
      _
    $region13: #{tpu_custom_call.1} parent=1 // pred_fallthru
      _
    // Predicated region
    $region14: #{tpu_custom_call.1} parent=1 // pred_check
      _
    $region15: #{tpu_custom_call.1} parent=1 // pred_check_branch
      %44 = sbr.rel (0) target = $region17
    $region16: #{tpu_custom_call.1} parent=1 // pred_region
      %s46 = ssub.s32 12288, 12288
      %47 = vsyncadd [#allocation7], %s46
      %s48 = sshll.u32 [#allocation8], 4
      %s49 = int_to_ptr.vmem [resolvable:$true] %s48
      %54 = dma.hbm_to_vmem [thread:$0]  %s3, 12288, %s49, [#allocation7], 384, 384, 24
    $region17: #{tpu_custom_call.1} parent=1 // pred_fallthru
      _
    // Predicated region
    $region18: #{tpu_custom_call.1} parent=1 // pred_check
      _
    $region19: #{tpu_custom_call.1} parent=1 // pred_check_branch
      %56 = sbr.rel (0) target = $region21
    $region20: #{tpu_custom_call.1} parent=1 // pred_region
      _
    $region21: #{tpu_custom_call.1} parent=1 // pred_fallthru
      _
    // Predicated region
    $region22: #{tpu_custom_call.1} parent=1 // pred_check
      _
    $region23: #{tpu_custom_call.1} parent=1 // pred_check_branch
      %58 = sbr.rel (0) target = $region25
    $region24: #{tpu_custom_call.1} parent=1 // pred_region
      %s60 = ssub.s32 1024, 1024
      %61 = vsyncadd [#allocation10], %s60
      %s62 = sshll.u32 [#allocation9], 4
      %s63 = int_to_ptr.vmem [resolvable:$true] %s62
      %68 = dma.hbm_to_vmem [thread:$0]  %s5, 1024, %s63, [#allocation10], 256, 256, 16
    $region25: #{tpu_custom_call.1} parent=1 // pred_fallthru
      _
    // Predicated region
    $region26: #{tpu_custom_call.1} parent=1 // pred_check
      _
    $region27: #{tpu_custom_call.1} parent=1 // pred_check_branch
      %70 = sbr.rel (0) target = $region29
    $region28: #{tpu_custom_call.1} parent=1 // pred_region
      %s72 = ssub.s32 2048, 2048
      %73 = vsyncadd [#allocation10], %s72
      %s74 = sshll.u32 [#allocation11], 4
      %s75 = int_to_ptr.vmem [resolvable:$true] %s74
      %80 = dma.hbm_to_vmem [thread:$0]  %s6, 2048, %s75, [#allocation10], 64, 64, 4
    $region29: #{tpu_custom_call.1} parent=1 // pred_fallthru
      _
    // Predicated region
    $region30: #{tpu_custom_call.1} parent=1 // pred_check
      _
    $region31: #{tpu_custom_call.1} parent=1 // pred_check_branch
      %82 = sbr.rel (0) target = $region33
    $region32: #{tpu_custom_call.1} parent=1 // pred_region
      _
    $region33: #{tpu_custom_call.1} parent=1 // pred_fallthru
      _
    // Predicated region
    $region34: #{tpu_custom_call.1} parent=1 // pred_check
      _
    $region35: #{tpu_custom_call.1} parent=1 // pred_check_branch
      %84 = sbr.rel (0) target = $region37
    $region36: #{tpu_custom_call.1} parent=1 // pred_region
      %85 = dma.done [#allocation4], 256
    $region37: #{tpu_custom_call.1} parent=1 // pred_fallthru
      _
    // Predicated region
    $region38: #{tpu_custom_call.1} parent=1 // pred_check
      _
    $region39: #{tpu_custom_call.1} parent=1 // pred_check_branch
      %87 = sbr.rel (0) target = $region41
    $region40: #{tpu_custom_call.1} parent=1 // pred_region
      %88 = dma.done [#allocation7], 3072
    $region41: #{tpu_custom_call.1} parent=1 // pred_fallthru
      _
    // Predicated region
    $region42: #{tpu_custom_call.1} parent=1 // pred_check
      _
    $region43: #{tpu_custom_call.1} parent=1 // pred_check_branch
      %90 = sbr.rel (0) target = $region45
    $region44: #{tpu_custom_call.1} parent=1 // pred_region
      %91 = dma.done [#allocation7], 12288
    $region45: #{tpu_custom_call.1} parent=1 // pred_fallthru
      _
    // Predicated region
    $region46: #{tpu_custom_call.1} parent=1 // pred_check
      _
    $region47: #{tpu_custom_call.1} parent=1 // pred_check_branch
      %93 = sbr.rel (0) target = $region49
    $region48: #{tpu_custom_call.1} parent=1 // pred_region
      %94 = dma.done [#allocation10], 1024
    $region49: #{tpu_custom_call.1} parent=1 // pred_fallthru
      _
    // Predicated region
    $region50: #{tpu_custom_call.1} parent=1 // pred_check
      _
    $region51: #{tpu_custom_call.1} parent=1 // pred_check_branch
      %96 = sbr.rel (0) target = $region53
    $region52: #{tpu_custom_call.1} parent=1 // pred_region
      %97 = dma.done [#allocation10], 2048
    $region53: #{tpu_custom_call.1} parent=1 // pred_fallthru
      _
    %v99 = vld [vmem:[#allocation3] sm:$0xf]
    %v100 = vld [vmem:[#allocation3 + $0x4] sm:$0xf]
    %v101 = vld [vmem:[#allocation3 + $0x8] sm:$0xf]
    %v102 = vld [vmem:[#allocation3 + $0xc] sm:$0xf]
    %v103 = vld [vmem:[#allocation6] sm:$0xff]
    %v104 = vld [vmem:[#allocation6 + $0x8] sm:$0xff]
    %v105 = vld [vmem:[#allocation6 + $0x10] sm:$0xff]
    %v106 = vld [vmem:[#allocation6 + $0x18] sm:$0xff]
    %v107 = vld [vmem:[#allocation6 + $0x20] sm:$0xff]
    %v108 = vld [vmem:[#allocation6 + $0x28] sm:$0xff]
    %v109 = vld [vmem:[#allocation6 + $0x30] sm:$0xff]
    %v110 = vld [vmem:[#allocation6 + $0x38] sm:$0xff]
    %v111 = vld [vmem:[#allocation6 + $0x40] sm:$0xff]
    %v112 = vld [vmem:[#allocation6 + $0x48] sm:$0xff]
    %v113 = vld [vmem:[#allocation6 + $0x50] sm:$0xff]
    %v114 = vld [vmem:[#allocation6 + $0x58] sm:$0xff]
    %v115 = vld [vmem:[#allocation6 + $0x60] sm:$0xff]
    %v116 = vld [vmem:[#allocation6 + $0x68] sm:$0xff]
    %v117 = vld [vmem:[#allocation6 + $0x70] sm:$0xff]
    %v118 = vld [vmem:[#allocation6 + $0x78] sm:$0xff]
    %v119 = vld [vmem:[#allocation6 + $0x80] sm:$0xff]
    %v120 = vld [vmem:[#allocation6 + $0x88] sm:$0xff]
    %v121 = vld [vmem:[#allocation6 + $0x90] sm:$0xff]
    %v122 = vld [vmem:[#allocation6 + $0x98] sm:$0xff]
    %v123 = vld [vmem:[#allocation6 + $0xa0] sm:$0xff]
    %v124 = vld [vmem:[#allocation6 + $0xa8] sm:$0xff]
    %v125 = vld [vmem:[#allocation6 + $0xb0] sm:$0xff]
    %v126 = vld [vmem:[#allocation6 + $0xb8] sm:$0xff]
    %v127 = vld [vmem:[%s2] sm:$0x3f]
    %v129 = vlaneseq
    %v130 = vshrl.u32 %v129, 7
    %v131 = vsub.s32 0, %v130
    %v132 = vrot.slane %v127, %v131
    %v133 = vlaneseq
    %v134 = vshrl.u32 %v133, 7
    %v135 = vsub.s32 1, %v134
    %v136 = vrot.slane %v127, %v135
    %v137 = vlaneseq
    %v138 = vshrl.u32 %v137, 7
    %v139 = vsub.s32 2, %v138
    %v140 = vrot.slane %v127, %v139
    %v141 = vlaneseq
    %v142 = vshrl.u32 %v141, 7
    %v143 = vsub.s32 3, %v142
    %v144 = vrot.slane %v127, %v143
    %v145 = vlaneseq
    %v146 = vshrl.u32 %v145, 7
    %v147 = vsub.s32 4, %v146
    %v148 = vrot.slane %v127, %v147
    %v149 = vlaneseq
    %v150 = vshrl.u32 %v149, 7
    %v151 = vsub.s32 5, %v150
    %v152 = vrot.slane %v127, %v151
    %v163 = vunpack.c.l.b16 %v99
    %v164 = vunpack.c.l.b16 %v100
    %v165 = vunpack.c.l.b16 %v101
    %v166 = vunpack.c.l.b16 %v102
    %v167 = vpack.c.b16 %v164, %v163
    %v168 = vpack.c.b16 %v166, %v165
    %v193 = vunpack.c.l.b16 %v103
    %v194 = vunpack.c.h.b16 %v103
    %v195 = vunpack.c.l.b16 %v104
    %v196 = vunpack.c.h.b16 %v104
    %v197 = vunpack.c.l.b16 %v105
    %v198 = vunpack.c.h.b16 %v105
    %v199 = vunpack.c.l.b16 %v106
    %v200 = vunpack.c.h.b16 %v106
    %v201 = vunpack.c.l.b16 %v107
    %v202 = vunpack.c.h.b16 %v107
    %v203 = vunpack.c.l.b16 %v108
    %v204 = vunpack.c.h.b16 %v108
    %v205 = vunpack.c.l.b16 %v109
    %v206 = vunpack.c.h.b16 %v109
    %v207 = vunpack.c.l.b16 %v110
    %v208 = vunpack.c.h.b16 %v110
    %v209 = vunpack.c.l.b16 %v111
    %v210 = vunpack.c.h.b16 %v111
    %v211 = vunpack.c.l.b16 %v112
    %v212 = vunpack.c.h.b16 %v112
    %v213 = vunpack.c.l.b16 %v113
    %v214 = vunpack.c.h.b16 %v113
    %v215 = vunpack.c.l.b16 %v114
    %v216 = vunpack.c.h.b16 %v114
    %v217 = vunpack.c.l.b16 %v115
    %v218 = vunpack.c.h.b16 %v115
    %v219 = vunpack.c.l.b16 %v116
    %v220 = vunpack.c.h.b16 %v116
    %v221 = vunpack.c.l.b16 %v117
    %v222 = vunpack.c.h.b16 %v117
    %v223 = vunpack.c.l.b16 %v118
    %v224 = vunpack.c.h.b16 %v118
    %v225 = vunpack.c.l.b16 %v119
    %v226 = vunpack.c.h.b16 %v119
    %v227 = vunpack.c.l.b16 %v120
    %v228 = vunpack.c.h.b16 %v120
    %v229 = vunpack.c.l.b16 %v121
    %v230 = vunpack.c.h.b16 %v121
    %v231 = vunpack.c.l.b16 %v122
    %v232 = vunpack.c.h.b16 %v122
    %v233 = vunpack.c.l.b16 %v123
    %v234 = vunpack.c.h.b16 %v123
    %v235 = vunpack.c.l.b16 %v124
    %v236 = vunpack.c.h.b16 %v124
    %v237 = vunpack.c.l.b16 %v125
    %v238 = vunpack.c.h.b16 %v125
    %v239 = vunpack.c.l.b16 %v126
    %v240 = vunpack.c.h.b16 %v126
    %v241 = vpack.c.b16 %v199, %v193
    %v242 = vpack.c.b16 %v200, %v194
    %v243 = vpack.c.b16 %v201, %v195
    %v244 = vpack.c.b16 %v202, %v196
    %v245 = vpack.c.b16 %v203, %v197
    %v246 = vpack.c.b16 %v204, %v198
    %v247 = vpack.c.b16 %v211, %v205
    %v248 = vpack.c.b16 %v212, %v206
    %v249 = vpack.c.b16 %v213, %v207
    %v250 = vpack.c.b16 %v214, %v208
    %v251 = vpack.c.b16 %v215, %v209
    %v252 = vpack.c.b16 %v216, %v210
    %v253 = vpack.c.b16 %v223, %v217
    %v254 = vpack.c.b16 %v224, %v218
    %v255 = vpack.c.b16 %v225, %v219
    %v256 = vpack.c.b16 %v226, %v220
    %v257 = vpack.c.b16 %v227, %v221
    %v258 = vpack.c.b16 %v228, %v222
    %v259 = vpack.c.b16 %v235, %v229
    %v260 = vpack.c.b16 %v236, %v230
    %v261 = vpack.c.b16 %v237, %v231
    %v262 = vpack.c.b16 %v238, %v232
    %v263 = vpack.c.b16 %v239, %v233
    %v264 = vpack.c.b16 %v240, %v234
    %vm289 = vcmask 523264
    %v291 = vsel %vm289, %v167, 0
    %v294 = vsel %vm289, %v168, 0
    %296 = vmatprep.subr.bf16.mxu0 %v242
    %297 = vmatpush1.bf16.msra.mxu0 %v241
    %298 = vmatprep.subr.bf16.mxu0 %v248
    %299 = vmatpush1.bf16.msra.mxu0 %v247
    %300 = vmatprep.subr.bf16.mxu0 %v254
    %301 = vmatpush1.bf16.msra.mxu0 %v253
    %302 = vmatprep.subr.bf16.mxu0 %v260
    %303 = vmatpush1.bf16.msra.mxu0 %v259
    %304 = vmatprep.subr.bf16.mxu0 0
    %305 = vmatpush1.bf16.msra.mxu0 0
    %306 = vmatprep.subr.bf16.mxu0 0
    %307 = vmatpush1.bf16.msra.mxu0 0
    %308 = vmatprep.subr.bf16.mxu0 0
    %309 = vmatpush1.bf16.msra.mxu0 0
    %310 = vmatprep.subr.bf16.mxu0 0
    %311 = vmatpush1.bf16.msra.mxu0 0
    %312 = vmatprep.subr.bf16.mxu0 0
    %313 = vmatpush1.bf16.msra.mxu0 0
    %314 = vmatprep.subr.bf16.mxu0 0
    %315 = vmatpush1.bf16.msra.mxu0 0
    %316 = vmatprep.subr.bf16.mxu0 0
    %317 = vmatpush1.bf16.msra.mxu0 0
    %318 = vmatprep.subr.bf16.mxu0 0
    %319 = vmatpush1.bf16.msra.mxu0 0
    %320 = vmatprep.subr.bf16.mxu0 0
    %321 = vmatpush1.bf16.msra.mxu0 0
    %322 = vmatprep.subr.bf16.mxu0 0
    %323 = vmatpush1.bf16.msra.mxu0 0
    %324 = vmatprep.subr.bf16.mxu0 0
    %325 = vmatpush1.bf16.msra.mxu0 0
    %326 = vmatprep.subr.bf16.mxu0 0
    %327 = vmatpush1.bf16.msra.mxu0 0
    %328 = vmatprep.mubr.bf16.mxu0 0
    %329 = vmatmul.mubr.bf16.gmra.mrb[0].mxu0 %v291
    %v330 = vpop.f32.mrb[0].mxu0
    %v331 = vadd.f32 %v132, %v330
    %v332 = vpop.f32.mrb[0].mxu0
    %v333 = vadd.f32 %v136, %v332
    %v334 = vpop.f32.mrb[0].mxu0
    %v335 = vadd.f32 %v132, %v334
    %v336 = vpop.f32.mrb[0].mxu0
    %v337 = vadd.f32 %v136, %v336
    %338 = vmatprep.mubr.bf16.mxu0 0
    %339 = vmatmul.mubr.bf16.gmra.mrb[0].mxu0 %v294
    %v340 = vpop.f32.mrb[0].mxu0
    %v341 = vadd.f32 %v132, %v340
    %v342 = vpop.f32.mrb[0].mxu0
    %v343 = vadd.f32 %v136, %v342
    %v344 = vpop.f32.mrb[0].mxu0
    %v345 = vadd.f32 %v132, %v344
    %v346 = vpop.f32.mrb[0].mxu0
    %v347 = vadd.f32 %v136, %v346
    %348 = vdwg.mxu0
    %349 = vmatprep.subr.bf16.mxu0 %v244
    %350 = vmatpush1.bf16.msra.mxu0 %v243
    %351 = vmatprep.subr.bf16.mxu0 %v250
    %352 = vmatpush1.bf16.msra.mxu0 %v249
    %353 = vmatprep.subr.bf16.mxu0 %v256
    %354 = vmatpush1.bf16.msra.mxu0 %v255
    %355 = vmatprep.subr.bf16.mxu0 %v262
    %356 = vmatpush1.bf16.msra.mxu0 %v261
    %357 = vmatprep.subr.bf16.mxu0 0
    %358 = vmatpush1.bf16.msra.mxu0 0
    %359 = vmatprep.subr.bf16.mxu0 0
    %360 = vmatpush1.bf16.msra.mxu0 0
    %361 = vmatprep.subr.bf16.mxu0 0
    %362 = vmatpush1.bf16.msra.mxu0 0
    %363 = vmatprep.subr.bf16.mxu0 0
    %364 = vmatpush1.bf16.msra.mxu0 0
    %365 = vmatprep.subr.bf16.mxu0 0
    %366 = vmatpush1.bf16.msra.mxu0 0
    %367 = vmatprep.subr.bf16.mxu0 0
    %368 = vmatpush1.bf16.msra.mxu0 0
    %369 = vmatprep.subr.bf16.mxu0 0
    %370 = vmatpush1.bf16.msra.mxu0 0
    %371 = vmatprep.subr.bf16.mxu0 0
    %372 = vmatpush1.bf16.msra.mxu0 0
    %373 = vmatprep.subr.bf16.mxu0 0
    %374 = vmatpush1.bf16.msra.mxu0 0
    %375 = vmatprep.subr.bf16.mxu0 0
    %376 = vmatpush1.bf16.msra.mxu0 0
    %377 = vmatprep.subr.bf16.mxu0 0
    %378 = vmatpush1.bf16.msra.mxu0 0
    %379 = vmatprep.subr.bf16.mxu0 0
    %380 = vmatpush1.bf16.msra.mxu0 0
    %381 = vmatprep.mubr.bf16.mxu0 0
    %382 = vmatmul.mubr.bf16.gmra.mrb[0].mxu0 %v291
    %v383 = vpop.f32.mrb[0].mxu0
    %v384 = vadd.f32 %v140, %v383
    %v385 = vpop.f32.mrb[0].mxu0
    %v386 = vadd.f32 %v144, %v385
    %v387 = vpop.f32.mrb[0].mxu0
    %v388 = vadd.f32 %v140, %v387
    %v389 = vpop.f32.mrb[0].mxu0
    %v390 = vadd.f32 %v144, %v389
    %391 = vmatprep.mubr.bf16.mxu0 0
    %392 = vmatmul.mubr.bf16.gmra.mrb[0].mxu0 %v294
    %v393 = vpop.f32.mrb[0].mxu0
    %v394 = vadd.f32 %v140, %v393
    %v395 = vpop.f32.mrb[0].mxu0
    %v396 = vadd.f32 %v144, %v395
    %v397 = vpop.f32.mrb[0].mxu0
    %v398 = vadd.f32 %v140, %v397
    %v399 = vpop.f32.mrb[0].mxu0
    %v400 = vadd.f32 %v144, %v399
    %401 = vdwg.mxu0
    %402 = vmatprep.subr.bf16.mxu0 %v246
    %403 = vmatpush1.bf16.msra.mxu0 %v245
    %404 = vmatprep.subr.bf16.mxu0 %v252
    %405 = vmatpush1.bf16.msra.mxu0 %v251
    %406 = vmatprep.subr.bf16.mxu0 %v258
    %407 = vmatpush1.bf16.msra.mxu0 %v257
    %408 = vmatprep.subr.bf16.mxu0 %v264
    %409 = vmatpush1.bf16.msra.mxu0 %v263
    %410 = vmatprep.subr.bf16.mxu0 0
    %411 = vmatpush1.bf16.msra.mxu0 0
    %412 = vmatprep.subr.bf16.mxu0 0
    %413 = vmatpush1.bf16.msra.mxu0 0
    %414 = vmatprep.subr.bf16.mxu0 0
    %415 = vmatpush1.bf16.msra.mxu0 0
    %416 = vmatprep.subr.bf16.mxu0 0
    %417 = vmatpush1.bf16.msra.mxu0 0
    %418 = vmatprep.subr.bf16.mxu0 0
    %419 = vmatpush1.bf16.msra.mxu0 0
    %420 = vmatprep.subr.bf16.mxu0 0
    %421 = vmatpush1.bf16.msra.mxu0 0
    %422 = vmatprep.subr.bf16.mxu0 0
    %423 = vmatpush1.bf16.msra.mxu0 0
    %424 = vmatprep.subr.bf16.mxu0 0
    %425 = vmatpush1.bf16.msra.mxu0 0
    %426 = vmatprep.subr.bf16.mxu0 0
    %427 = vmatpush1.bf16.msra.mxu0 0
    %428 = vmatprep.subr.bf16.mxu0 0
    %429 = vmatpush1.bf16.msra.mxu0 0
    %430 = vmatprep.subr.bf16.mxu0 0
    %431 = vmatpush1.bf16.msra.mxu0 0
    %432 = vmatprep.subr.bf16.mxu0 0
    %433 = vmatpush1.bf16.msra.mxu0 0
    %434 = vmatprep.mubr.bf16.mxu0 0
    %435 = vmatmul.mubr.bf16.gmra.mrb[0].mxu0 %v291
    %v436 = vpop.f32.mrb[0].mxu0
    %v437 = vadd.f32 %v148, %v436
    %v438 = vpop.f32.mrb[0].mxu0
    %v439 = vadd.f32 %v152, %v438
    %v440 = vpop.f32.mrb[0].mxu0
    %v441 = vadd.f32 %v148, %v440
    %v442 = vpop.f32.mrb[0].mxu0
    %v443 = vadd.f32 %v152, %v442
    %444 = vmatprep.mubr.bf16.mxu0 0
    %445 = vmatmul.mubr.bf16.gmra.mrb[0].mxu0 %v294
    %v446 = vpop.f32.mrb[0].mxu0
    %v447 = vadd.f32 %v148, %v446
    %v448 = vpop.f32.mrb[0].mxu0
    %v449 = vadd.f32 %v152, %v448
    %v450 = vpop.f32.mrb[0].mxu0
    %v451 = vadd.f32 %v148, %v450
    %v452 = vpop.f32.mrb[0].mxu0
    %v453 = vadd.f32 %v152, %v452
    %454 = vdwg.mxu0
    %455 = vst [vmem:[#allocation2] sm:$0xff] %v331
    %456 = vst [vmem:[#allocation2 + $0x8] sm:$0xff] %v333
    %457 = vst [vmem:[#allocation2 + $0x10] sm:$0xff] %v384
    %458 = vst [vmem:[#allocation2 + $0x18] sm:$0xff] %v386
    %459 = vst [vmem:[#allocation2 + $0x20] sm:$0xff] %v437
    %460 = vst [vmem:[#allocation2 + $0x28] sm:$0xff] %v439
    %461 = vst [vmem:[#allocation2 + $0x30] sm:$0xff] %v335
    %462 = vst [vmem:[#allocation2 + $0x38] sm:$0xff] %v337
    %463 = vst [vmem:[#allocation2 + $0x40] sm:$0xff] %v388
    %464 = vst [vmem:[#allocation2 + $0x48] sm:$0xff] %v390
    %465 = vst [vmem:[#allocation2 + $0x50] sm:$0xff] %v441
    %466 = vst [vmem:[#allocation2 + $0x58] sm:$0xff] %v443
    %467 = vst [vmem:[#allocation2 + $0x60] sm:$0xff] %v341
    %468 = vst [vmem:[#allocation2 + $0x68] sm:$0xff] %v343
    %469 = vst [vmem:[#allocation2 + $0x70] sm:$0xff] %v394
    %470 = vst [vmem:[#allocation2 + $0x78] sm:$0xff] %v396
    %471 = vst [vmem:[#allocation2 + $0x80] sm:$0xff] %v447
    %472 = vst [vmem:[#allocation2 + $0x88] sm:$0xff] %v449
    %473 = vst [vmem:[#allocation2 + $0x90] sm:$0xff] %v345
    %474 = vst [vmem:[#allocation2 + $0x98] sm:$0xff] %v347
    %475 = vst [vmem:[#allocation2 + $0xa0] sm:$0xff] %v398
    %476 = vst [vmem:[#allocation2 + $0xa8] sm:$0xff] %v400
    %477 = vst [vmem:[#allocation2 + $0xb0] sm:$0xff] %v451
    %478 = vst [vmem:[#allocation2 + $0xb8] sm:$0xff] %v453
    %v479 = vld [vmem:[%s4] sm:$0x3]
    %v480 = vld [vmem:[#allocation2] sm:$0xf]
    %v481 = vld [vmem:[#allocation2 + $0x8] sm:$0xf]
    %v482 = vld [vmem:[#allocation2 + $0x10] sm:$0xf]
    %v483 = vld [vmem:[#allocation2 + $0x18] sm:$0xf]
    %v484 = vld [vmem:[#allocation2 + $0x20] sm:$0xf]
    %v485 = vld [vmem:[#allocation2 + $0x28] sm:$0xf]
    %v486 = vld [vmem:[#allocation9] sm:$0xf]
    %v487 = vld [vmem:[#allocation9 + $0x8] sm:$0xf]
    %v488 = vld [vmem:[#allocation8] sm:$0xff]
    %v489 = vld [vmem:[#allocation8 + $0x8] sm:$0xff]
    %v490 = vld [vmem:[#allocation8 + $0x10] sm:$0xff]
    %v491 = vld [vmem:[#allocation8 + $0x18] sm:$0xff]
    %v492 = vld [vmem:[#allocation8 + $0x20] sm:$0xff]
    %v493 = vld [vmem:[#allocation8 + $0x28] sm:$0xff]
    %v494 = vld [vmem:[#allocation8 + $0x30] sm:$0xff]
    %v495 = vld [vmem:[#allocation8 + $0x38] sm:$0xff]
    %v496 = vld [vmem:[#allocation8 + $0x40] sm:$0xff]
    %v497 = vld [vmem:[#allocation8 + $0x48] sm:$0xff]
    %v498 = vld [vmem:[#allocation8 + $0x50] sm:$0xff]
    %v499 = vld [vmem:[#allocation8 + $0x58] sm:$0xff]
    %v500 = vld [vmem:[#allocation8 + $0x60] sm:$0xff]
    %v501 = vld [vmem:[#allocation8 + $0x68] sm:$0xff]
    %v502 = vld [vmem:[#allocation8 + $0x70] sm:$0xff]
    %v503 = vld [vmem:[#allocation8 + $0x78] sm:$0xff]
    %v504 = vld [vmem:[#allocation8 + $0x80] sm:$0xff]
    %v505 = vld [vmem:[#allocation8 + $0x88] sm:$0xff]
    %v506 = vld [vmem:[#allocation8 + $0x90] sm:$0xff]
    %v507 = vld [vmem:[#allocation8 + $0x98] sm:$0xff]
    %v508 = vld [vmem:[#allocation8 + $0xa0] sm:$0xff]
    %v509 = vld [vmem:[#allocation8 + $0xa8] sm:$0xff]
    %v510 = vld [vmem:[#allocation8 + $0xb0] sm:$0xff]
    %v511 = vld [vmem:[#allocation8 + $0xb8] sm:$0xff]
    %v512 = vld [vmem:[#allocation8 + $0xc0] sm:$0xff]
    %v513 = vld [vmem:[#allocation8 + $0xc8] sm:$0xff]
    %v514 = vld [vmem:[#allocation8 + $0xd0] sm:$0xff]
    %v515 = vld [vmem:[#allocation8 + $0xd8] sm:$0xff]
    %v516 = vld [vmem:[#allocation8 + $0xe0] sm:$0xff]
    %v517 = vld [vmem:[#allocation8 + $0xe8] sm:$0xff]
    %v518 = vld [vmem:[#allocation8 + $0xf0] sm:$0xff]
    %v519 = vld [vmem:[#allocation8 + $0xf8] sm:$0xff]
    %v520 = vld [vmem:[#allocation8 + $0x100] sm:$0xff]
    %v521 = vld [vmem:[#allocation8 + $0x108] sm:$0xff]
    %v522 = vld [vmem:[#allocation8 + $0x110] sm:$0xff]
    %v523 = vld [vmem:[#allocation8 + $0x118] sm:$0xff]
    %v524 = vld [vmem:[#allocation8 + $0x120] sm:$0xff]
    %v525 = vld [vmem:[#allocation8 + $0x128] sm:$0xff]
    %v526 = vld [vmem:[#allocation8 + $0x130] sm:$0xff]
    %v527 = vld [vmem:[#allocation8 + $0x138] sm:$0xff]
    %v528 = vld [vmem:[#allocation8 + $0x140] sm:$0xff]
    %v529 = vld [vmem:[#allocation8 + $0x148] sm:$0xff]
    %v530 = vld [vmem:[#allocation8 + $0x150] sm:$0xff]
    %v531 = vld [vmem:[#allocation8 + $0x158] sm:$0xff]
    %v532 = vld [vmem:[#allocation8 + $0x160] sm:$0xff]
    %v533 = vld [vmem:[#allocation8 + $0x168] sm:$0xff]
    %v534 = vld [vmem:[#allocation8 + $0x170] sm:$0xff]
    %v535 = vld [vmem:[#allocation8 + $0x178] sm:$0xff]
    %v536 = vld [vmem:[#allocation8 + $0x180] sm:$0xff]
    %v537 = vld [vmem:[#allocation8 + $0x188] sm:$0xff]
    %v538 = vld [vmem:[#allocation8 + $0x190] sm:$0xff]
    %v539 = vld [vmem:[#allocation8 + $0x198] sm:$0xff]
    %v540 = vld [vmem:[#allocation8 + $0x1a0] sm:$0xff]
    %v541 = vld [vmem:[#allocation8 + $0x1a8] sm:$0xff]
    %v542 = vld [vmem:[#allocation8 + $0x1b0] sm:$0xff]
    %v543 = vld [vmem:[#allocation8 + $0x1b8] sm:$0xff]
    %v544 = vld [vmem:[#allocation8 + $0x1c0] sm:$0xff]
    %v545 = vld [vmem:[#allocation8 + $0x1c8] sm:$0xff]
    %v546 = vld [vmem:[#allocation8 + $0x1d0] sm:$0xff]
    %v547 = vld [vmem:[#allocation8 + $0x1d8] sm:$0xff]
    %v548 = vld [vmem:[#allocation8 + $0x1e0] sm:$0xff]
    %v549 = vld [vmem:[#allocation8 + $0x1e8] sm:$0xff]
    %v550 = vld [vmem:[#allocation8 + $0x1f0] sm:$0xff]
    %v551 = vld [vmem:[#allocation8 + $0x1f8] sm:$0xff]
    %v552 = vld [vmem:[#allocation8 + $0x200] sm:$0xff]
    %v553 = vld [vmem:[#allocation8 + $0x208] sm:$0xff]
    %v554 = vld [vmem:[#allocation8 + $0x210] sm:$0xff]
    %v555 = vld [vmem:[#allocation8 + $0x218] sm:$0xff]
    %v556 = vld [vmem:[#allocation8 + $0x220] sm:$0xff]
    %v557 = vld [vmem:[#allocation8 + $0x228] sm:$0xff]
    %v558 = vld [vmem:[#allocation8 + $0x230] sm:$0xff]
    %v559 = vld [vmem:[#allocation8 + $0x238] sm:$0xff]
    %v560 = vld [vmem:[#allocation8 + $0x240] sm:$0xff]
    %v561 = vld [vmem:[#allocation8 + $0x248] sm:$0xff]
    %v562 = vld [vmem:[#allocation8 + $0x250] sm:$0xff]
    %v563 = vld [vmem:[#allocation8 + $0x258] sm:$0xff]
    %v564 = vld [vmem:[#allocation8 + $0x260] sm:$0xff]
    %v565 = vld [vmem:[#allocation8 + $0x268] sm:$0xff]
    %v566 = vld [vmem:[#allocation8 + $0x270] sm:$0xff]
    %v567 = vld [vmem:[#allocation8 + $0x278] sm:$0xff]
    %v568 = vld [vmem:[#allocation8 + $0x280] sm:$0xff]
    %v569 = vld [vmem:[#allocation8 + $0x288] sm:$0xff]
    %v570 = vld [vmem:[#allocation8 + $0x290] sm:$0xff]
    %v571 = vld [vmem:[#allocation8 + $0x298] sm:$0xff]
    %v572 = vld [vmem:[#allocation8 + $0x2a0] sm:$0xff]
    %v573 = vld [vmem:[#allocation8 + $0x2a8] sm:$0xff]
    %v574 = vld [vmem:[#allocation8 + $0x2b0] sm:$0xff]
    %v575 = vld [vmem:[#allocation8 + $0x2b8] sm:$0xff]
    %v576 = vld [vmem:[#allocation8 + $0x2c0] sm:$0xff]
    %v577 = vld [vmem:[#allocation8 + $0x2c8] sm:$0xff]
    %v578 = vld [vmem:[#allocation8 + $0x2d0] sm:$0xff]
    %v579 = vld [vmem:[#allocation8 + $0x2d8] sm:$0xff]
    %v580 = vld [vmem:[#allocation8 + $0x2e0] sm:$0xff]
    %v581 = vld [vmem:[#allocation8 + $0x2e8] sm:$0xff]
    %v582 = vld [vmem:[#allocation8 + $0x2f0] sm:$0xff]
    %v583 = vld [vmem:[#allocation8 + $0x2f8] sm:$0xff]
    %v680 = vunpack.c.l.b16 %v488
    %v681 = vunpack.c.h.b16 %v488
    %v682 = vunpack.c.l.b16 %v489
    %v683 = vunpack.c.h.b16 %v489
    %v684 = vunpack.c.l.b16 %v490
    %v685 = vunpack.c.h.b16 %v490
    %v686 = vunpack.c.l.b16 %v491
    %v687 = vunpack.c.h.b16 %v491
    %v688 = vunpack.c.l.b16 %v492
    %v689 = vunpack.c.h.b16 %v492
    %v690 = vunpack.c.l.b16 %v493
    %v691 = vunpack.c.h.b16 %v493
    %v692 = vunpack.c.l.b16 %v494
    %v693 = vunpack.c.h.b16 %v494
    %v694 = vunpack.c.l.b16 %v495
    %v695 = vunpack.c.h.b16 %v495
    %v696 = vunpack.c.l.b16 %v496
    %v697 = vunpack.c.h.b16 %v496
    %v698 = vunpack.c.l.b16 %v497
    %v699 = vunpack.c.h.b16 %v497
    %v700 = vunpack.c.l.b16 %v498
    %v701 = vunpack.c.h.b16 %v498
    %v702 = vunpack.c.l.b16 %v499
    %v703 = vunpack.c.h.b16 %v499
    %v704 = vunpack.c.l.b16 %v500
    %v705 = vunpack.c.h.b16 %v500
    %v706 = vunpack.c.l.b16 %v501
    %v707 = vunpack.c.h.b16 %v501
    %v708 = vunpack.c.l.b16 %v502
    %v709 = vunpack.c.h.b16 %v502
    %v710 = vunpack.c.l.b16 %v503
    %v711 = vunpack.c.h.b16 %v503
    %v712 = vunpack.c.l.b16 %v504
    %v713 = vunpack.c.h.b16 %v504
    %v714 = vunpack.c.l.b16 %v505
    %v715 = vunpack.c.h.b16 %v505
    %v716 = vunpack.c.l.b16 %v506
    %v717 = vunpack.c.h.b16 %v506
    %v718 = vunpack.c.l.b16 %v507
    %v719 = vunpack.c.h.b16 %v507
    %v720 = vunpack.c.l.b16 %v508
    %v721 = vunpack.c.h.b16 %v508
    %v722 = vunpack.c.l.b16 %v509
    %v723 = vunpack.c.h.b16 %v509
    %v724 = vunpack.c.l.b16 %v510
    %v725 = vunpack.c.h.b16 %v510
    %v726 = vunpack.c.l.b16 %v511
    %v727 = vunpack.c.h.b16 %v511
    %v728 = vunpack.c.l.b16 %v512
    %v729 = vunpack.c.h.b16 %v512
    %v730 = vunpack.c.l.b16 %v513
    %v731 = vunpack.c.h.b16 %v513
    %v732 = vunpack.c.l.b16 %v514
    %v733 = vunpack.c.h.b16 %v514
    %v734 = vunpack.c.l.b16 %v515
    %v735 = vunpack.c.h.b16 %v515
    %v736 = vunpack.c.l.b16 %v516
    %v737 = vunpack.c.h.b16 %v516
    %v738 = vunpack.c.l.b16 %v517
    %v739 = vunpack.c.h.b16 %v517
    %v740 = vunpack.c.l.b16 %v518
    %v741 = vunpack.c.h.b16 %v518
    %v742 = vunpack.c.l.b16 %v519
    %v743 = vunpack.c.h.b16 %v519
    %v744 = vunpack.c.l.b16 %v520
    %v745 = vunpack.c.h.b16 %v520
    %v746 = vunpack.c.l.b16 %v521
    %v747 = vunpack.c.h.b16 %v521
    %v748 = vunpack.c.l.b16 %v522
    %v749 = vunpack.c.h.b16 %v522
    %v750 = vunpack.c.l.b16 %v523
    %v751 = vunpack.c.h.b16 %v523
    %v752 = vunpack.c.l.b16 %v524
    %v753 = vunpack.c.h.b16 %v524
    %v754 = vunpack.c.l.b16 %v525
    %v755 = vunpack.c.h.b16 %v525
    %v756 = vunpack.c.l.b16 %v526
    %v757 = vunpack.c.h.b16 %v526
    %v758 = vunpack.c.l.b16 %v527
    %v759 = vunpack.c.h.b16 %v527
    %v760 = vunpack.c.l.b16 %v528
    %v761 = vunpack.c.h.b16 %v528
    %v762 = vunpack.c.l.b16 %v529
    %v763 = vunpack.c.h.b16 %v529
    %v764 = vunpack.c.l.b16 %v530
    %v765 = vunpack.c.h.b16 %v530
    %v766 = vunpack.c.l.b16 %v531
    %v767 = vunpack.c.h.b16 %v531
    %v768 = vunpack.c.l.b16 %v532
    %v769 = vunpack.c.h.b16 %v532
    %v770 = vunpack.c.l.b16 %v533
    %v771 = vunpack.c.h.b16 %v533
    %v772 = vunpack.c.l.b16 %v534
    %v773 = vunpack.c.h.b16 %v534
    %v774 = vunpack.c.l.b16 %v535
    %v775 = vunpack.c.h.b16 %v535
    %v776 = vunpack.c.l.b16 %v536
    %v777 = vunpack.c.h.b16 %v536
    %v778 = vunpack.c.l.b16 %v537
    %v779 = vunpack.c.h.b16 %v537
    %v780 = vunpack.c.l.b16 %v538
    %v781 = vunpack.c.h.b16 %v538
    %v782 = vunpack.c.l.b16 %v539
    %v783 = vunpack.c.h.b16 %v539
    %v784 = vunpack.c.l.b16 %v540
    %v785 = vunpack.c.h.b16 %v540
    %v786 = vunpack.c.l.b16 %v541
    %v787 = vunpack.c.h.b16 %v541
    %v788 = vunpack.c.l.b16 %v542
    %v789 = vunpack.c.h.b16 %v542
    %v790 = vunpack.c.l.b16 %v543
    %v791 = vunpack.c.h.b16 %v543
    %v792 = vunpack.c.l.b16 %v544
    %v793 = vunpack.c.h.b16 %v544
    %v794 = vunpack.c.l.b16 %v545
    %v795 = vunpack.c.h.b16 %v545
    %v796 = vunpack.c.l.b16 %v546
    %v797 = vunpack.c.h.b16 %v546
    %v798 = vunpack.c.l.b16 %v547
    %v799 = vunpack.c.h.b16 %v547
    %v800 = vunpack.c.l.b16 %v548
    %v801 = vunpack.c.h.b16 %v548
    %v802 = vunpack.c.l.b16 %v549
    %v803 = vunpack.c.h.b16 %v549
    %v804 = vunpack.c.l.b16 %v550
    %v805 = vunpack.c.h.b16 %v550
    %v806 = vunpack.c.l.b16 %v551
    %v807 = vunpack.c.h.b16 %v551
    %v808 = vunpack.c.l.b16 %v552
    %v809 = vunpack.c.h.b16 %v552
    %v810 = vunpack.c.l.b16 %v553
    %v811 = vunpack.c.h.b16 %v553
    %v812 = vunpack.c.l.b16 %v554
    %v813 = vunpack.c.h.b16 %v554
    %v814 = vunpack.c.l.b16 %v555
    %v815 = vunpack.c.h.b16 %v555
    %v816 = vunpack.c.l.b16 %v556
    %v817 = vunpack.c.h.b16 %v556
    %v818 = vunpack.c.l.b16 %v557
    %v819 = vunpack.c.h.b16 %v557
    %v820 = vunpack.c.l.b16 %v558
    %v821 = vunpack.c.h.b16 %v558
    %v822 = vunpack.c.l.b16 %v559
    %v823 = vunpack.c.h.b16 %v559
    %v824 = vunpack.c.l.b16 %v560
    %v825 = vunpack.c.h.b16 %v560
    %v826 = vunpack.c.l.b16 %v561
    %v827 = vunpack.c.h.b16 %v561
    %v828 = vunpack.c.l.b16 %v562
    %v829 = vunpack.c.h.b16 %v562
    %v830 = vunpack.c.l.b16 %v563
    %v831 = vunpack.c.h.b16 %v563
    %v832 = vunpack.c.l.b16 %v564
    %v833 = vunpack.c.h.b16 %v564
    %v834 = vunpack.c.l.b16 %v565
    %v835 = vunpack.c.h.b16 %v565
    %v836 = vunpack.c.l.b16 %v566
    %v837 = vunpack.c.h.b16 %v566
    %v838 = vunpack.c.l.b16 %v567
    %v839 = vunpack.c.h.b16 %v567
    %v840 = vunpack.c.l.b16 %v568
    %v841 = vunpack.c.h.b16 %v568
    %v842 = vunpack.c.l.b16 %v569
    %v843 = vunpack.c.h.b16 %v569
    %v844 = vunpack.c.l.b16 %v570
    %v845 = vunpack.c.h.b16 %v570
    %v846 = vunpack.c.l.b16 %v571
    %v847 = vunpack.c.h.b16 %v571
    %v848 = vunpack.c.l.b16 %v572
    %v849 = vunpack.c.h.b16 %v572
    %v850 = vunpack.c.l.b16 %v573
    %v851 = vunpack.c.h.b16 %v573
    %v852 = vunpack.c.l.b16 %v574
    %v853 = vunpack.c.h.b16 %v574
    %v854 = vunpack.c.l.b16 %v575
    %v855 = vunpack.c.h.b16 %v575
    %v856 = vunpack.c.l.b16 %v576
    %v857 = vunpack.c.h.b16 %v576
    %v858 = vunpack.c.l.b16 %v577
    %v859 = vunpack.c.h.b16 %v577
    %v860 = vunpack.c.l.b16 %v578
    %v861 = vunpack.c.h.b16 %v578
    %v862 = vunpack.c.l.b16 %v579
    %v863 = vunpack.c.h.b16 %v579
    %v864 = vunpack.c.l.b16 %v580
    %v865 = vunpack.c.h.b16 %v580
    %v866 = vunpack.c.l.b16 %v581
    %v867 = vunpack.c.h.b16 %v581
    %v868 = vunpack.c.l.b16 %v582
    %v869 = vunpack.c.h.b16 %v582
    %v870 = vunpack.c.l.b16 %v583
    %v871 = vunpack.c.h.b16 %v583
    %v872 = vpack.c.b16 %v686, %v680
    %v873 = vpack.c.b16 %v687, %v681
    %v874 = vpack.c.b16 %v688, %v682
    %v875 = vpack.c.b16 %v689, %v683
    %v876 = vpack.c.b16 %v690, %v684
    %v877 = vpack.c.b16 %v691, %v685
    %v878 = vpack.c.b16 %v698, %v692
    %v879 = vpack.c.b16 %v699, %v693
    %v880 = vpack.c.b16 %v700, %v694
    %v881 = vpack.c.b16 %v701, %v695
    %v882 = vpack.c.b16 %v702, %v696
    %v883 = vpack.c.b16 %v703, %v697
    %v884 = vpack.c.b16 %v710, %v704
    %v885 = vpack.c.b16 %v711, %v705
    %v886 = vpack.c.b16 %v712, %v706
    %v887 = vpack.c.b16 %v713, %v707
    %v888 = vpack.c.b16 %v714, %v708
    %v889 = vpack.c.b16 %v715, %v709
    %v890 = vpack.c.b16 %v722, %v716
    %v891 = vpack.c.b16 %v723, %v717
    %v892 = vpack.c.b16 %v724, %v718
    %v893 = vpack.c.b16 %v725, %v719
    %v894 = vpack.c.b16 %v726, %v720
    %v895 = vpack.c.b16 %v727, %v721
    %v896 = vpack.c.b16 %v734, %v728
    %v897 = vpack.c.b16 %v735, %v729
    %v898 = vpack.c.b16 %v736, %v730
    %v899 = vpack.c.b16 %v737, %v731
    %v900 = vpack.c.b16 %v738, %v732
    %v901 = vpack.c.b16 %v739, %v733
    %v902 = vpack.c.b16 %v746, %v740
    %v903 = vpack.c.b16 %v747, %v741
    %v904 = vpack.c.b16 %v748, %v742
    %v905 = vpack.c.b16 %v749, %v743
    %v906 = vpack.c.b16 %v750, %v744
    %v907 = vpack.c.b16 %v751, %v745
    %v908 = vpack.c.b16 %v758, %v752
    %v909 = vpack.c.b16 %v759, %v753
    %v910 = vpack.c.b16 %v760, %v754
    %v911 = vpack.c.b16 %v761, %v755
    %v912 = vpack.c.b16 %v762, %v756
    %v913 = vpack.c.b16 %v763, %v757
    %v914 = vpack.c.b16 %v770, %v764
    %v915 = vpack.c.b16 %v771, %v765
    %v916 = vpack.c.b16 %v772, %v766
    %v917 = vpack.c.b16 %v773, %v767
    %v918 = vpack.c.b16 %v774, %v768
    %v919 = vpack.c.b16 %v775, %v769
    %v920 = vpack.c.b16 %v782, %v776
    %v921 = vpack.c.b16 %v783, %v777
    %v922 = vpack.c.b16 %v784, %v778
    %v923 = vpack.c.b16 %v785, %v779
    %v924 = vpack.c.b16 %v786, %v780
    %v925 = vpack.c.b16 %v787, %v781
    %v926 = vpack.c.b16 %v794, %v788
    %v927 = vpack.c.b16 %v795, %v789
    %v928 = vpack.c.b16 %v796, %v790
    %v929 = vpack.c.b16 %v797, %v791
    %v930 = vpack.c.b16 %v798, %v792
    %v931 = vpack.c.b16 %v799, %v793
    %v932 = vpack.c.b16 %v806, %v800
    %v933 = vpack.c.b16 %v807, %v801
    %v934 = vpack.c.b16 %v808, %v802
    %v935 = vpack.c.b16 %v809, %v803
    %v936 = vpack.c.b16 %v810, %v804
    %v937 = vpack.c.b16 %v811, %v805
    %v938 = vpack.c.b16 %v818, %v812
    %v939 = vpack.c.b16 %v819, %v813
    %v940 = vpack.c.b16 %v820, %v814
    %v941 = vpack.c.b16 %v821, %v815
    %v942 = vpack.c.b16 %v822, %v816
    %v943 = vpack.c.b16 %v823, %v817
    %v944 = vpack.c.b16 %v830, %v824
    %v945 = vpack.c.b16 %v831, %v825
    %v946 = vpack.c.b16 %v832, %v826
    %v947 = vpack.c.b16 %v833, %v827
    %v948 = vpack.c.b16 %v834, %v828
    %v949 = vpack.c.b16 %v835, %v829
    %v950 = vpack.c.b16 %v842, %v836
    %v951 = vpack.c.b16 %v843, %v837
    %v952 = vpack.c.b16 %v844, %v838
    %v953 = vpack.c.b16 %v845, %v839
    %v954 = vpack.c.b16 %v846, %v840
    %v955 = vpack.c.b16 %v847, %v841
    %v956 = vpack.c.b16 %v854, %v848
    %v957 = vpack.c.b16 %v855, %v849
    %v958 = vpack.c.b16 %v856, %v850
    %v959 = vpack.c.b16 %v857, %v851
    %v960 = vpack.c.b16 %v858, %v852
    %v961 = vpack.c.b16 %v859, %v853
    %v962 = vpack.c.b16 %v866, %v860
    %v963 = vpack.c.b16 %v867, %v861
    %v964 = vpack.c.b16 %v868, %v862
    %v965 = vpack.c.b16 %v869, %v863
    %v966 = vpack.c.b16 %v870, %v864
    %v967 = vpack.c.b16 %v871, %v865
    %1064 = vmatprep.subr.bf16.mxu0 %v873
    %1065 = vmatpush1.bf16.msra.mxu0 %v872
    %1066 = vmatprep.subr.bf16.mxu0 %v879
    %1067 = vmatpush1.bf16.msra.mxu0 %v878
    %1068 = vmatprep.subr.bf16.mxu0 %v885
    %1069 = vmatpush1.bf16.msra.mxu0 %v884
    %1070 = vmatprep.subr.bf16.mxu0 %v891
    %1071 = vmatpush1.bf16.msra.mxu0 %v890
    %1072 = vmatprep.subr.bf16.mxu0 %v897
    %1073 = vmatpush1.bf16.msra.mxu0 %v896
    %1074 = vmatprep.subr.bf16.mxu0 %v903
    %1075 = vmatpush1.bf16.msra.mxu0 %v902
    %1076 = vmatprep.subr.bf16.mxu0 %v909
    %1077 = vmatpush1.bf16.msra.mxu0 %v908
    %1078 = vmatprep.subr.bf16.mxu0 %v915
    %1079 = vmatpush1.bf16.msra.mxu0 %v914
    %1080 = vmatprep.subr.bf16.mxu0 %v921
    %1081 = vmatpush1.bf16.msra.mxu0 %v920
    %1082 = vmatprep.subr.bf16.mxu0 %v927
    %1083 = vmatpush1.bf16.msra.mxu0 %v926
    %1084 = vmatprep.subr.bf16.mxu0 %v933
    %1085 = vmatpush1.bf16.msra.mxu0 %v932
    %1086 = vmatprep.subr.bf16.mxu0 %v939
    %1087 = vmatpush1.bf16.msra.mxu0 %v938
    %1088 = vmatprep.subr.bf16.mxu0 %v945
    %1089 = vmatpush1.bf16.msra.mxu0 %v944
    %1090 = vmatprep.subr.bf16.mxu0 %v951
    %1091 = vmatpush1.bf16.msra.mxu0 %v950
    %1092 = vmatprep.subr.bf16.mxu0 %v957
    %1093 = vmatpush1.bf16.msra.mxu0 %v956
    %1094 = vmatprep.subr.bf16.mxu0 %v963
    %1095 = vmatpush1.bf16.msra.mxu0 %v962
    %1096 = vmatprep.mubr.bf16.mxu0 0
    %1097 = vmatmul.mubr.bf16.gmra.mrb[0].mxu0 0
    %v1098 = vpop.f32.mrb[0].mxu0
    %v1099 = vadd.f32 0.0, %v1098
    %v1100 = vpop.f32.mrb[0].mxu0
    %v1101 = vadd.f32 0.0, %v1100
    %v1102 = vpop.f32.mrb[0].mxu0
    %v1103 = vpop.f32.mrb[0].mxu0
    %1104 = vdwg.mxu0
    %1105 = vmatprep.subr.bf16.mxu0 %v875
    %1106 = vmatpush1.bf16.msra.mxu0 %v874
    %1107 = vmatprep.subr.bf16.mxu0 %v881
    %1108 = vmatpush1.bf16.msra.mxu0 %v880
    %1109 = vmatprep.subr.bf16.mxu0 %v887
    %1110 = vmatpush1.bf16.msra.mxu0 %v886
    %1111 = vmatprep.subr.bf16.mxu0 %v893
    %1112 = vmatpush1.bf16.msra.mxu0 %v892
    %1113 = vmatprep.subr.bf16.mxu0 %v899
    %1114 = vmatpush1.bf16.msra.mxu0 %v898
    %1115 = vmatprep.subr.bf16.mxu0 %v905
    %1116 = vmatpush1.bf16.msra.mxu0 %v904
    %1117 = vmatprep.subr.bf16.mxu0 %v911
    %1118 = vmatpush1.bf16.msra.mxu0 %v910
    %1119 = vmatprep.subr.bf16.mxu0 %v917
    %1120 = vmatpush1.bf16.msra.mxu0 %v916
    %1121 = vmatprep.subr.bf16.mxu0 %v923
    %1122 = vmatpush1.bf16.msra.mxu0 %v922
    %1123 = vmatprep.subr.bf16.mxu0 %v929
    %1124 = vmatpush1.bf16.msra.mxu0 %v928
    %1125 = vmatprep.subr.bf16.mxu0 %v935
    %1126 = vmatpush1.bf16.msra.mxu0 %v934
    %1127 = vmatprep.subr.bf16.mxu0 %v941
    %1128 = vmatpush1.bf16.msra.mxu0 %v940
    %1129 = vmatprep.subr.bf16.mxu0 %v947
    %1130 = vmatpush1.bf16.msra.mxu0 %v946
    %1131 = vmatprep.subr.bf16.mxu0 %v953
    %1132 = vmatpush1.bf16.msra.mxu0 %v952
    %1133 = vmatprep.subr.bf16.mxu0 %v959
    %1134 = vmatpush1.bf16.msra.mxu0 %v958
    %1135 = vmatprep.subr.bf16.mxu0 %v965
    %1136 = vmatpush1.bf16.msra.mxu0 %v964
    %1137 = vmatprep.mubr.bf16.mxu0 0
    %1138 = vmatmul.mubr.bf16.gmra.mrb[0].mxu0 0
    %v1139 = vpop.f32.mrb[0].mxu0
    %v1140 = vadd.f32 0.0, %v1139
    %v1141 = vpop.f32.mrb[0].mxu0
    %v1142 = vadd.f32 0.0, %v1141
    %v1143 = vpop.f32.mrb[0].mxu0
    %v1144 = vpop.f32.mrb[0].mxu0
    %1145 = vdwg.mxu0
    %1146 = vmatprep.subr.bf16.mxu0 %v877
    %1147 = vmatpush1.bf16.msra.mxu0 %v876
    %1148 = vmatprep.subr.bf16.mxu0 %v883
    %1149 = vmatpush1.bf16.msra.mxu0 %v882
    %1150 = vmatprep.subr.bf16.mxu0 %v889
    %1151 = vmatpush1.bf16.msra.mxu0 %v888
    %1152 = vmatprep.subr.bf16.mxu0 %v895
    %1153 = vmatpush1.bf16.msra.mxu0 %v894
    %1154 = vmatprep.subr.bf16.mxu0 %v901
    %1155 = vmatpush1.bf16.msra.mxu0 %v900
    %1156 = vmatprep.subr.bf16.mxu0 %v907
    %1157 = vmatpush1.bf16.msra.mxu0 %v906
    %1158 = vmatprep.subr.bf16.mxu0 %v913
    %1159 = vmatpush1.bf16.msra.mxu0 %v912
    %1160 = vmatprep.subr.bf16.mxu0 %v919
    %1161 = vmatpush1.bf16.msra.mxu0 %v918
    %1162 = vmatprep.subr.bf16.mxu0 %v925
    %1163 = vmatpush1.bf16.msra.mxu0 %v924
    %1164 = vmatprep.subr.bf16.mxu0 %v931
    %1165 = vmatpush1.bf16.msra.mxu0 %v930
    %1166 = vmatprep.subr.bf16.mxu0 %v937
    %1167 = vmatpush1.bf16.msra.mxu0 %v936
    %1168 = vmatprep.subr.bf16.mxu0 %v943
    %1169 = vmatpush1.bf16.msra.mxu0 %v942
    %1170 = vmatprep.subr.bf16.mxu0 %v949
    %1171 = vmatpush1.bf16.msra.mxu0 %v948
    %1172 = vmatprep.subr.bf16.mxu0 %v955
    %1173 = vmatpush1.bf16.msra.mxu0 %v954
    %1174 = vmatprep.subr.bf16.mxu0 %v961
    %1175 = vmatpush1.bf16.msra.mxu0 %v960
    %1176 = vmatprep.subr.bf16.mxu0 %v967
    %1177 = vmatpush1.bf16.msra.mxu0 %v966
    %1178 = vmatprep.mubr.bf16.mxu0 0
    %1179 = vmatmul.mubr.bf16.gmra.mrb[0].mxu0 0
    %v1180 = vpop.f32.mrb[0].mxu0
    %v1181 = vadd.f32 0.0, %v1180
    %v1182 = vpop.f32.mrb[0].mxu0
    %v1183 = vadd.f32 0.0, %v1182
    %v1184 = vpop.f32.mrb[0].mxu0
    %v1185 = vpop.f32.mrb[0].mxu0
    %1186 = vdwg.mxu0
    %v1187 = vadd.f32 %v480, %v1099
    %v1188 = vadd.f32 %v481, %v1101
    %v1189 = vadd.f32 %v482, %v1140
    %v1190 = vadd.f32 %v483, %v1142
    %v1191 = vxor.u32 %v1187, 2147483648
    %v1192 = vxor.u32 %v1188, 2147483648
    %v1193 = vxor.u32 %v1189, 2147483648
    %v1194 = vxor.u32 %v1190, 2147483648
    %v1195 = vmul.f32 %v1191, 1.442695
    %v1196 = vpow.pop %v1195
    %v1197 = vmul.f32 %v1192, 1.442695
    %v1198 = vpow.pop %v1197
    %v1199 = vmul.f32 %v1193, 1.442695
    %v1200 = vpow.pop %v1199
    %v1201 = vmul.f32 %v1194, 1.442695
    %v1202 = vpow.pop %v1201
    %v1203 = vadd.f32 %v1196, 1.0
    %v1204 = vadd.f32 %v1198, 1.0
    %v1205 = vadd.f32 %v1200, 1.0
    %v1206 = vadd.f32 %v1202, 1.0
    %v1207 = vrcp.pop %v1203
    %v1208 = vmul.f32 1.0, %v1207
    %v1209 = vrcp.pop %v1204
    %v1210 = vmul.f32 1.0, %v1209
    %v1211 = vrcp.pop %v1205
    %v1212 = vmul.f32 1.0, %v1211
    %v1213 = vrcp.pop %v1206
    %v1214 = vmul.f32 1.0, %v1213
    %v1216 = vlaneseq
    %v1217 = vshrl.u32 %v1216, 7
    %v1218 = vsub.s32 0, %v1217
    %v1219 = vrot.slane %v479, %v1218
    %v1220 = vlaneseq
    %v1221 = vshrl.u32 %v1220, 7
    %v1222 = vsub.s32 1, %v1221
    %v1223 = vrot.slane %v479, %v1222
    %v1226 = vadd.f32 %v1181, %v1219
    %v1227 = vadd.f32 %v1183, %v1223
    %v1228 = vmul.f32 %v1208, %v1226
    %v1229 = vmul.f32 %v1210, %v1227
    %v1230 = vadd.f32 %v484, %v1228
    %v1231 = vadd.f32 %v485, %v1229
    %v1232 = vtanh.pop %v1230
    %v1233 = vtanh.pop %v1231
    %v1234 = vsub.f32 0.0, %v1232
    %v1235 = vsub.f32 0.0, %v1233
    %v1236 = vmul.f32 %v1212, %v1234
    %v1237 = vmul.f32 %v1214, %v1235
    %v1238 = vadd.f32 %v1232, %v1236
    %v1239 = vadd.f32 %v1233, %v1237
    %vm1240 = vcmp.ne.f32.partialorder %v486, 0.0
    %vm1241 = vcmp.ne.f32.partialorder %v487, 0.0
    %v1242 = vsel %vm1240, %v1238, 0.0
    %v1243 = vsel %vm1241, %v1239, 0.0
    %v1244 = vld [vmem:[#allocation2] sm:$0xf0]
    %v1245 = vld [vmem:[#allocation2 + $0x8] sm:$0xf0]
    %v1246 = vld [vmem:[#allocation2 + $0x10] sm:$0xf0]
    %v1247 = vld [vmem:[#allocation2 + $0x18] sm:$0xf0]
    %v1248 = vld [vmem:[#allocation2 + $0x20] sm:$0xf0]
    %v1249 = vld [vmem:[#allocation2 + $0x28] sm:$0xf0]
    %v1250 = vld [vmem:[#allocation9] sm:$0xf0]
    %v1251 = vld [vmem:[#allocation9 + $0x8] sm:$0xf0]
    %v1252 = vpack.c.bf16 %v1242, %v1242
    %v1253 = vpack.c.bf16 %v1243, %v1243
    %1254 = vmatprep.subr.bf16.mxu0 %v873
    %1255 = vmatpush1.bf16.msra.mxu0 %v872
    %1256 = vmatprep.subr.bf16.mxu0 %v879
    %1257 = vmatpush1.bf16.msra.mxu0 %v878
    %1258 = vmatprep.subr.bf16.mxu0 %v885
    %1259 = vmatpush1.bf16.msra.mxu0 %v884
    %1260 = vmatprep.subr.bf16.mxu0 %v891
    %1261 = vmatpush1.bf16.msra.mxu0 %v890
    %1262 = vmatprep.subr.bf16.mxu0 %v897
    %1263 = vmatpush1.bf16.msra.mxu0 %v896
    %1264 = vmatprep.subr.bf16.mxu0 %v903
    %1265 = vmatpush1.bf16.msra.mxu0 %v902
    %1266 = vmatprep.subr.bf16.mxu0 %v909
    %1267 = vmatpush1.bf16.msra.mxu0 %v908
    %1268 = vmatprep.subr.bf16.mxu0 %v915
    %1269 = vmatpush1.bf16.msra.mxu0 %v914
    %1270 = vmatprep.subr.bf16.mxu0 %v921
    %1271 = vmatpush1.bf16.msra.mxu0 %v920
    %1272 = vmatprep.subr.bf16.mxu0 %v927
    %1273 = vmatpush1.bf16.msra.mxu0 %v926
    %1274 = vmatprep.subr.bf16.mxu0 %v933
    %1275 = vmatpush1.bf16.msra.mxu0 %v932
    %1276 = vmatprep.subr.bf16.mxu0 %v939
    %1277 = vmatpush1.bf16.msra.mxu0 %v938
    %1278 = vmatprep.subr.bf16.mxu0 %v945
    %1279 = vmatpush1.bf16.msra.mxu0 %v944
    %1280 = vmatprep.subr.bf16.mxu0 %v951
    %1281 = vmatpush1.bf16.msra.mxu0 %v950
    %1282 = vmatprep.subr.bf16.mxu0 %v957
    %1283 = vmatpush1.bf16.msra.mxu0 %v956
    %1284 = vmatprep.subr.bf16.mxu0 %v963
    %1285 = vmatpush1.bf16.msra.mxu0 %v962
    %1286 = vmatprep.mubr.bf16.mxu0 %v1253
    %1287 = vmatmul.mubr.bf16.gmra.mrb[0].mxu0 %v1252
    %v1288 = vpop.f32.mrb[0].mxu0
    %v1289 = vadd.f32 0.0, %v1288
    %v1290 = vpop.f32.mrb[0].mxu0
    %v1291 = vadd.f32 0.0, %v1290
    %v1292 = vpop.f32.mrb[0].mxu0
    %v1293 = vpop.f32.mrb[0].mxu0
    %1294 = vdwg.mxu0
    %1295 = vmatprep.subr.bf16.mxu0 %v875
    %1296 = vmatpush1.bf16.msra.mxu0 %v874
    %1297 = vmatprep.subr.bf16.mxu0 %v881
    %1298 = vmatpush1.bf16.msra.mxu0 %v880
    %1299 = vmatprep.subr.bf16.mxu0 %v887
    %1300 = vmatpush1.bf16.msra.mxu0 %v886
    %1301 = vmatprep.subr.bf16.mxu0 %v893
    %1302 = vmatpush1.bf16.msra.mxu0 %v892
    %1303 = vmatprep.subr.bf16.mxu0 %v899
    %1304 = vmatpush1.bf16.msra.mxu0 %v898
    %1305 = vmatprep.subr.bf16.mxu0 %v905
    %1306 = vmatpush1.bf16.msra.mxu0 %v904
    %1307 = vmatprep.subr.bf16.mxu0 %v911
    %1308 = vmatpush1.bf16.msra.mxu0 %v910
    %1309 = vmatprep.subr.bf16.mxu0 %v917
    %1310 = vmatpush1.bf16.msra.mxu0 %v916
    %1311 = vmatprep.subr.bf16.mxu0 %v923
    %1312 = vmatpush1.bf16.msra.mxu0 %v922
    %1313 = vmatprep.subr.bf16.mxu0 %v929
    %1314 = vmatpush1.bf16.msra.mxu0 %v928
    %1315 = vmatprep.subr.bf16.mxu0 %v935
    %1316 = vmatpush1.bf16.msra.mxu0 %v934
    %1317 = vmatprep.subr.bf16.mxu0 %v941
    %1318 = vmatpush1.bf16.msra.mxu0 %v940
    %1319 = vmatprep.subr.bf16.mxu0 %v947
    %1320 = vmatpush1.bf16.msra.mxu0 %v946
    %1321 = vmatprep.subr.bf16.mxu0 %v953
    %1322 = vmatpush1.bf16.msra.mxu0 %v952
    %1323 = vmatprep.subr.bf16.mxu0 %v959
    %1324 = vmatpush1.bf16.msra.mxu0 %v958
    %1325 = vmatprep.subr.bf16.mxu0 %v965
    %1326 = vmatpush1.bf16.msra.mxu0 %v964
    %1327 = vmatprep.mubr.bf16.mxu0 %v1253
    %1328 = vmatmul.mubr.bf16.gmra.mrb[0].mxu0 %v1252
    %v1329 = vpop.f32.mrb[0].mxu0
    %v1330 = vadd.f32 0.0, %v1329
    %v1331 = vpop.f32.mrb[0].mxu0
    %v1332 = vadd.f32 0.0, %v1331
    %v1333 = vpop.f32.mrb[0].mxu0
    %v1334 = vpop.f32.mrb[0].mxu0
    %1335 = vdwg.mxu0
    %1336 = vmatprep.subr.bf16.mxu0 %v877
    %1337 = vmatpush1.bf16.msra.mxu0 %v876
    %1338 = vmatprep.subr.bf16.mxu0 %v883
    %1339 = vmatpush1.bf16.msra.mxu0 %v882
    %1340 = vmatprep.subr.bf16.mxu0 %v889
    %1341 = vmatpush1.bf16.msra.mxu0 %v888
    %1342 = vmatprep.subr.bf16.mxu0 %v895
    %1343 = vmatpush1.bf16.msra.mxu0 %v894
    %1344 = vmatprep.subr.bf16.mxu0 %v901
    %1345 = vmatpush1.bf16.msra.mxu0 %v900
    %1346 = vmatprep.subr.bf16.mxu0 %v907
    %1347 = vmatpush1.bf16.msra.mxu0 %v906
    %1348 = vmatprep.subr.bf16.mxu0 %v913
    %1349 = vmatpush1.bf16.msra.mxu0 %v912
    %1350 = vmatprep.subr.bf16.mxu0 %v919
    %1351 = vmatpush1.bf16.msra.mxu0 %v918
    %1352 = vmatprep.subr.bf16.mxu0 %v925
    %1353 = vmatpush1.bf16.msra.mxu0 %v924
    %1354 = vmatprep.subr.bf16.mxu0 %v931
    %1355 = vmatpush1.bf16.msra.mxu0 %v930
    %1356 = vmatprep.subr.bf16.mxu0 %v937
    %1357 = vmatpush1.bf16.msra.mxu0 %v936
    %1358 = vmatprep.subr.bf16.mxu0 %v943
    %1359 = vmatpush1.bf16.msra.mxu0 %v942
    %1360 = vmatprep.subr.bf16.mxu0 %v949
    %1361 = vmatpush1.bf16.msra.mxu0 %v948
    %1362 = vmatprep.subr.bf16.mxu0 %v955
    %1363 = vmatpush1.bf16.msra.mxu0 %v954
    %1364 = vmatprep.subr.bf16.mxu0 %v961
    %1365 = vmatpush1.bf16.msra.mxu0 %v960
    %1366 = vmatprep.subr.bf16.mxu0 %v967
    %1367 = vmatpush1.bf16.msra.mxu0 %v966
    %1368 = vmatprep.mubr.bf16.mxu0 %v1253
    %1369 = vmatmul.mubr.bf16.gmra.mrb[0].mxu0 %v1252
    %v1370 = vpop.f32.mrb[0].mxu0
    %v1371 = vadd.f32 0.0, %v1370
    %v1372 = vpop.f32.mrb[0].mxu0
    %v1373 = vadd.f32 0.0, %v1372
    %v1374 = vpop.f32.mrb[0].mxu0
    %v1375 = vpop.f32.mrb[0].mxu0
    %1376 = vdwg.mxu0
    %v1381 = vrot.slane %v1289, 4
    %v1382 = vrot.slane %v1291, 4
    %v1383 = vrot.slane %v1330, 4
    %v1384 = vrot.slane %v1332, 4
    %v1389 = vadd.f32 %v1244, %v1381
    %v1390 = vadd.f32 %v1245, %v1382
    %v1391 = vadd.f32 %v1246, %v1383
    %v1392 = vadd.f32 %v1247, %v1384
    %v1393 = vxor.u32 %v1389, 2147483648
    %v1394 = vxor.u32 %v1390, 2147483648
    %v1395 = vxor.u32 %v1391, 2147483648
    %v1396 = vxor.u32 %v1392, 2147483648
    %v1397 = vmul.f32 %v1393, 1.442695
    %v1398 = vpow.pop %v1397
    %v1399 = vmul.f32 %v1394, 1.442695
    %v1400 = vpow.pop %v1399
    %v1401 = vmul.f32 %v1395, 1.442695
    %v1402 = vpow.pop %v1401
    %v1403 = vmul.f32 %v1396, 1.442695
    %v1404 = vpow.pop %v1403
    %v1405 = vadd.f32 %v1398, 1.0
    %v1406 = vadd.f32 %v1400, 1.0
    %v1407 = vadd.f32 %v1402, 1.0
    %v1408 = vadd.f32 %v1404, 1.0
    %v1409 = vrcp.pop %v1405
    %v1410 = vmul.f32 1.0, %v1409
    %v1411 = vrcp.pop %v1406
    %v1412 = vmul.f32 1.0, %v1411
    %v1413 = vrcp.pop %v1407
    %v1414 = vmul.f32 1.0, %v1413
    %v1415 = vrcp.pop %v1408
    %v1416 = vmul.f32 1.0, %v1415
    %v1417 = vadd.f32 %v1371, %v1219
    %v1418 = vadd.f32 %v1373, %v1223
    %v1421 = vrot.slane %v1417, 4
    %v1422 = vrot.slane %v1418, 4
    %v1425 = vmul.f32 %v1410, %v1421
    %v1426 = vmul.f32 %v1412, %v1422
    %v1427 = vadd.f32 %v1248, %v1425
    %v1428 = vadd.f32 %v1249, %v1426
    %v1429 = vtanh.pop %v1427
    %v1430 = vtanh.pop %v1428
    %v1433 = vrot.slane %v1429, 4
    %v1434 = vrot.slane %v1430, 4
    %v1437 = vsub.f32 %v1242, %v1433
    %v1438 = vsub.f32 %v1243, %v1434
    %v1441 = vrot.slane %v1437, 4
    %v1442 = vrot.slane %v1438, 4
    %v1445 = vmul.f32 %v1414, %v1441
    %v1446 = vmul.f32 %v1416, %v1442
    %v1447 = vadd.f32 %v1429, %v1445
    %v1448 = vadd.f32 %v1430, %v1446
    %vm1449 = vcmp.ne.f32.partialorder %v1250, 0.0
    %vm1450 = vcmp.ne.f32.partialorder %v1251, 0.0
    %v1453 = vrot.slane %v1242, 4
    %v1454 = vrot.slane %v1243, 4
    %v1457 = vsel %vm1449, %v1447, %v1453
    %v1458 = vsel %vm1450, %v1448, %v1454
    %v1459 = vld [vmem:[#allocation2 + $0x30] sm:$0xf]
    %v1460 = vld [vmem:[#allocation2 + $0x38] sm:$0xf]
    %v1461 = vld [vmem:[#allocation2 + $0x40] sm:$0xf]
    %v1462 = vld [vmem:[#allocation2 + $0x48] sm:$0xf]
    %v1463 = vld [vmem:[#allocation2 + $0x50] sm:$0xf]
    %v1464 = vld [vmem:[#allocation2 + $0x58] sm:$0xf]
    %v1465 = vld [vmem:[#allocation9 + $0x10] sm:$0xf]
    %v1466 = vld [vmem:[#allocation9 + $0x18] sm:$0xf]
    %v1467 = vpack.c.bf16 %v1457, %v1457
    %v1468 = vpack.c.bf16 %v1458, %v1458
    %v1471 = vrot.slane %v1467, 2
    %v1472 = vrot.slane %v1468, 2
    %1475 = vmatprep.subr.bf16.mxu0 %v873
    %1476 = vmatpush1.bf16.msra.mxu0 %v872
    %1477 = vmatprep.subr.bf16.mxu0 %v879
    %1478 = vmatpush1.bf16.msra.mxu0 %v878
    %1479 = vmatprep.subr.bf16.mxu0 %v885
    %1480 = vmatpush1.bf16.msra.mxu0 %v884
    %1481 = vmatprep.subr.bf16.mxu0 %v891
    %1482 = vmatpush1.bf16.msra.mxu0 %v890
    %1483 = vmatprep.subr.bf16.mxu0 %v897
    %1484 = vmatpush1.bf16.msra.mxu0 %v896
    %1485 = vmatprep.subr.bf16.mxu0 %v903
    %1486 = vmatpush1.bf16.msra.mxu0 %v902
    %1487 = vmatprep.subr.bf16.mxu0 %v909
    %1488 = vmatpush1.bf16.msra.mxu0 %v908
    %1489 = vmatprep.subr.bf16.mxu0 %v915
    %1490 = vmatpush1.bf16.msra.mxu0 %v914
    %1491 = vmatprep.subr.bf16.mxu0 %v921
    %1492 = vmatpush1.bf16.msra.mxu0 %v920
    %1493 = vmatprep.subr.bf16.mxu0 %v927
    %1494 = vmatpush1.bf16.msra.mxu0 %v926
    %1495 = vmatprep.subr.bf16.mxu0 %v933
    %1496 = vmatpush1.bf16.msra.mxu0 %v932
    %1497 = vmatprep.subr.bf16.mxu0 %v939
    %1498 = vmatpush1.bf16.msra.mxu0 %v938
    %1499 = vmatprep.subr.bf16.mxu0 %v945
    %1500 = vmatpush1.bf16.msra.mxu0 %v944
    %1501 = vmatprep.subr.bf16.mxu0 %v951
    %1502 = vmatpush1.bf16.msra.mxu0 %v950
    %1503 = vmatprep.subr.bf16.mxu0 %v957
    %1504 = vmatpush1.bf16.msra.mxu0 %v956
    %1505 = vmatprep.subr.bf16.mxu0 %v963
    %1506 = vmatpush1.bf16.msra.mxu0 %v962
    %1507 = vmatprep.mubr.bf16.mxu0 %v1472
    %1508 = vmatmul.mubr.bf16.gmra.mrb[0].mxu0 %v1471
    %v1509 = vpop.f32.mrb[0].mxu0
    %v1510 = vadd.f32 0.0, %v1509
    %v1511 = vpop.f32.mrb[0].mxu0
    %v1512 = vadd.f32 0.0, %v1511
    %v1513 = vpop.f32.mrb[0].mxu0
    %v1514 = vpop.f32.mrb[0].mxu0
    %1515 = vdwg.mxu0
    %1516 = vmatprep.subr.bf16.mxu0 %v875
    %1517 = vmatpush1.bf16.msra.mxu0 %v874
    %1518 = vmatprep.subr.bf16.mxu0 %v881
    %1519 = vmatpush1.bf16.msra.mxu0 %v880
    %1520 = vmatprep.subr.bf16.mxu0 %v887
    %1521 = vmatpush1.bf16.msra.mxu0 %v886
    %1522 = vmatprep.subr.bf16.mxu0 %v893
    %1523 = vmatpush1.bf16.msra.mxu0 %v892
    %1524 = vmatprep.subr.bf16.mxu0 %v899
    %1525 = vmatpush1.bf16.msra.mxu0 %v898
    %1526 = vmatprep.subr.bf16.mxu0 %v905
    %1527 = vmatpush1.bf16.msra.mxu0 %v904
    %1528 = vmatprep.subr.bf16.mxu0 %v911
    %1529 = vmatpush1.bf16.msra.mxu0 %v910
    %1530 = vmatprep.subr.bf16.mxu0 %v917
    %1531 = vmatpush1.bf16.msra.mxu0 %v916
    %1532 = vmatprep.subr.bf16.mxu0 %v923
    %1533 = vmatpush1.bf16.msra.mxu0 %v922
    %1534 = vmatprep.subr.bf16.mxu0 %v929
    %1535 = vmatpush1.bf16.msra.mxu0 %v928
    %1536 = vmatprep.subr.bf16.mxu0 %v935
    %1537 = vmatpush1.bf16.msra.mxu0 %v934
    %1538 = vmatprep.subr.bf16.mxu0 %v941
    %1539 = vmatpush1.bf16.msra.mxu0 %v940
    %1540 = vmatprep.subr.bf16.mxu0 %v947
    %1541 = vmatpush1.bf16.msra.mxu0 %v946
    %1542 = vmatprep.subr.bf16.mxu0 %v953
    %1543 = vmatpush1.bf16.msra.mxu0 %v952
    %1544 = vmatprep.subr.bf16.mxu0 %v959
    %1545 = vmatpush1.bf16.msra.mxu0 %v958
    %1546 = vmatprep.subr.bf16.mxu0 %v965
    %1547 = vmatpush1.bf16.msra.mxu0 %v964
    %1548 = vmatprep.mubr.bf16.mxu0 %v1472
    %1549 = vmatmul.mubr.bf16.gmra.mrb[0].mxu0 %v1471
    %v1550 = vpop.f32.mrb[0].mxu0
    %v1551 = vadd.f32 0.0, %v1550
    %v1552 = vpop.f32.mrb[0].mxu0
    %v1553 = vadd.f32 0.0, %v1552
    %v1554 = vpop.f32.mrb[0].mxu0
    %v1555 = vpop.f32.mrb[0].mxu0
    %1556 = vdwg.mxu0
    %1557 = vmatprep.subr.bf16.mxu0 %v877
    %1558 = vmatpush1.bf16.msra.mxu0 %v876
    %1559 = vmatprep.subr.bf16.mxu0 %v883
    %1560 = vmatpush1.bf16.msra.mxu0 %v882
    %1561 = vmatprep.subr.bf16.mxu0 %v889
    %1562 = vmatpush1.bf16.msra.mxu0 %v888
    %1563 = vmatprep.subr.bf16.mxu0 %v895
    %1564 = vmatpush1.bf16.msra.mxu0 %v894
    %1565 = vmatprep.subr.bf16.mxu0 %v901
    %1566 = vmatpush1.bf16.msra.mxu0 %v900
    %1567 = vmatprep.subr.bf16.mxu0 %v907
    %1568 = vmatpush1.bf16.msra.mxu0 %v906
    %1569 = vmatprep.subr.bf16.mxu0 %v913
    %1570 = vmatpush1.bf16.msra.mxu0 %v912
    %1571 = vmatprep.subr.bf16.mxu0 %v919
    %1572 = vmatpush1.bf16.msra.mxu0 %v918
    %1573 = vmatprep.subr.bf16.mxu0 %v925
    %1574 = vmatpush1.bf16.msra.mxu0 %v924
    %1575 = vmatprep.subr.bf16.mxu0 %v931
    %1576 = vmatpush1.bf16.msra.mxu0 %v930
    %1577 = vmatprep.subr.bf16.mxu0 %v937
    %1578 = vmatpush1.bf16.msra.mxu0 %v936
    %1579 = vmatprep.subr.bf16.mxu0 %v943
    %1580 = vmatpush1.bf16.msra.mxu0 %v942
    %1581 = vmatprep.subr.bf16.mxu0 %v949
    %1582 = vmatpush1.bf16.msra.mxu0 %v948
    %1583 = vmatprep.subr.bf16.mxu0 %v955
    %1584 = vmatpush1.bf16.msra.mxu0 %v954
    %1585 = vmatprep.subr.bf16.mxu0 %v961
    %1586 = vmatpush1.bf16.msra.mxu0 %v960
    %1587 = vmatprep.subr.bf16.mxu0 %v967
    %1588 = vmatpush1.bf16.msra.mxu0 %v966
    %1589 = vmatprep.mubr.bf16.mxu0 %v1472
    %1590 = vmatmul.mubr.bf16.gmra.mrb[0].mxu0 %v1471
    %v1591 = vpop.f32.mrb[0].mxu0
    %v1592 = vadd.f32 0.0, %v1591
    %v1593 = vpop.f32.mrb[0].mxu0
    %v1594 = vadd.f32 0.0, %v1593
    %v1595 = vpop.f32.mrb[0].mxu0
    %v1596 = vpop.f32.mrb[0].mxu0
    %1597 = vdwg.mxu0
    %v1598 = vadd.f32 %v1459, %v1510
    %v1599 = vadd.f32 %v1460, %v1512
    %v1600 = vadd.f32 %v1461, %v1551
    %v1601 = vadd.f32 %v1462, %v1553
    %v1602 = vxor.u32 %v1598, 2147483648
    %v1603 = vxor.u32 %v1599, 2147483648
    %v1604 = vxor.u32 %v1600, 2147483648
    %v1605 = vxor.u32 %v1601, 2147483648
    %v1606 = vmul.f32 %v1602, 1.442695
    %v1607 = vpow.pop %v1606
    %v1608 = vmul.f32 %v1603, 1.442695
    %v1609 = vpow.pop %v1608
    %v1610 = vmul.f32 %v1604, 1.442695
    %v1611 = vpow.pop %v1610
    %v1612 = vmul.f32 %v1605, 1.442695
    %v1613 = vpow.pop %v1612
    %v1614 = vadd.f32 %v1607, 1.0
    %v1615 = vadd.f32 %v1609, 1.0
    %v1616 = vadd.f32 %v1611, 1.0
    %v1617 = vadd.f32 %v1613, 1.0
    %v1618 = vrcp.pop %v1614
    %v1619 = vmul.f32 1.0, %v1618
    %v1620 = vrcp.pop %v1615
    %v1621 = vmul.f32 1.0, %v1620
    %v1622 = vrcp.pop %v1616
    %v1623 = vmul.f32 1.0, %v1622
    %v1624 = vrcp.pop %v1617
    %v1625 = vmul.f32 1.0, %v1624
    %v1626 = vadd.f32 %v1592, %v1219
    %v1627 = vadd.f32 %v1594, %v1223
    %v1628 = vmul.f32 %v1619, %v1626
    %v1629 = vmul.f32 %v1621, %v1627
    %v1630 = vadd.f32 %v1463, %v1628
    %v1631 = vadd.f32 %v1464, %v1629
    %v1632 = vtanh.pop %v1630
    %v1633 = vtanh.pop %v1631
    %v1636 = vrot.slane %v1632, 4
    %v1637 = vrot.slane %v1633, 4
    %v1640 = vsub.f32 %v1457, %v1636
    %v1641 = vsub.f32 %v1458, %v1637
    %v1644 = vrot.slane %v1640, 4
    %v1645 = vrot.slane %v1641, 4
    %v1648 = vmul.f32 %v1623, %v1644
    %v1649 = vmul.f32 %v1625, %v1645
    %v1650 = vadd.f32 %v1632, %v1648
    %v1651 = vadd.f32 %v1633, %v1649
    %vm1652 = vcmp.ne.f32.partialorder %v1465, 0.0
    %vm1653 = vcmp.ne.f32.partialorder %v1466, 0.0
    %v1656 = vrot.slane %v1457, 4
    %v1657 = vrot.slane %v1458, 4
    %v1660 = vsel %vm1652, %v1650, %v1656
    %v1661 = vsel %vm1653, %v1651, %v1657
    %v1662 = vld [vmem:[#allocation2 + $0x30] sm:$0xf0]
    %v1663 = vld [vmem:[#allocation2 + $0x38] sm:$0xf0]
    %v1664 = vld [vmem:[#allocation2 + $0x40] sm:$0xf0]
    %v1665 = vld [vmem:[#allocation2 + $0x48] sm:$0xf0]
    %v1666 = vld [vmem:[#allocation2 + $0x50] sm:$0xf0]
    %v1667 = vld [vmem:[#allocation2 + $0x58] sm:$0xf0]
    %v1668 = vld [vmem:[#allocation9 + $0x10] sm:$0xf0]
    %v1669 = vld [vmem:[#allocation9 + $0x18] sm:$0xf0]
    %v1670 = vpack.c.bf16 %v1660, %v1660
    %v1671 = vpack.c.bf16 %v1661, %v1661
    %1672 = vmatprep.subr.bf16.mxu0 %v873
    %1673 = vmatpush1.bf16.msra.mxu0 %v872
    %1674 = vmatprep.subr.bf16.mxu0 %v879
    %1675 = vmatpush1.bf16.msra.mxu0 %v878
    %1676 = vmatprep.subr.bf16.mxu0 %v885
    %1677 = vmatpush1.bf16.msra.mxu0 %v884
    %1678 = vmatprep.subr.bf16.mxu0 %v891
    %1679 = vmatpush1.bf16.msra.mxu0 %v890
    %1680 = vmatprep.subr.bf16.mxu0 %v897
    %1681 = vmatpush1.bf16.msra.mxu0 %v896
    %1682 = vmatprep.subr.bf16.mxu0 %v903
    %1683 = vmatpush1.bf16.msra.mxu0 %v902
    %1684 = vmatprep.subr.bf16.mxu0 %v909
    %1685 = vmatpush1.bf16.msra.mxu0 %v908
    %1686 = vmatprep.subr.bf16.mxu0 %v915
    %1687 = vmatpush1.bf16.msra.mxu0 %v914
    %1688 = vmatprep.subr.bf16.mxu0 %v921
    %1689 = vmatpush1.bf16.msra.mxu0 %v920
    %1690 = vmatprep.subr.bf16.mxu0 %v927
    %1691 = vmatpush1.bf16.msra.mxu0 %v926
    %1692 = vmatprep.subr.bf16.mxu0 %v933
    %1693 = vmatpush1.bf16.msra.mxu0 %v932
    %1694 = vmatprep.subr.bf16.mxu0 %v939
    %1695 = vmatpush1.bf16.msra.mxu0 %v938
    %1696 = vmatprep.subr.bf16.mxu0 %v945
    %1697 = vmatpush1.bf16.msra.mxu0 %v944
    %1698 = vmatprep.subr.bf16.mxu0 %v951
    %1699 = vmatpush1.bf16.msra.mxu0 %v950
    %1700 = vmatprep.subr.bf16.mxu0 %v957
    %1701 = vmatpush1.bf16.msra.mxu0 %v956
    %1702 = vmatprep.subr.bf16.mxu0 %v963
    %1703 = vmatpush1.bf16.msra.mxu0 %v962
    %1704 = vmatprep.mubr.bf16.mxu0 %v1671
    %1705 = vmatmul.mubr.bf16.gmra.mrb[0].mxu0 %v1670
    %v1706 = vpop.f32.mrb[0].mxu0
    %v1707 = vadd.f32 0.0, %v1706
    %v1708 = vpop.f32.mrb[0].mxu0
    %v1709 = vadd.f32 0.0, %v1708
    %v1710 = vpop.f32.mrb[0].mxu0
    %v1711 = vpop.f32.mrb[0].mxu0
    %1712 = vdwg.mxu0
    %1713 = vmatprep.subr.bf16.mxu0 %v875
    %1714 = vmatpush1.bf16.msra.mxu0 %v874
    %1715 = vmatprep.subr.bf16.mxu0 %v881
    %1716 = vmatpush1.bf16.msra.mxu0 %v880
    %1717 = vmatprep.subr.bf16.mxu0 %v887
    %1718 = vmatpush1.bf16.msra.mxu0 %v886
    %1719 = vmatprep.subr.bf16.mxu0 %v893
    %1720 = vmatpush1.bf16.msra.mxu0 %v892
    %1721 = vmatprep.subr.bf16.mxu0 %v899
    %1722 = vmatpush1.bf16.msra.mxu0 %v898
    %1723 = vmatprep.subr.bf16.mxu0 %v905
    %1724 = vmatpush1.bf16.msra.mxu0 %v904
    %1725 = vmatprep.subr.bf16.mxu0 %v911
    %1726 = vmatpush1.bf16.msra.mxu0 %v910
    %1727 = vmatprep.subr.bf16.mxu0 %v917
    %1728 = vmatpush1.bf16.msra.mxu0 %v916
    %1729 = vmatprep.subr.bf16.mxu0 %v923
    %1730 = vmatpush1.bf16.msra.mxu0 %v922
    %1731 = vmatprep.subr.bf16.mxu0 %v929
    %1732 = vmatpush1.bf16.msra.mxu0 %v928
    %1733 = vmatprep.subr.bf16.mxu0 %v935
    %1734 = vmatpush1.bf16.msra.mxu0 %v934
    %1735 = vmatprep.subr.bf16.mxu0 %v941
    %1736 = vmatpush1.bf16.msra.mxu0 %v940
    %1737 = vmatprep.subr.bf16.mxu0 %v947
    %1738 = vmatpush1.bf16.msra.mxu0 %v946
    %1739 = vmatprep.subr.bf16.mxu0 %v953
    %1740 = vmatpush1.bf16.msra.mxu0 %v952
    %1741 = vmatprep.subr.bf16.mxu0 %v959
    %1742 = vmatpush1.bf16.msra.mxu0 %v958
    %1743 = vmatprep.subr.bf16.mxu0 %v965
    %1744 = vmatpush1.bf16.msra.mxu0 %v964
    %1745 = vmatprep.mubr.bf16.mxu0 %v1671
    %1746 = vmatmul.mubr.bf16.gmra.mrb[0].mxu0 %v1670
    %v1747 = vpop.f32.mrb[0].mxu0
    %v1748 = vadd.f32 0.0, %v1747
    %v1749 = vpop.f32.mrb[0].mxu0
    %v1750 = vadd.f32 0.0, %v1749
    %v1751 = vpop.f32.mrb[0].mxu0
    %v1752 = vpop.f32.mrb[0].mxu0
    %1753 = vdwg.mxu0
    %1754 = vmatprep.subr.bf16.mxu0 %v877
    %1755 = vmatpush1.bf16.msra.mxu0 %v876
    %1756 = vmatprep.subr.bf16.mxu0 %v883
    %1757 = vmatpush1.bf16.msra.mxu0 %v882
    %1758 = vmatprep.subr.bf16.mxu0 %v889
    %1759 = vmatpush1.bf16.msra.mxu0 %v888
    %1760 = vmatprep.subr.bf16.mxu0 %v895
    %1761 = vmatpush1.bf16.msra.mxu0 %v894
    %1762 = vmatprep.subr.bf16.mxu0 %v901
    %1763 = vmatpush1.bf16.msra.mxu0 %v900
    %1764 = vmatprep.subr.bf16.mxu0 %v907
    %1765 = vmatpush1.bf16.msra.mxu0 %v906
    %1766 = vmatprep.subr.bf16.mxu0 %v913
    %1767 = vmatpush1.bf16.msra.mxu0 %v912
    %1768 = vmatprep.subr.bf16.mxu0 %v919
    %1769 = vmatpush1.bf16.msra.mxu0 %v918
    %1770 = vmatprep.subr.bf16.mxu0 %v925
    %1771 = vmatpush1.bf16.msra.mxu0 %v924
    %1772 = vmatprep.subr.bf16.mxu0 %v931
    %1773 = vmatpush1.bf16.msra.mxu0 %v930
    %1774 = vmatprep.subr.bf16.mxu0 %v937
    %1775 = vmatpush1.bf16.msra.mxu0 %v936
    %1776 = vmatprep.subr.bf16.mxu0 %v943
    %1777 = vmatpush1.bf16.msra.mxu0 %v942
    %1778 = vmatprep.subr.bf16.mxu0 %v949
    %1779 = vmatpush1.bf16.msra.mxu0 %v948
    %1780 = vmatprep.subr.bf16.mxu0 %v955
    %1781 = vmatpush1.bf16.msra.mxu0 %v954
    %1782 = vmatprep.subr.bf16.mxu0 %v961
    %1783 = vmatpush1.bf16.msra.mxu0 %v960
    %1784 = vmatprep.subr.bf16.mxu0 %v967
    %1785 = vmatpush1.bf16.msra.mxu0 %v966
    %1786 = vmatprep.mubr.bf16.mxu0 %v1671
    %1787 = vmatmul.mubr.bf16.gmra.mrb[0].mxu0 %v1670
    %v1788 = vpop.f32.mrb[0].mxu0
    %v1789 = vadd.f32 0.0, %v1788
    %v1790 = vpop.f32.mrb[0].mxu0
    %v1791 = vadd.f32 0.0, %v1790
    %v1792 = vpop.f32.mrb[0].mxu0
    %v1793 = vpop.f32.mrb[0].mxu0
    %1794 = vdwg.mxu0
    %v1799 = vrot.slane %v1707, 4
    %v1800 = vrot.slane %v1709, 4
    %v1801 = vrot.slane %v1748, 4
    %v1802 = vrot.slane %v1750, 4
    %v1807 = vadd.f32 %v1662, %v1799
    %v1808 = vadd.f32 %v1663, %v1800
    %v1809 = vadd.f32 %v1664, %v1801
    %v1810 = vadd.f32 %v1665, %v1802
    %v1811 = vxor.u32 %v1807, 2147483648
    %v1812 = vxor.u32 %v1808, 2147483648
    %v1813 = vxor.u32 %v1809, 2147483648
    %v1814 = vxor.u32 %v1810, 2147483648
    %v1815 = vmul.f32 %v1811, 1.442695
    %v1816 = vpow.pop %v1815
    %v1817 = vmul.f32 %v1812, 1.442695
    %v1818 = vpow.pop %v1817
    %v1819 = vmul.f32 %v1813, 1.442695
    %v1820 = vpow.pop %v1819
    %v1821 = vmul.f32 %v1814, 1.442695
    %v1822 = vpow.pop %v1821
    %v1823 = vadd.f32 %v1816, 1.0
    %v1824 = vadd.f32 %v1818, 1.0
    %v1825 = vadd.f32 %v1820, 1.0
    %v1826 = vadd.f32 %v1822, 1.0
    %v1827 = vrcp.pop %v1823
    %v1828 = vmul.f32 1.0, %v1827
    %v1829 = vrcp.pop %v1824
    %v1830 = vmul.f32 1.0, %v1829
    %v1831 = vrcp.pop %v1825
    %v1832 = vmul.f32 1.0, %v1831
    %v1833 = vrcp.pop %v1826
    %v1834 = vmul.f32 1.0, %v1833
    %v1835 = vadd.f32 %v1789, %v1219
    %v1836 = vadd.f32 %v1791, %v1223
    %v1839 = vrot.slane %v1835, 4
    %v1840 = vrot.slane %v1836, 4
    %v1843 = vmul.f32 %v1828, %v1839
    %v1844 = vmul.f32 %v1830, %v1840
    %v1845 = vadd.f32 %v1666, %v1843
    %v1846 = vadd.f32 %v1667, %v1844
    %v1847 = vtanh.pop %v1845
    %v1848 = vtanh.pop %v1846
    %v1851 = vrot.slane %v1847, 4
    %v1852 = vrot.slane %v1848, 4
    %v1855 = vsub.f32 %v1660, %v1851
    %v1856 = vsub.f32 %v1661, %v1852
    %v1859 = vrot.slane %v1855, 4
    %v1860 = vrot.slane %v1856, 4
    %v1863 = vmul.f32 %v1832, %v1859
    %v1864 = vmul.f32 %v1834, %v1860
    %v1865 = vadd.f32 %v1847, %v1863
    %v1866 = vadd.f32 %v1848, %v1864
    %vm1867 = vcmp.ne.f32.partialorder %v1668, 0.0
    %vm1868 = vcmp.ne.f32.partialorder %v1669, 0.0
    %v1871 = vrot.slane %v1660, 4
    %v1872 = vrot.slane %v1661, 4
    %v1875 = vsel %vm1867, %v1865, %v1871
    %v1876 = vsel %vm1868, %v1866, %v1872
    %v1877 = vld [vmem:[#allocation2 + $0x60] sm:$0xf]
    %v1878 = vld [vmem:[#allocation2 + $0x68] sm:$0xf]
    %v1879 = vld [vmem:[#allocation2 + $0x70] sm:$0xf]
    %v1880 = vld [vmem:[#allocation2 + $0x78] sm:$0xf]
    %v1881 = vld [vmem:[#allocation2 + $0x80] sm:$0xf]
    %v1882 = vld [vmem:[#allocation2 + $0x88] sm:$0xf]
    %v1883 = vld [vmem:[#allocation9 + $0x20] sm:$0xf]
    %v1884 = vld [vmem:[#allocation9 + $0x28] sm:$0xf]
    %v1885 = vpack.c.bf16 %v1875, %v1875
    %v1886 = vpack.c.bf16 %v1876, %v1876
    %v1889 = vrot.slane %v1885, 2
    %v1890 = vrot.slane %v1886, 2
    %1893 = vmatprep.subr.bf16.mxu0 %v873
    %1894 = vmatpush1.bf16.msra.mxu0 %v872
    %1895 = vmatprep.subr.bf16.mxu0 %v879
    %1896 = vmatpush1.bf16.msra.mxu0 %v878
    %1897 = vmatprep.subr.bf16.mxu0 %v885
    %1898 = vmatpush1.bf16.msra.mxu0 %v884
    %1899 = vmatprep.subr.bf16.mxu0 %v891
    %1900 = vmatpush1.bf16.msra.mxu0 %v890
    %1901 = vmatprep.subr.bf16.mxu0 %v897
    %1902 = vmatpush1.bf16.msra.mxu0 %v896
    %1903 = vmatprep.subr.bf16.mxu0 %v903
    %1904 = vmatpush1.bf16.msra.mxu0 %v902
    %1905 = vmatprep.subr.bf16.mxu0 %v909
    %1906 = vmatpush1.bf16.msra.mxu0 %v908
    %1907 = vmatprep.subr.bf16.mxu0 %v915
    %1908 = vmatpush1.bf16.msra.mxu0 %v914
    %1909 = vmatprep.subr.bf16.mxu0 %v921
    %1910 = vmatpush1.bf16.msra.mxu0 %v920
    %1911 = vmatprep.subr.bf16.mxu0 %v927
    %1912 = vmatpush1.bf16.msra.mxu0 %v926
    %1913 = vmatprep.subr.bf16.mxu0 %v933
    %1914 = vmatpush1.bf16.msra.mxu0 %v932
    %1915 = vmatprep.subr.bf16.mxu0 %v939
    %1916 = vmatpush1.bf16.msra.mxu0 %v938
    %1917 = vmatprep.subr.bf16.mxu0 %v945
    %1918 = vmatpush1.bf16.msra.mxu0 %v944
    %1919 = vmatprep.subr.bf16.mxu0 %v951
    %1920 = vmatpush1.bf16.msra.mxu0 %v950
    %1921 = vmatprep.subr.bf16.mxu0 %v957
    %1922 = vmatpush1.bf16.msra.mxu0 %v956
    %1923 = vmatprep.subr.bf16.mxu0 %v963
    %1924 = vmatpush1.bf16.msra.mxu0 %v962
    %1925 = vmatprep.mubr.bf16.mxu0 %v1890
    %1926 = vmatmul.mubr.bf16.gmra.mrb[0].mxu0 %v1889
    %v1927 = vpop.f32.mrb[0].mxu0
    %v1928 = vadd.f32 0.0, %v1927
    %v1929 = vpop.f32.mrb[0].mxu0
    %v1930 = vadd.f32 0.0, %v1929
    %v1931 = vpop.f32.mrb[0].mxu0
    %v1932 = vpop.f32.mrb[0].mxu0
    %1933 = vdwg.mxu0
    %1934 = vmatprep.subr.bf16.mxu0 %v875
    %1935 = vmatpush1.bf16.msra.mxu0 %v874
    %1936 = vmatprep.subr.bf16.mxu0 %v881
    %1937 = vmatpush1.bf16.msra.mxu0 %v880
    %1938 = vmatprep.subr.bf16.mxu0 %v887
    %1939 = vmatpush1.bf16.msra.mxu0 %v886
    %1940 = vmatprep.subr.bf16.mxu0 %v893
    %1941 = vmatpush1.bf16.msra.mxu0 %v892
    %1942 = vmatprep.subr.bf16.mxu0 %v899
    %1943 = vmatpush1.bf16.msra.mxu0 %v898
    %1944 = vmatprep.subr.bf16.mxu0 %v905
    %1945 = vmatpush1.bf16.msra.mxu0 %v904
    %1946 = vmatprep.subr.bf16.mxu0 %v911
    %1947 = vmatpush1.bf16.msra.mxu0 %v910
    %1948 = vmatprep.subr.bf16.mxu0 %v917
    %1949 = vmatpush1.bf16.msra.mxu0 %v916
    %1950 = vmatprep.subr.bf16.mxu0 %v923
    %1951 = vmatpush1.bf16.msra.mxu0 %v922
    %1952 = vmatprep.subr.bf16.mxu0 %v929
    %1953 = vmatpush1.bf16.msra.mxu0 %v928
    %1954 = vmatprep.subr.bf16.mxu0 %v935
    %1955 = vmatpush1.bf16.msra.mxu0 %v934
    %1956 = vmatprep.subr.bf16.mxu0 %v941
    %1957 = vmatpush1.bf16.msra.mxu0 %v940
    %1958 = vmatprep.subr.bf16.mxu0 %v947
    %1959 = vmatpush1.bf16.msra.mxu0 %v946
    %1960 = vmatprep.subr.bf16.mxu0 %v953
    %1961 = vmatpush1.bf16.msra.mxu0 %v952
    %1962 = vmatprep.subr.bf16.mxu0 %v959
    %1963 = vmatpush1.bf16.msra.mxu0 %v958
    %1964 = vmatprep.subr.bf16.mxu0 %v965
    %1965 = vmatpush1.bf16.msra.mxu0 %v964
    %1966 = vmatprep.mubr.bf16.mxu0 %v1890
    %1967 = vmatmul.mubr.bf16.gmra.mrb[0].mxu0 %v1889
    %v1968 = vpop.f32.mrb[0].mxu0
    %v1969 = vadd.f32 0.0, %v1968
    %v1970 = vpop.f32.mrb[0].mxu0
    %v1971 = vadd.f32 0.0, %v1970
    %v1972 = vpop.f32.mrb[0].mxu0
    %v1973 = vpop.f32.mrb[0].mxu0
    %1974 = vdwg.mxu0
    %1975 = vmatprep.subr.bf16.mxu0 %v877
    %1976 = vmatpush1.bf16.msra.mxu0 %v876
    %1977 = vmatprep.subr.bf16.mxu0 %v883
    %1978 = vmatpush1.bf16.msra.mxu0 %v882
    %1979 = vmatprep.subr.bf16.mxu0 %v889
    %1980 = vmatpush1.bf16.msra.mxu0 %v888
    %1981 = vmatprep.subr.bf16.mxu0 %v895
    %1982 = vmatpush1.bf16.msra.mxu0 %v894
    %1983 = vmatprep.subr.bf16.mxu0 %v901
    %1984 = vmatpush1.bf16.msra.mxu0 %v900
    %1985 = vmatprep.subr.bf16.mxu0 %v907
    %1986 = vmatpush1.bf16.msra.mxu0 %v906
    %1987 = vmatprep.subr.bf16.mxu0 %v913
    %1988 = vmatpush1.bf16.msra.mxu0 %v912
    %1989 = vmatprep.subr.bf16.mxu0 %v919
    %1990 = vmatpush1.bf16.msra.mxu0 %v918
    %1991 = vmatprep.subr.bf16.mxu0 %v925
    %1992 = vmatpush1.bf16.msra.mxu0 %v924
    %1993 = vmatprep.subr.bf16.mxu0 %v931
    %1994 = vmatpush1.bf16.msra.mxu0 %v930
    %1995 = vmatprep.subr.bf16.mxu0 %v937
    %1996 = vmatpush1.bf16.msra.mxu0 %v936
    %1997 = vmatprep.subr.bf16.mxu0 %v943
    %1998 = vmatpush1.bf16.msra.mxu0 %v942
    %1999 = vmatprep.subr.bf16.mxu0 %v949
    %2000 = vmatpush1.bf16.msra.mxu0 %v948
    %2001 = vmatprep.subr.bf16.mxu0 %v955
    %2002 = vmatpush1.bf16.msra.mxu0 %v954
    %2003 = vmatprep.subr.bf16.mxu0 %v961
    %2004 = vmatpush1.bf16.msra.mxu0 %v960
    %2005 = vmatprep.subr.bf16.mxu0 %v967
    %2006 = vmatpush1.bf16.msra.mxu0 %v966
    %2007 = vmatprep.mubr.bf16.mxu0 %v1890
    %2008 = vmatmul.mubr.bf16.gmra.mrb[0].mxu0 %v1889
    %v2009 = vpop.f32.mrb[0].mxu0
    %v2010 = vadd.f32 0.0, %v2009
    %v2011 = vpop.f32.mrb[0].mxu0
    %v2012 = vadd.f32 0.0, %v2011
    %v2013 = vpop.f32.mrb[0].mxu0
    %v2014 = vpop.f32.mrb[0].mxu0
    %2015 = vdwg.mxu0
    %v2016 = vadd.f32 %v1877, %v1928
    %v2017 = vadd.f32 %v1878, %v1930
    %v2018 = vadd.f32 %v1879, %v1969
    %v2019 = vadd.f32 %v1880, %v1971
    %v2020 = vxor.u32 %v2016, 2147483648
    %v2021 = vxor.u32 %v2017, 2147483648
    %v2022 = vxor.u32 %v2018, 2147483648
    %v2023 = vxor.u32 %v2019, 2147483648
    %v2024 = vmul.f32 %v2020, 1.442695
    %v2025 = vpow.pop %v2024
    %v2026 = vmul.f32 %v2021, 1.442695
    %v2027 = vpow.pop %v2026
    %v2028 = vmul.f32 %v2022, 1.442695
    %v2029 = vpow.pop %v2028
    %v2030 = vmul.f32 %v2023, 1.442695
    %v2031 = vpow.pop %v2030
    %v2032 = vadd.f32 %v2025, 1.0
    %v2033 = vadd.f32 %v2027, 1.0
    %v2034 = vadd.f32 %v2029, 1.0
    %v2035 = vadd.f32 %v2031, 1.0
    %v2036 = vrcp.pop %v2032
    %v2037 = vmul.f32 1.0, %v2036
    %v2038 = vrcp.pop %v2033
    %v2039 = vmul.f32 1.0, %v2038
    %v2040 = vrcp.pop %v2034
    %v2041 = vmul.f32 1.0, %v2040
    %v2042 = vrcp.pop %v2035
    %v2043 = vmul.f32 1.0, %v2042
    %v2044 = vadd.f32 %v2010, %v1219
    %v2045 = vadd.f32 %v2012, %v1223
    %v2046 = vmul.f32 %v2037, %v2044
    %v2047 = vmul.f32 %v2039, %v2045
    %v2048 = vadd.f32 %v1881, %v2046
    %v2049 = vadd.f32 %v1882, %v2047
    %v2050 = vtanh.pop %v2048
    %v2051 = vtanh.pop %v2049
    %v2054 = vrot.slane %v2050, 4
    %v2055 = vrot.slane %v2051, 4
    %v2058 = vsub.f32 %v1875, %v2054
    %v2059 = vsub.f32 %v1876, %v2055
    %v2062 = vrot.slane %v2058, 4
    %v2063 = vrot.slane %v2059, 4
    %v2066 = vmul.f32 %v2041, %v2062
    %v2067 = vmul.f32 %v2043, %v2063
    %v2068 = vadd.f32 %v2050, %v2066
    %v2069 = vadd.f32 %v2051, %v2067
    %vm2070 = vcmp.ne.f32.partialorder %v1883, 0.0
    %vm2071 = vcmp.ne.f32.partialorder %v1884, 0.0
    %v2074 = vrot.slane %v1875, 4
    %v2075 = vrot.slane %v1876, 4
    %v2078 = vsel %vm2070, %v2068, %v2074
    %v2079 = vsel %vm2071, %v2069, %v2075
    %v2080 = vld [vmem:[#allocation2 + $0x60] sm:$0xf0]
    %v2081 = vld [vmem:[#allocation2 + $0x68] sm:$0xf0]
    %v2082 = vld [vmem:[#allocation2 + $0x70] sm:$0xf0]
    %v2083 = vld [vmem:[#allocation2 + $0x78] sm:$0xf0]
    %v2084 = vld [vmem:[#allocation2 + $0x80] sm:$0xf0]
    %v2085 = vld [vmem:[#allocation2 + $0x88] sm:$0xf0]
    %v2086 = vld [vmem:[#allocation9 + $0x20] sm:$0xf0]
    %v2087 = vld [vmem:[#allocation9 + $0x28] sm:$0xf0]
    %v2088 = vpack.c.bf16 %v2078, %v2078
    %v2089 = vpack.c.bf16 %v2079, %v2079
    %2090 = vmatprep.subr.bf16.mxu0 %v873
    %2091 = vmatpush1.bf16.msra.mxu0 %v872
    %2092 = vmatprep.subr.bf16.mxu0 %v879
    %2093 = vmatpush1.bf16.msra.mxu0 %v878
    %2094 = vmatprep.subr.bf16.mxu0 %v885
    %2095 = vmatpush1.bf16.msra.mxu0 %v884
    %2096 = vmatprep.subr.bf16.mxu0 %v891
    %2097 = vmatpush1.bf16.msra.mxu0 %v890
    %2098 = vmatprep.subr.bf16.mxu0 %v897
    %2099 = vmatpush1.bf16.msra.mxu0 %v896
    %2100 = vmatprep.subr.bf16.mxu0 %v903
    %2101 = vmatpush1.bf16.msra.mxu0 %v902
    %2102 = vmatprep.subr.bf16.mxu0 %v909
    %2103 = vmatpush1.bf16.msra.mxu0 %v908
    %2104 = vmatprep.subr.bf16.mxu0 %v915
    %2105 = vmatpush1.bf16.msra.mxu0 %v914
    %2106 = vmatprep.subr.bf16.mxu0 %v921
    %2107 = vmatpush1.bf16.msra.mxu0 %v920
    %2108 = vmatprep.subr.bf16.mxu0 %v927
    %2109 = vmatpush1.bf16.msra.mxu0 %v926
    %2110 = vmatprep.subr.bf16.mxu0 %v933
    %2111 = vmatpush1.bf16.msra.mxu0 %v932
    %2112 = vmatprep.subr.bf16.mxu0 %v939
    %2113 = vmatpush1.bf16.msra.mxu0 %v938
    %2114 = vmatprep.subr.bf16.mxu0 %v945
    %2115 = vmatpush1.bf16.msra.mxu0 %v944
    %2116 = vmatprep.subr.bf16.mxu0 %v951
    %2117 = vmatpush1.bf16.msra.mxu0 %v950
    %2118 = vmatprep.subr.bf16.mxu0 %v957
    %2119 = vmatpush1.bf16.msra.mxu0 %v956
    %2120 = vmatprep.subr.bf16.mxu0 %v963
    %2121 = vmatpush1.bf16.msra.mxu0 %v962
    %2122 = vmatprep.mubr.bf16.mxu0 %v2089
    %2123 = vmatmul.mubr.bf16.gmra.mrb[0].mxu0 %v2088
    %v2124 = vpop.f32.mrb[0].mxu0
    %v2125 = vadd.f32 0.0, %v2124
    %v2126 = vpop.f32.mrb[0].mxu0
    %v2127 = vadd.f32 0.0, %v2126
    %v2128 = vpop.f32.mrb[0].mxu0
    %v2129 = vpop.f32.mrb[0].mxu0
    %2130 = vdwg.mxu0
    %2131 = vmatprep.subr.bf16.mxu0 %v875
    %2132 = vmatpush1.bf16.msra.mxu0 %v874
    %2133 = vmatprep.subr.bf16.mxu0 %v881
    %2134 = vmatpush1.bf16.msra.mxu0 %v880
    %2135 = vmatprep.subr.bf16.mxu0 %v887
    %2136 = vmatpush1.bf16.msra.mxu0 %v886
    %2137 = vmatprep.subr.bf16.mxu0 %v893
    %2138 = vmatpush1.bf16.msra.mxu0 %v892
    %2139 = vmatprep.subr.bf16.mxu0 %v899
    %2140 = vmatpush1.bf16.msra.mxu0 %v898
    %2141 = vmatprep.subr.bf16.mxu0 %v905
    %2142 = vmatpush1.bf16.msra.mxu0 %v904
    %2143 = vmatprep.subr.bf16.mxu0 %v911
    %2144 = vmatpush1.bf16.msra.mxu0 %v910
    %2145 = vmatprep.subr.bf16.mxu0 %v917
    %2146 = vmatpush1.bf16.msra.mxu0 %v916
    %2147 = vmatprep.subr.bf16.mxu0 %v923
    %2148 = vmatpush1.bf16.msra.mxu0 %v922
    %2149 = vmatprep.subr.bf16.mxu0 %v929
    %2150 = vmatpush1.bf16.msra.mxu0 %v928
    %2151 = vmatprep.subr.bf16.mxu0 %v935
    %2152 = vmatpush1.bf16.msra.mxu0 %v934
    %2153 = vmatprep.subr.bf16.mxu0 %v941
    %2154 = vmatpush1.bf16.msra.mxu0 %v940
    %2155 = vmatprep.subr.bf16.mxu0 %v947
    %2156 = vmatpush1.bf16.msra.mxu0 %v946
    %2157 = vmatprep.subr.bf16.mxu0 %v953
    %2158 = vmatpush1.bf16.msra.mxu0 %v952
    %2159 = vmatprep.subr.bf16.mxu0 %v959
    %2160 = vmatpush1.bf16.msra.mxu0 %v958
    %2161 = vmatprep.subr.bf16.mxu0 %v965
    %2162 = vmatpush1.bf16.msra.mxu0 %v964
    %2163 = vmatprep.mubr.bf16.mxu0 %v2089
    %2164 = vmatmul.mubr.bf16.gmra.mrb[0].mxu0 %v2088
    %v2165 = vpop.f32.mrb[0].mxu0
    %v2166 = vadd.f32 0.0, %v2165
    %v2167 = vpop.f32.mrb[0].mxu0
    %v2168 = vadd.f32 0.0, %v2167
    %v2169 = vpop.f32.mrb[0].mxu0
    %v2170 = vpop.f32.mrb[0].mxu0
    %2171 = vdwg.mxu0
    %2172 = vmatprep.subr.bf16.mxu0 %v877
    %2173 = vmatpush1.bf16.msra.mxu0 %v876
    %2174 = vmatprep.subr.bf16.mxu0 %v883
    %2175 = vmatpush1.bf16.msra.mxu0 %v882
    %2176 = vmatprep.subr.bf16.mxu0 %v889
    %2177 = vmatpush1.bf16.msra.mxu0 %v888
    %2178 = vmatprep.subr.bf16.mxu0 %v895
    %2179 = vmatpush1.bf16.msra.mxu0 %v894
    %2180 = vmatprep.subr.bf16.mxu0 %v901
    %2181 = vmatpush1.bf16.msra.mxu0 %v900
    %2182 = vmatprep.subr.bf16.mxu0 %v907
    %2183 = vmatpush1.bf16.msra.mxu0 %v906
    %2184 = vmatprep.subr.bf16.mxu0 %v913
    %2185 = vmatpush1.bf16.msra.mxu0 %v912
    %2186 = vmatprep.subr.bf16.mxu0 %v919
    %2187 = vmatpush1.bf16.msra.mxu0 %v918
    %2188 = vmatprep.subr.bf16.mxu0 %v925
    %2189 = vmatpush1.bf16.msra.mxu0 %v924
    %2190 = vmatprep.subr.bf16.mxu0 %v931
    %2191 = vmatpush1.bf16.msra.mxu0 %v930
    %2192 = vmatprep.subr.bf16.mxu0 %v937
    %2193 = vmatpush1.bf16.msra.mxu0 %v936
    %2194 = vmatprep.subr.bf16.mxu0 %v943
    %2195 = vmatpush1.bf16.msra.mxu0 %v942
    %2196 = vmatprep.subr.bf16.mxu0 %v949
    %2197 = vmatpush1.bf16.msra.mxu0 %v948
    %2198 = vmatprep.subr.bf16.mxu0 %v955
    %2199 = vmatpush1.bf16.msra.mxu0 %v954
    %2200 = vmatprep.subr.bf16.mxu0 %v961
    %2201 = vmatpush1.bf16.msra.mxu0 %v960
    %2202 = vmatprep.subr.bf16.mxu0 %v967
    %2203 = vmatpush1.bf16.msra.mxu0 %v966
    %2204 = vmatprep.mubr.bf16.mxu0 %v2089
    %2205 = vmatmul.mubr.bf16.gmra.mrb[0].mxu0 %v2088
    %v2206 = vpop.f32.mrb[0].mxu0
    %v2207 = vadd.f32 0.0, %v2206
    %v2208 = vpop.f32.mrb[0].mxu0
    %v2209 = vadd.f32 0.0, %v2208
    %v2210 = vpop.f32.mrb[0].mxu0
    %v2211 = vpop.f32.mrb[0].mxu0
    %2212 = vdwg.mxu0
    %v2217 = vrot.slane %v2125, 4
    %v2218 = vrot.slane %v2127, 4
    %v2219 = vrot.slane %v2166, 4
    %v2220 = vrot.slane %v2168, 4
    %v2225 = vadd.f32 %v2080, %v2217
    %v2226 = vadd.f32 %v2081, %v2218
    %v2227 = vadd.f32 %v2082, %v2219
    %v2228 = vadd.f32 %v2083, %v2220
    %v2229 = vxor.u32 %v2225, 2147483648
    %v2230 = vxor.u32 %v2226, 2147483648
    %v2231 = vxor.u32 %v2227, 2147483648
    %v2232 = vxor.u32 %v2228, 2147483648
    %v2233 = vmul.f32 %v2229, 1.442695
    %v2234 = vpow.pop %v2233
    %v2235 = vmul.f32 %v2230, 1.442695
    %v2236 = vpow.pop %v2235
    %v2237 = vmul.f32 %v2231, 1.442695
    %v2238 = vpow.pop %v2237
    %v2239 = vmul.f32 %v2232, 1.442695
    %v2240 = vpow.pop %v2239
    %v2241 = vadd.f32 %v2234, 1.0
    %v2242 = vadd.f32 %v2236, 1.0
    %v2243 = vadd.f32 %v2238, 1.0
    %v2244 = vadd.f32 %v2240, 1.0
    %v2245 = vrcp.pop %v2241
    %v2246 = vmul.f32 1.0, %v2245
    %v2247 = vrcp.pop %v2242
    %v2248 = vmul.f32 1.0, %v2247
    %v2249 = vrcp.pop %v2243
    %v2250 = vmul.f32 1.0, %v2249
    %v2251 = vrcp.pop %v2244
    %v2252 = vmul.f32 1.0, %v2251
    %v2253 = vadd.f32 %v2207, %v1219
    %v2254 = vadd.f32 %v2209, %v1223
    %v2257 = vrot.slane %v2253, 4
    %v2258 = vrot.slane %v2254, 4
    %v2261 = vmul.f32 %v2246, %v2257
    %v2262 = vmul.f32 %v2248, %v2258
    %v2263 = vadd.f32 %v2084, %v2261
    %v2264 = vadd.f32 %v2085, %v2262
    %v2265 = vtanh.pop %v2263
    %v2266 = vtanh.pop %v2264
    %v2269 = vrot.slane %v2265, 4
    %v2270 = vrot.slane %v2266, 4
    %v2273 = vsub.f32 %v2078, %v2269
    %v2274 = vsub.f32 %v2079, %v2270
    %v2277 = vrot.slane %v2273, 4
    %v2278 = vrot.slane %v2274, 4
    %v2281 = vmul.f32 %v2250, %v2277
    %v2282 = vmul.f32 %v2252, %v2278
    %v2283 = vadd.f32 %v2265, %v2281
    %v2284 = vadd.f32 %v2266, %v2282
    %vm2285 = vcmp.ne.f32.partialorder %v2086, 0.0
    %vm2286 = vcmp.ne.f32.partialorder %v2087, 0.0
    %v2289 = vrot.slane %v2078, 4
    %v2290 = vrot.slane %v2079, 4
    %v2293 = vsel %vm2285, %v2283, %v2289
    %v2294 = vsel %vm2286, %v2284, %v2290
    %v2295 = vld [vmem:[#allocation2 + $0x90] sm:$0xf]
    %v2296 = vld [vmem:[#allocation2 + $0x98] sm:$0xf]
    %v2297 = vld [vmem:[#allocation2 + $0xa0] sm:$0xf]
    %v2298 = vld [vmem:[#allocation2 + $0xa8] sm:$0xf]
    %v2299 = vld [vmem:[#allocation2 + $0xb0] sm:$0xf]
    %v2300 = vld [vmem:[#allocation2 + $0xb8] sm:$0xf]
    %v2301 = vld [vmem:[#allocation9 + $0x30] sm:$0xf]
    %v2302 = vld [vmem:[#allocation9 + $0x38] sm:$0xf]
    %v2303 = vpack.c.bf16 %v2293, %v2293
    %v2304 = vpack.c.bf16 %v2294, %v2294
    %v2307 = vrot.slane %v2303, 2
    %v2308 = vrot.slane %v2304, 2
    %2311 = vmatprep.subr.bf16.mxu0 %v873
    %2312 = vmatpush1.bf16.msra.mxu0 %v872
    %2313 = vmatprep.subr.bf16.mxu0 %v879
    %2314 = vmatpush1.bf16.msra.mxu0 %v878
    %2315 = vmatprep.subr.bf16.mxu0 %v885
    %2316 = vmatpush1.bf16.msra.mxu0 %v884
    %2317 = vmatprep.subr.bf16.mxu0 %v891
    %2318 = vmatpush1.bf16.msra.mxu0 %v890
    %2319 = vmatprep.subr.bf16.mxu0 %v897
    %2320 = vmatpush1.bf16.msra.mxu0 %v896
    %2321 = vmatprep.subr.bf16.mxu0 %v903
    %2322 = vmatpush1.bf16.msra.mxu0 %v902
    %2323 = vmatprep.subr.bf16.mxu0 %v909
    %2324 = vmatpush1.bf16.msra.mxu0 %v908
    %2325 = vmatprep.subr.bf16.mxu0 %v915
    %2326 = vmatpush1.bf16.msra.mxu0 %v914
    %2327 = vmatprep.subr.bf16.mxu0 %v921
    %2328 = vmatpush1.bf16.msra.mxu0 %v920
    %2329 = vmatprep.subr.bf16.mxu0 %v927
    %2330 = vmatpush1.bf16.msra.mxu0 %v926
    %2331 = vmatprep.subr.bf16.mxu0 %v933
    %2332 = vmatpush1.bf16.msra.mxu0 %v932
    %2333 = vmatprep.subr.bf16.mxu0 %v939
    %2334 = vmatpush1.bf16.msra.mxu0 %v938
    %2335 = vmatprep.subr.bf16.mxu0 %v945
    %2336 = vmatpush1.bf16.msra.mxu0 %v944
    %2337 = vmatprep.subr.bf16.mxu0 %v951
    %2338 = vmatpush1.bf16.msra.mxu0 %v950
    %2339 = vmatprep.subr.bf16.mxu0 %v957
    %2340 = vmatpush1.bf16.msra.mxu0 %v956
    %2341 = vmatprep.subr.bf16.mxu0 %v963
    %2342 = vmatpush1.bf16.msra.mxu0 %v962
    %2343 = vmatprep.mubr.bf16.mxu0 %v2308
    %2344 = vmatmul.mubr.bf16.gmra.mrb[0].mxu0 %v2307
    %v2345 = vpop.f32.mrb[0].mxu0
    %v2346 = vadd.f32 0.0, %v2345
    %v2347 = vpop.f32.mrb[0].mxu0
    %v2348 = vadd.f32 0.0, %v2347
    %v2349 = vpop.f32.mrb[0].mxu0
    %v2350 = vpop.f32.mrb[0].mxu0
    %2351 = vdwg.mxu0
    %2352 = vmatprep.subr.bf16.mxu0 %v875
    %2353 = vmatpush1.bf16.msra.mxu0 %v874
    %2354 = vmatprep.subr.bf16.mxu0 %v881
    %2355 = vmatpush1.bf16.msra.mxu0 %v880
    %2356 = vmatprep.subr.bf16.mxu0 %v887
    %2357 = vmatpush1.bf16.msra.mxu0 %v886
    %2358 = vmatprep.subr.bf16.mxu0 %v893
    %2359 = vmatpush1.bf16.msra.mxu0 %v892
    %2360 = vmatprep.subr.bf16.mxu0 %v899
    %2361 = vmatpush1.bf16.msra.mxu0 %v898
    %2362 = vmatprep.subr.bf16.mxu0 %v905
    %2363 = vmatpush1.bf16.msra.mxu0 %v904
    %2364 = vmatprep.subr.bf16.mxu0 %v911
    %2365 = vmatpush1.bf16.msra.mxu0 %v910
    %2366 = vmatprep.subr.bf16.mxu0 %v917
    %2367 = vmatpush1.bf16.msra.mxu0 %v916
    %2368 = vmatprep.subr.bf16.mxu0 %v923
    %2369 = vmatpush1.bf16.msra.mxu0 %v922
    %2370 = vmatprep.subr.bf16.mxu0 %v929
    %2371 = vmatpush1.bf16.msra.mxu0 %v928
    %2372 = vmatprep.subr.bf16.mxu0 %v935
    %2373 = vmatpush1.bf16.msra.mxu0 %v934
    %2374 = vmatprep.subr.bf16.mxu0 %v941
    %2375 = vmatpush1.bf16.msra.mxu0 %v940
    %2376 = vmatprep.subr.bf16.mxu0 %v947
    %2377 = vmatpush1.bf16.msra.mxu0 %v946
    %2378 = vmatprep.subr.bf16.mxu0 %v953
    %2379 = vmatpush1.bf16.msra.mxu0 %v952
    %2380 = vmatprep.subr.bf16.mxu0 %v959
    %2381 = vmatpush1.bf16.msra.mxu0 %v958
    %2382 = vmatprep.subr.bf16.mxu0 %v965
    %2383 = vmatpush1.bf16.msra.mxu0 %v964
    %2384 = vmatprep.mubr.bf16.mxu0 %v2308
    %2385 = vmatmul.mubr.bf16.gmra.mrb[0].mxu0 %v2307
    %v2386 = vpop.f32.mrb[0].mxu0
    %v2387 = vadd.f32 0.0, %v2386
    %v2388 = vpop.f32.mrb[0].mxu0
    %v2389 = vadd.f32 0.0, %v2388
    %v2390 = vpop.f32.mrb[0].mxu0
    %v2391 = vpop.f32.mrb[0].mxu0
    %2392 = vdwg.mxu0
    %2393 = vmatprep.subr.bf16.mxu0 %v877
    %2394 = vmatpush1.bf16.msra.mxu0 %v876
    %2395 = vmatprep.subr.bf16.mxu0 %v883
    %2396 = vmatpush1.bf16.msra.mxu0 %v882
    %2397 = vmatprep.subr.bf16.mxu0 %v889
    %2398 = vmatpush1.bf16.msra.mxu0 %v888
    %2399 = vmatprep.subr.bf16.mxu0 %v895
    %2400 = vmatpush1.bf16.msra.mxu0 %v894
    %2401 = vmatprep.subr.bf16.mxu0 %v901
    %2402 = vmatpush1.bf16.msra.mxu0 %v900
    %2403 = vmatprep.subr.bf16.mxu0 %v907
    %2404 = vmatpush1.bf16.msra.mxu0 %v906
    %2405 = vmatprep.subr.bf16.mxu0 %v913
    %2406 = vmatpush1.bf16.msra.mxu0 %v912
    %2407 = vmatprep.subr.bf16.mxu0 %v919
    %2408 = vmatpush1.bf16.msra.mxu0 %v918
    %2409 = vmatprep.subr.bf16.mxu0 %v925
    %2410 = vmatpush1.bf16.msra.mxu0 %v924
    %2411 = vmatprep.subr.bf16.mxu0 %v931
    %2412 = vmatpush1.bf16.msra.mxu0 %v930
    %2413 = vmatprep.subr.bf16.mxu0 %v937
    %2414 = vmatpush1.bf16.msra.mxu0 %v936
    %2415 = vmatprep.subr.bf16.mxu0 %v943
    %2416 = vmatpush1.bf16.msra.mxu0 %v942
    %2417 = vmatprep.subr.bf16.mxu0 %v949
    %2418 = vmatpush1.bf16.msra.mxu0 %v948
    %2419 = vmatprep.subr.bf16.mxu0 %v955
    %2420 = vmatpush1.bf16.msra.mxu0 %v954
    %2421 = vmatprep.subr.bf16.mxu0 %v961
    %2422 = vmatpush1.bf16.msra.mxu0 %v960
    %2423 = vmatprep.subr.bf16.mxu0 %v967
    %2424 = vmatpush1.bf16.msra.mxu0 %v966
    %2425 = vmatprep.mubr.bf16.mxu0 %v2308
    %2426 = vmatmul.mubr.bf16.gmra.mrb[0].mxu0 %v2307
    %v2427 = vpop.f32.mrb[0].mxu0
    %v2428 = vadd.f32 0.0, %v2427
    %v2429 = vpop.f32.mrb[0].mxu0
    %v2430 = vadd.f32 0.0, %v2429
    %v2431 = vpop.f32.mrb[0].mxu0
    %v2432 = vpop.f32.mrb[0].mxu0
    %2433 = vdwg.mxu0
    %v2434 = vadd.f32 %v2295, %v2346
    %v2435 = vadd.f32 %v2296, %v2348
    %v2436 = vadd.f32 %v2297, %v2387
    %v2437 = vadd.f32 %v2298, %v2389
    %v2438 = vxor.u32 %v2434, 2147483648
    %v2439 = vxor.u32 %v2435, 2147483648
    %v2440 = vxor.u32 %v2436, 2147483648
    %v2441 = vxor.u32 %v2437, 2147483648
    %v2442 = vmul.f32 %v2438, 1.442695
    %v2443 = vpow.pop %v2442
    %v2444 = vmul.f32 %v2439, 1.442695
    %v2445 = vpow.pop %v2444
    %v2446 = vmul.f32 %v2440, 1.442695
    %v2447 = vpow.pop %v2446
    %v2448 = vmul.f32 %v2441, 1.442695
    %v2449 = vpow.pop %v2448
    %v2450 = vadd.f32 %v2443, 1.0
    %v2451 = vadd.f32 %v2445, 1.0
    %v2452 = vadd.f32 %v2447, 1.0
    %v2453 = vadd.f32 %v2449, 1.0
    %v2454 = vrcp.pop %v2450
    %v2455 = vmul.f32 1.0, %v2454
    %v2456 = vrcp.pop %v2451
    %v2457 = vmul.f32 1.0, %v2456
    %v2458 = vrcp.pop %v2452
    %v2459 = vmul.f32 1.0, %v2458
    %v2460 = vrcp.pop %v2453
    %v2461 = vmul.f32 1.0, %v2460
    %v2462 = vadd.f32 %v2428, %v1219
    %v2463 = vadd.f32 %v2430, %v1223
    %v2464 = vmul.f32 %v2455, %v2462
    %v2465 = vmul.f32 %v2457, %v2463
    %v2466 = vadd.f32 %v2299, %v2464
    %v2467 = vadd.f32 %v2300, %v2465
    %v2468 = vtanh.pop %v2466
    %v2469 = vtanh.pop %v2467
    %v2472 = vrot.slane %v2468, 4
    %v2473 = vrot.slane %v2469, 4
    %v2476 = vsub.f32 %v2293, %v2472
    %v2477 = vsub.f32 %v2294, %v2473
    %v2480 = vrot.slane %v2476, 4
    %v2481 = vrot.slane %v2477, 4
    %v2484 = vmul.f32 %v2459, %v2480
    %v2485 = vmul.f32 %v2461, %v2481
    %v2486 = vadd.f32 %v2468, %v2484
    %v2487 = vadd.f32 %v2469, %v2485
    %vm2488 = vcmp.ne.f32.partialorder %v2301, 0.0
    %vm2489 = vcmp.ne.f32.partialorder %v2302, 0.0
    %v2492 = vrot.slane %v2293, 4
    %v2493 = vrot.slane %v2294, 4
    %v2496 = vsel %vm2488, %v2486, %v2492
    %v2497 = vsel %vm2489, %v2487, %v2493
    %v2498 = vld [vmem:[#allocation2 + $0x90] sm:$0xf0]
    %v2499 = vld [vmem:[#allocation2 + $0x98] sm:$0xf0]
    %v2500 = vld [vmem:[#allocation2 + $0xa0] sm:$0xf0]
    %v2501 = vld [vmem:[#allocation2 + $0xa8] sm:$0xf0]
    %v2502 = vld [vmem:[#allocation2 + $0xb0] sm:$0xf0]
    %v2503 = vld [vmem:[#allocation2 + $0xb8] sm:$0xf0]
    %v2504 = vld [vmem:[#allocation9 + $0x30] sm:$0xf0]
    %v2505 = vld [vmem:[#allocation9 + $0x38] sm:$0xf0]
    %v2506 = vpack.c.bf16 %v2496, %v2496
    %v2507 = vpack.c.bf16 %v2497, %v2497
    %2508 = vmatprep.subr.bf16.mxu0 %v873
    %2509 = vmatpush1.bf16.msra.mxu0 %v872
    %2510 = vmatprep.subr.bf16.mxu0 %v879
    %2511 = vmatpush1.bf16.msra.mxu0 %v878
    %2512 = vmatprep.subr.bf16.mxu0 %v885
    %2513 = vmatpush1.bf16.msra.mxu0 %v884
    %2514 = vmatprep.subr.bf16.mxu0 %v891
    %2515 = vmatpush1.bf16.msra.mxu0 %v890
    %2516 = vmatprep.subr.bf16.mxu0 %v897
    %2517 = vmatpush1.bf16.msra.mxu0 %v896
    %2518 = vmatprep.subr.bf16.mxu0 %v903
    %2519 = vmatpush1.bf16.msra.mxu0 %v902
    %2520 = vmatprep.subr.bf16.mxu0 %v909
    %2521 = vmatpush1.bf16.msra.mxu0 %v908
    %2522 = vmatprep.subr.bf16.mxu0 %v915
    %2523 = vmatpush1.bf16.msra.mxu0 %v914
    %2524 = vmatprep.subr.bf16.mxu0 %v921
    %2525 = vmatpush1.bf16.msra.mxu0 %v920
    %2526 = vmatprep.subr.bf16.mxu0 %v927
    %2527 = vmatpush1.bf16.msra.mxu0 %v926
    %2528 = vmatprep.subr.bf16.mxu0 %v933
    %2529 = vmatpush1.bf16.msra.mxu0 %v932
    %2530 = vmatprep.subr.bf16.mxu0 %v939
    %2531 = vmatpush1.bf16.msra.mxu0 %v938
    %2532 = vmatprep.subr.bf16.mxu0 %v945
    %2533 = vmatpush1.bf16.msra.mxu0 %v944
    %2534 = vmatprep.subr.bf16.mxu0 %v951
    %2535 = vmatpush1.bf16.msra.mxu0 %v950
    %2536 = vmatprep.subr.bf16.mxu0 %v957
    %2537 = vmatpush1.bf16.msra.mxu0 %v956
    %2538 = vmatprep.subr.bf16.mxu0 %v963
    %2539 = vmatpush1.bf16.msra.mxu0 %v962
    %2540 = vmatprep.mubr.bf16.mxu0 %v2507
    %2541 = vmatmul.mubr.bf16.gmra.mrb[0].mxu0 %v2506
    %v2542 = vpop.f32.mrb[0].mxu0
    %v2543 = vadd.f32 0.0, %v2542
    %v2544 = vpop.f32.mrb[0].mxu0
    %v2545 = vadd.f32 0.0, %v2544
    %v2546 = vpop.f32.mrb[0].mxu0
    %v2547 = vpop.f32.mrb[0].mxu0
    %2548 = vdwg.mxu0
    %2549 = vmatprep.subr.bf16.mxu0 %v875
    %2550 = vmatpush1.bf16.msra.mxu0 %v874
    %2551 = vmatprep.subr.bf16.mxu0 %v881
    %2552 = vmatpush1.bf16.msra.mxu0 %v880
    %2553 = vmatprep.subr.bf16.mxu0 %v887
    %2554 = vmatpush1.bf16.msra.mxu0 %v886
    %2555 = vmatprep.subr.bf16.mxu0 %v893
    %2556 = vmatpush1.bf16.msra.mxu0 %v892
    %2557 = vmatprep.subr.bf16.mxu0 %v899
    %2558 = vmatpush1.bf16.msra.mxu0 %v898
    %2559 = vmatprep.subr.bf16.mxu0 %v905
    %2560 = vmatpush1.bf16.msra.mxu0 %v904
    %2561 = vmatprep.subr.bf16.mxu0 %v911
    %2562 = vmatpush1.bf16.msra.mxu0 %v910
    %2563 = vmatprep.subr.bf16.mxu0 %v917
    %2564 = vmatpush1.bf16.msra.mxu0 %v916
    %2565 = vmatprep.subr.bf16.mxu0 %v923
    %2566 = vmatpush1.bf16.msra.mxu0 %v922
    %2567 = vmatprep.subr.bf16.mxu0 %v929
    %2568 = vmatpush1.bf16.msra.mxu0 %v928
    %2569 = vmatprep.subr.bf16.mxu0 %v935
    %2570 = vmatpush1.bf16.msra.mxu0 %v934
    %2571 = vmatprep.subr.bf16.mxu0 %v941
    %2572 = vmatpush1.bf16.msra.mxu0 %v940
    %2573 = vmatprep.subr.bf16.mxu0 %v947
    %2574 = vmatpush1.bf16.msra.mxu0 %v946
    %2575 = vmatprep.subr.bf16.mxu0 %v953
    %2576 = vmatpush1.bf16.msra.mxu0 %v952
    %2577 = vmatprep.subr.bf16.mxu0 %v959
    %2578 = vmatpush1.bf16.msra.mxu0 %v958
    %2579 = vmatprep.subr.bf16.mxu0 %v965
    %2580 = vmatpush1.bf16.msra.mxu0 %v964
    %2581 = vmatprep.mubr.bf16.mxu0 %v2507
    %2582 = vmatmul.mubr.bf16.gmra.mrb[0].mxu0 %v2506
    %v2583 = vpop.f32.mrb[0].mxu0
    %v2584 = vadd.f32 0.0, %v2583
    %v2585 = vpop.f32.mrb[0].mxu0
    %v2586 = vadd.f32 0.0, %v2585
    %v2587 = vpop.f32.mrb[0].mxu0
    %v2588 = vpop.f32.mrb[0].mxu0
    %2589 = vdwg.mxu0
    %2590 = vmatprep.subr.bf16.mxu0 %v877
    %2591 = vmatpush1.bf16.msra.mxu0 %v876
    %2592 = vmatprep.subr.bf16.mxu0 %v883
    %2593 = vmatpush1.bf16.msra.mxu0 %v882
    %2594 = vmatprep.subr.bf16.mxu0 %v889
    %2595 = vmatpush1.bf16.msra.mxu0 %v888
    %2596 = vmatprep.subr.bf16.mxu0 %v895
    %2597 = vmatpush1.bf16.msra.mxu0 %v894
    %2598 = vmatprep.subr.bf16.mxu0 %v901
    %2599 = vmatpush1.bf16.msra.mxu0 %v900
    %2600 = vmatprep.subr.bf16.mxu0 %v907
    %2601 = vmatpush1.bf16.msra.mxu0 %v906
    %2602 = vmatprep.subr.bf16.mxu0 %v913
    %2603 = vmatpush1.bf16.msra.mxu0 %v912
    %2604 = vmatprep.subr.bf16.mxu0 %v919
    %2605 = vmatpush1.bf16.msra.mxu0 %v918
    %2606 = vmatprep.subr.bf16.mxu0 %v925
    %2607 = vmatpush1.bf16.msra.mxu0 %v924
    %2608 = vmatprep.subr.bf16.mxu0 %v931
    %2609 = vmatpush1.bf16.msra.mxu0 %v930
    %2610 = vmatprep.subr.bf16.mxu0 %v937
    %2611 = vmatpush1.bf16.msra.mxu0 %v936
    %2612 = vmatprep.subr.bf16.mxu0 %v943
    %2613 = vmatpush1.bf16.msra.mxu0 %v942
    %2614 = vmatprep.subr.bf16.mxu0 %v949
    %2615 = vmatpush1.bf16.msra.mxu0 %v948
    %2616 = vmatprep.subr.bf16.mxu0 %v955
    %2617 = vmatpush1.bf16.msra.mxu0 %v954
    %2618 = vmatprep.subr.bf16.mxu0 %v961
    %2619 = vmatpush1.bf16.msra.mxu0 %v960
    %2620 = vmatprep.subr.bf16.mxu0 %v967
    %2621 = vmatpush1.bf16.msra.mxu0 %v966
    %2622 = vmatprep.mubr.bf16.mxu0 %v2507
    %2623 = vmatmul.mubr.bf16.gmra.mrb[0].mxu0 %v2506
    %v2624 = vpop.f32.mrb[0].mxu0
    %v2625 = vadd.f32 0.0, %v2624
    %v2626 = vpop.f32.mrb[0].mxu0
    %v2627 = vadd.f32 0.0, %v2626
    %v2628 = vpop.f32.mrb[0].mxu0
    %v2629 = vpop.f32.mrb[0].mxu0
    %2630 = vdwg.mxu0
    %v2635 = vrot.slane %v2543, 4
    %v2636 = vrot.slane %v2545, 4
    %v2637 = vrot.slane %v2584, 4
    %v2638 = vrot.slane %v2586, 4
    %v2643 = vadd.f32 %v2498, %v2635
    %v2644 = vadd.f32 %v2499, %v2636
    %v2645 = vadd.f32 %v2500, %v2637
    %v2646 = vadd.f32 %v2501, %v2638
    %v2647 = vxor.u32 %v2643, 2147483648
    %v2648 = vxor.u32 %v2644, 2147483648
    %v2649 = vxor.u32 %v2645, 2147483648
    %v2650 = vxor.u32 %v2646, 2147483648
    %v2651 = vmul.f32 %v2647, 1.442695
    %v2652 = vpow.pop %v2651
    %v2653 = vmul.f32 %v2648, 1.442695
    %v2654 = vpow.pop %v2653
    %v2655 = vmul.f32 %v2649, 1.442695
    %v2656 = vpow.pop %v2655
    %v2657 = vmul.f32 %v2650, 1.442695
    %v2658 = vpow.pop %v2657
    %v2659 = vadd.f32 %v2652, 1.0
    %v2660 = vadd.f32 %v2654, 1.0
    %v2661 = vadd.f32 %v2656, 1.0
    %v2662 = vadd.f32 %v2658, 1.0
    %v2663 = vrcp.pop %v2659
    %v2664 = vmul.f32 1.0, %v2663
    %v2665 = vrcp.pop %v2660
    %v2666 = vmul.f32 1.0, %v2665
    %v2667 = vrcp.pop %v2661
    %v2668 = vmul.f32 1.0, %v2667
    %v2669 = vrcp.pop %v2662
    %v2670 = vmul.f32 1.0, %v2669
    %v2671 = vadd.f32 %v2625, %v1219
    %v2672 = vadd.f32 %v2627, %v1223
    %v2675 = vrot.slane %v2671, 4
    %v2676 = vrot.slane %v2672, 4
    %v2679 = vmul.f32 %v2664, %v2675
    %v2680 = vmul.f32 %v2666, %v2676
    %v2681 = vadd.f32 %v2502, %v2679
    %v2682 = vadd.f32 %v2503, %v2680
    %v2683 = vtanh.pop %v2681
    %v2684 = vtanh.pop %v2682
    %v2687 = vrot.slane %v2683, 4
    %v2688 = vrot.slane %v2684, 4
    %v2691 = vsub.f32 %v2496, %v2687
    %v2692 = vsub.f32 %v2497, %v2688
    %v2695 = vrot.slane %v2691, 4
    %v2696 = vrot.slane %v2692, 4
    %v2699 = vmul.f32 %v2668, %v2695
    %v2700 = vmul.f32 %v2670, %v2696
    %v2701 = vadd.f32 %v2683, %v2699
    %v2702 = vadd.f32 %v2684, %v2700
    %vm2703 = vcmp.ne.f32.partialorder %v2504, 0.0
    %vm2704 = vcmp.ne.f32.partialorder %v2505, 0.0
    %v2707 = vrot.slane %v2496, 4
    %v2708 = vrot.slane %v2497, 4
    %v2711 = vsel %vm2703, %v2701, %v2707
    %v2712 = vsel %vm2704, %v2702, %v2708
    %v2713 = vpack.c.bf16 %v2711, %v2711
    %v2714 = vpack.c.bf16 %v2712, %v2712
    %v2715 = vld [vmem:[#allocation11] sm:$0xf]
    %v2716 = vld [vmem:[#allocation11 + $0x4] sm:$0xf]
    %v2717 = vld [vmem:[#allocation11 + $0x8] sm:$0xf]
    %v2718 = vld [vmem:[#allocation11 + $0xc] sm:$0xf]
    %v2719 = vld [vmem:[#allocation11 + $0x10] sm:$0xf]
    %v2720 = vld [vmem:[#allocation11 + $0x14] sm:$0xf]
    %v2721 = vld [vmem:[#allocation11 + $0x18] sm:$0xf]
    %v2722 = vld [vmem:[#allocation11 + $0x1c] sm:$0xf]
    %v2723 = vld [vmem:[#allocation11 + $0x20] sm:$0xf]
    %v2724 = vld [vmem:[#allocation11 + $0x24] sm:$0xf]
    %v2725 = vld [vmem:[#allocation11 + $0x28] sm:$0xf]
    %v2726 = vld [vmem:[#allocation11 + $0x2c] sm:$0xf]
    %v2727 = vld [vmem:[#allocation11 + $0x30] sm:$0xf]
    %v2728 = vld [vmem:[#allocation11 + $0x34] sm:$0xf]
    %v2729 = vld [vmem:[#allocation11 + $0x38] sm:$0xf]
    %v2730 = vld [vmem:[#allocation11 + $0x3c] sm:$0xf]
    %v2731 = vld [vmem:[#allocation11 + $0x40] sm:$0xf]
    %v2732 = vld [vmem:[#allocation11 + $0x44] sm:$0xf]
    %v2733 = vld [vmem:[#allocation11 + $0x48] sm:$0xf]
    %v2734 = vld [vmem:[#allocation11 + $0x4c] sm:$0xf]
    %v2735 = vld [vmem:[#allocation11 + $0x50] sm:$0xf]
    %v2736 = vld [vmem:[#allocation11 + $0x54] sm:$0xf]
    %v2737 = vld [vmem:[#allocation11 + $0x58] sm:$0xf]
    %v2738 = vld [vmem:[#allocation11 + $0x5c] sm:$0xf]
    %v2739 = vld [vmem:[#allocation11 + $0x60] sm:$0xf]
    %v2740 = vld [vmem:[#allocation11 + $0x64] sm:$0xf]
    %v2741 = vld [vmem:[#allocation11 + $0x68] sm:$0xf]
    %v2742 = vld [vmem:[#allocation11 + $0x6c] sm:$0xf]
    %v2743 = vld [vmem:[#allocation11 + $0x70] sm:$0xf]
    %v2744 = vld [vmem:[#allocation11 + $0x74] sm:$0xf]
    %v2745 = vld [vmem:[#allocation11 + $0x78] sm:$0xf]
    %v2746 = vld [vmem:[#allocation11 + $0x7c] sm:$0xf]
    %v2747 = vld [vmem:[%s7] sm:$0x1]
    %v2749 = vlaneseq
    %v2750 = vshrl.u32 %v2749, 7
    %v2751 = vsub.s32 0, %v2750
    %v2752 = vrot.slane %v2747, %v2751
    %v2756 = vrot.slane %v2713, 2
    %v2757 = vrot.slane %v2714, 2
    %v2792 = vunpack.c.l.b16 %v2715
    %v2793 = vunpack.c.l.b16 %v2716
    %v2794 = vunpack.c.l.b16 %v2717
    %v2795 = vunpack.c.l.b16 %v2718
    %v2796 = vunpack.c.l.b16 %v2719
    %v2797 = vunpack.c.l.b16 %v2720
    %v2798 = vunpack.c.l.b16 %v2721
    %v2799 = vunpack.c.l.b16 %v2722
    %v2800 = vunpack.c.l.b16 %v2723
    %v2801 = vunpack.c.l.b16 %v2724
    %v2802 = vunpack.c.l.b16 %v2725
    %v2803 = vunpack.c.l.b16 %v2726
    %v2804 = vunpack.c.l.b16 %v2727
    %v2805 = vunpack.c.l.b16 %v2728
    %v2806 = vunpack.c.l.b16 %v2729
    %v2807 = vunpack.c.l.b16 %v2730
    %v2808 = vunpack.c.l.b16 %v2731
    %v2809 = vunpack.c.l.b16 %v2732
    %v2810 = vunpack.c.l.b16 %v2733
    %v2811 = vunpack.c.l.b16 %v2734
    %v2812 = vunpack.c.l.b16 %v2735
    %v2813 = vunpack.c.l.b16 %v2736
    %v2814 = vunpack.c.l.b16 %v2737
    %v2815 = vunpack.c.l.b16 %v2738
    %v2816 = vunpack.c.l.b16 %v2739
    %v2817 = vunpack.c.l.b16 %v2740
    %v2818 = vunpack.c.l.b16 %v2741
    %v2819 = vunpack.c.l.b16 %v2742
    %v2820 = vunpack.c.l.b16 %v2743
    %v2821 = vunpack.c.l.b16 %v2744
    %v2822 = vunpack.c.l.b16 %v2745
    %v2823 = vunpack.c.l.b16 %v2746
    %v2824 = vpack.c.b16 %v2793, %v2792
    %v2825 = vpack.c.b16 %v2795, %v2794
    %v2826 = vpack.c.b16 %v2797, %v2796
    %v2827 = vpack.c.b16 %v2799, %v2798
    %v2828 = vpack.c.b16 %v2801, %v2800
    %v2829 = vpack.c.b16 %v2803, %v2802
    %v2830 = vpack.c.b16 %v2805, %v2804
    %v2831 = vpack.c.b16 %v2807, %v2806
    %v2832 = vpack.c.b16 %v2809, %v2808
    %v2833 = vpack.c.b16 %v2811, %v2810
    %v2834 = vpack.c.b16 %v2813, %v2812
    %v2835 = vpack.c.b16 %v2815, %v2814
    %v2836 = vpack.c.b16 %v2817, %v2816
    %v2837 = vpack.c.b16 %v2819, %v2818
    %v2838 = vpack.c.b16 %v2821, %v2820
    %v2839 = vpack.c.b16 %v2823, %v2822
    %2856 = vmatprep.subr.bf16.mxu0 0
    %2857 = vmatpush1.bf16.msra.mxu0 %v2824
    %2858 = vmatprep.subr.bf16.mxu0 0
    %2859 = vmatpush1.bf16.msra.mxu0 %v2825
    %2860 = vmatprep.subr.bf16.mxu0 0
    %2861 = vmatpush1.bf16.msra.mxu0 %v2826
    %2862 = vmatprep.subr.bf16.mxu0 0
    %2863 = vmatpush1.bf16.msra.mxu0 %v2827
    %2864 = vmatprep.subr.bf16.mxu0 0
    %2865 = vmatpush1.bf16.msra.mxu0 %v2828
    %2866 = vmatprep.subr.bf16.mxu0 0
    %2867 = vmatpush1.bf16.msra.mxu0 %v2829
    %2868 = vmatprep.subr.bf16.mxu0 0
    %2869 = vmatpush1.bf16.msra.mxu0 %v2830
    %2870 = vmatprep.subr.bf16.mxu0 0
    %2871 = vmatpush1.bf16.msra.mxu0 %v2831
    %2872 = vmatprep.subr.bf16.mxu0 0
    %2873 = vmatpush1.bf16.msra.mxu0 %v2832
    %2874 = vmatprep.subr.bf16.mxu0 0
    %2875 = vmatpush1.bf16.msra.mxu0 %v2833
    %2876 = vmatprep.subr.bf16.mxu0 0
    %2877 = vmatpush1.bf16.msra.mxu0 %v2834
    %2878 = vmatprep.subr.bf16.mxu0 0
    %2879 = vmatpush1.bf16.msra.mxu0 %v2835
    %2880 = vmatprep.subr.bf16.mxu0 0
    %2881 = vmatpush1.bf16.msra.mxu0 %v2836
    %2882 = vmatprep.subr.bf16.mxu0 0
    %2883 = vmatpush1.bf16.msra.mxu0 %v2837
    %2884 = vmatprep.subr.bf16.mxu0 0
    %2885 = vmatpush1.bf16.msra.mxu0 %v2838
    %2886 = vmatprep.subr.bf16.mxu0 0
    %2887 = vmatpush1.bf16.msra.mxu0 %v2839
    %2888 = vmatprep.mubr.bf16.mxu0 %v2757
    %2889 = vmatmul.mubr.bf16.gmra.mrb[0].mxu0 %v2756
    %v2890 = vpop.f32.mrb[0].mxu0
    %v2891 = vadd.f32 %v2752, %v2890
    %v2892 = vpop.f32.mrb[0].mxu0
    %v2893 = vpop.f32.mrb[0].mxu0
    %v2894 = vpop.f32.mrb[0].mxu0
    %2895 = vdwg.mxu0
    %2896 = vst [vmem:[#allocation12] sm:$0xf] %v2891
    // Predicated region
    $region54: #{tpu_custom_call.1} parent=1 // pred_check
      _
    $region55: #{tpu_custom_call.1} parent=1 // pred_check_branch
      %2898 = sbr.rel (0) target = $region57
    $region56: #{tpu_custom_call.1} parent=1 // pred_region
      %s2900 = ssub.s32 64, 64
      %2901 = vsyncadd [#allocation5], %s2900
      %s2903 = sshll.u32 [#allocation12], 4
      %s2904 = int_to_ptr.vmem [resolvable:$true] %s2903
      %2906 = dma.vmem_to_hbm [thread:$0]  %s2904, 64, %s8, [#allocation5]
    $region57: #{tpu_custom_call.1} parent=1 // pred_fallthru
      _
    // Predicated region
    $region58: #{tpu_custom_call.1} parent=1 // pred_check
      _
    $region59: #{tpu_custom_call.1} parent=1 // pred_check_branch
      %2908 = sbr.rel (0) target = $region61
    $region60: #{tpu_custom_call.1} parent=1 // pred_region
      %2909 = dma.done [#allocation5], 64
    $region61: #{tpu_custom_call.1} parent=1 // pred_fallthru
      _
    %2910 = vsyncpa [#allocation4], 1
    %2911 = vsyncpa [#allocation7], 1
    %2912 = vsyncpa [#allocation10], 1
    %2913 = vsyncpa [#allocation5], 1

</llo_original>
